<compile_context>
chip_gen: v7x
topology: tpu7x:2x2x1
jax: 0.10.0
libtpu: 0.0.40
codegen_flags: <defaults>
</compile_context>

<pallas_src>
import math
import functools

import jax
import jax.numpy as jnp
from jax.experimental import pallas as pl
from jax.experimental.pallas import tpu as pltpu


# ----------------------------------------------------------------------------
# Fused kernel: all transformer layers (grid axis) + classifier epilogue
# ----------------------------------------------------------------------------
def bert_fused_kernel(x_ref, mask_ref,
                      wqkv_ref, bqkv_ref, wo_ref, bo_ref,
                      ln1g_ref, ln1b_ref,
                      w1_ref, b1_ref, w2_ref, b2_ref,
                      ln2g_ref, ln2b_ref,
                      wc_ref, bc_ref,
                      out_ref, acts_ref,
                      *, heads, eps=1e-6):
    layer = pl.program_id(0)
    n_layers = pl.num_programs(0)
    B, S, H = acts_ref.shape
    BS = B * S
    dh = H // heads
    scale = 1.0 / math.sqrt(dh)

    # Layer 0: load embedded input (bf16 in HBM) into the resident f32 scratch.
    @pl.when(layer == 0)
    def _():
        acts_ref[...] = x_ref[...].astype(jnp.float32)

    x = acts_ref[...].reshape(BS, H)                  # (B*S, H) f32, VMEM-resident

    def layer_norm(v, g, b):
        mean = jnp.mean(v, axis=-1, keepdims=True)
        # torch.std default is unbiased (divide by N-1); eps added to std,
        # matching the bert_pytorch custom LayerNorm (NOT nn.LayerNorm).
        var = jnp.sum((v - mean) ** 2, axis=-1, keepdims=True) / (H - 1)
        return g * (v - mean) / (jnp.sqrt(var) + eps) + b

    # ------------------ attention sublayer (pre-norm residual) ---------------
    xn = layer_norm(x, ln1g_ref[0], ln1b_ref[0])
    # Fused QKV: one wide (H, 3H) MXU matmul, bf16 operands, f32 accumulation.
    qkv = (jnp.dot(xn.astype(jnp.bfloat16), wqkv_ref[0],
                   preferred_element_type=jnp.float32) + bqkv_ref[0])   # (BS, 3H)
    q = qkv[:, 0 * H:1 * H].reshape(B, S, H)
    k = qkv[:, 1 * H:2 * H].reshape(B, S, H)
    v = qkv[:, 2 * H:3 * H].reshape(B, S, H)

    mask = mask_ref[...]                               # (B, S, S) additive bias

    ctx_parts = []
    for h in range(heads):                             # small static unroll
        hs = slice(h * dh, (h + 1) * dh)
        sc = (jnp.einsum('bqd,bkd->bqk', q[..., hs], k[..., hs],
                         preferred_element_type=jnp.float32) * scale + mask)
        sc = sc - jnp.max(sc, axis=-1, keepdims=True)
        p = jnp.exp(sc)
        # EUP reciprocal instead of a VPU divide.
        p = p * pl.reciprocal(jnp.sum(p, axis=-1, keepdims=True), approx=True)
        ctx_parts.append(jnp.einsum('bqk,bkd->bqd', p, v[..., hs],
                                    preferred_element_type=jnp.float32))
    ctx = jnp.concatenate(ctx_parts, axis=-1).reshape(BS, H)

    attn = (jnp.dot(ctx.astype(jnp.bfloat16), wo_ref[0],
                    preferred_element_type=jnp.float32) + bo_ref[0])
    x = x + attn                                       # dropout == identity (eval)

    # ------------------ feed-forward sublayer (pre-norm residual) ------------
    xn2 = layer_norm(x, ln2g_ref[0], ln2b_ref[0])
    h1 = (jnp.dot(xn2.astype(jnp.bfloat16), w1_ref[0],
                  preferred_element_type=jnp.float32) + b1_ref[0])
    c = math.sqrt(2.0 / math.pi)
    gelu = 0.5 * h1 * (1.0 + jnp.tanh(c * (h1 + 0.044715 * h1 * h1 * h1)))
    ff = (jnp.dot(gelu.astype(jnp.bfloat16), w2_ref[0],
                  preferred_element_type=jnp.float32) + b2_ref[0])
    x = x + ff

    acts_ref[...] = x.reshape(B, S, H)                 # stays in VMEM for next layer

    # ------------------ classifier epilogue (last layer only) ----------------
    @pl.when(layer == n_layers - 1)
    def _():
        cls = x.reshape(B, S, H)[:, 0, :]              # CLS token == module x[0,:,:]
        out_ref[...] = (jnp.dot(cls, wc_ref[...],
                                preferred_element_type=jnp.float32) + bc_ref[...])


# ----------------------------------------------------------------------------
# Wrapper: embedding / mask in JAX, one pallas_call for the whole model
# ----------------------------------------------------------------------------
def bert_classification_forward(tokens, lengths, params):
    """tokens: (B, S) int32, lengths: (B,) int32 -> (B, number_classes) f32."""
    B, S = tokens.shape
    H = params["tok_emb"].shape[1]
    L = params["wqkv"].shape[0]
    c_pad = params["cls_w"].shape[1]

    # BERTEmbedding: token + sinusoidal positional; segment_info=None -> skipped;
    # embedding dropout=0.0.  Stored bf16 for the kernel input.
    x_emb = (params["tok_emb"][tokens] + params["pos_emb"][None, :S, :]
             ).astype(jnp.bfloat16)

    # Additive key-length mask, precomputed once (constant across layers).
    key_idx = jnp.arange(S, dtype=jnp.int32)[None, None, :]
    mask = jnp.where(key_idx < lengths[:, None, None], 0.0, -1e9)
    mask = jnp.broadcast_to(mask, (B, S, S)).astype(jnp.float32)

    def spec_const(shape):          # fetched once, resident across all layers
        n = len(shape)
        return pl.BlockSpec(shape, lambda l, n=n: (0,) * n)

    def spec_layer(shape):          # stacked per-layer params: pick layer l
        return pl.BlockSpec((1,) + tuple(shape[1:]), lambda l: (l, 0, 0))

    args = (x_emb, mask,
            params["wqkv"], params["bqkv"], params["wo"], params["bo"],
            params["ln1g"], params["ln1b"],
            params["w1"], params["b1"], params["w2"], params["b2"],
            params["ln2g"], params["ln2b"],
            params["cls_w"], params["cls_b"])

    in_specs = ([spec_const(x_emb.shape), spec_const(mask.shape)]
                + [spec_layer(a.shape) for a in args[2:14]]
                + [spec_const(params["cls_w"].shape),
                   spec_const(params["cls_b"].shape)])

    kernel = functools.partial(bert_fused_kernel, heads=params["heads"])
    logits_padded = pl.pallas_call(
        kernel,
        grid=(L,),
        in_specs=in_specs,
        out_specs=pl.BlockSpec((B, c_pad), lambda l: (0, 0)),   # lane-dense (128)
        out_shape=jax.ShapeDtypeStruct((B, c_pad), jnp.float32),
        scratch_shapes=[pltpu.VMEM((B, S, H), jnp.float32)],    # resident activations
        compiler_params=pltpu.CompilerParams(
            dimension_semantics=("arbitrary",),     # layers are sequential
            vmem_limit_bytes=32 * 1024 * 1024),
    )(*args)
    return logits_padded[:, :params["num_classes"]]


# ----------------------------------------------------------------------------
# Parameter construction (weights stacked per layer, bf16 in HBM)
# ----------------------------------------------------------------------------
def sinusoidal_positions(max_len, d_model):
    pos = jnp.arange(max_len, dtype=jnp.float32)[:, None]
    div = jnp.exp(jnp.arange(0, d_model, 2, dtype=jnp.float32)
                  * -(math.log(10000.0) / d_model))
    pe = jnp.zeros((max_len, d_model), jnp.float32)
    pe = pe.at[:, 0::2].set(jnp.sin(pos * div))
    pe = pe.at[:, 1::2].set(jnp.cos(pos * div))
    return pe


def init_params(key, vocab, hidden, n_layers, heads, classes,
                max_len=64, class_pad=128):
    ff = 4 * hidden
    ks = jax.random.split(key, 7)
    nrm = lambda k, shp: jax.random.normal(k, shp, jnp.float32) * 0.02
    zeros = lambda shp: jnp.zeros(shp, jnp.float32)
    ones = lambda shp: jnp.ones(shp, jnp.float32)

    tok = nrm(ks[0], (vocab, hidden)).at[0].set(0.0)      # nn.Embedding padding_idx=0

    # Per-layer weights stacked with a leading layer dim; QKV fused on columns.
    wqkv = nrm(ks[1], (n_layers, hidden, 3 * hidden)).astype(jnp.bfloat16)
    wo = nrm(ks[2], (n_layers, hidden, hidden)).astype(jnp.bfloat16)
    w1 = nrm(ks[3], (n_layers, hidden, ff)).astype(jnp.bfloat16)
    w2 = nrm(ks[4], (n_layers, ff, hidden)).astype(jnp.bfloat16)

    # Classifier weight padded to 128 output lanes (extra columns are zero).
    cls_w = zeros((hidden, class_pad)).at[:, :classes].set(nrm(ks[5], (hidden, classes)))
    cls_b = zeros((1, class_pad))

    return dict(
        tok_emb=tok,
        pos_emb=sinusoidal_positions(max_len, hidden),
        wqkv=wqkv, bqkv=zeros((n_layers, 1, 3 * hidden)),
        wo=wo, bo=zeros((n_layers, 1, hidden)),
        ln1g=ones((n_layers, 1, hidden)), ln1b=zeros((n_layers, 1, hidden)),
        w1=w1, b1=zeros((n_layers, 1, ff)),
        w2=w2, b2=zeros((n_layers, 1, hidden)),
        ln2g=ones((n_layers, 1, hidden)), ln2b=zeros((n_layers, 1, hidden)),
        cls_w=cls_w, cls_b=cls_b,
        heads=heads, num_classes=classes)


# ----------------------------------------------------------------------------
if __name__ == "__main__":
    VOCAB, HIDDEN, N_LAYERS, HEADS, CLASSES = 64, 32, 2, 4, 3
    BATCH, SEQ = 2, 8

    root = jax.random.PRNGKey(0)
    pkey, tkey = jax.random.split(root)

    params = init_params(pkey, VOCAB, HIDDEN, N_LAYERS, HEADS, CLASSES)
    tokens = jax.random.randint(tkey, (BATCH, SEQ), 1, VOCAB, dtype=jnp.int32)
    lengths = jnp.array([SEQ, 5], dtype=jnp.int32)

    logits = bert_classification_forward(tokens, lengths, params)
    jax.block_until_ready(logits)
    assert logits.shape == (BATCH, CLASSES)
    assert bool(jnp.all(jnp.isfinite(logits)))
    print("KERNEL_OK")
</pallas_src>

<mosaic_0001>
module attributes {stable_mosaic.version = 11 : i64} {
  func.func @bert_fused_kernel(%arg0: i32, %arg1: memref<2x8x32xbf16, #tpu.memory_space<vmem>>, %arg2: memref<2x8x8xf32, #tpu.memory_space<vmem>>, %arg3: memref<1x32x96xbf16, #tpu.memory_space<vmem>>, %arg4: memref<1x1x96xf32, #tpu.memory_space<vmem>>, %arg5: memref<1x32x32xbf16, #tpu.memory_space<vmem>>, %arg6: memref<1x1x32xf32, #tpu.memory_space<vmem>>, %arg7: memref<1x1x32xf32, #tpu.memory_space<vmem>>, %arg8: memref<1x1x32xf32, #tpu.memory_space<vmem>>, %arg9: memref<1x32x128xbf16, #tpu.memory_space<vmem>>, %arg10: memref<1x1x128xf32, #tpu.memory_space<vmem>>, %arg11: memref<1x128x32xbf16, #tpu.memory_space<vmem>>, %arg12: memref<1x1x32xf32, #tpu.memory_space<vmem>>, %arg13: memref<1x1x32xf32, #tpu.memory_space<vmem>>, %arg14: memref<1x1x32xf32, #tpu.memory_space<vmem>>, %arg15: memref<32x128xf32, #tpu.memory_space<vmem>>, %arg16: memref<1x128xf32, #tpu.memory_space<vmem>>, %arg17: memref<2x128xf32, #tpu.memory_space<vmem>>, %arg18: memref<2x8x32xf32, #tpu.memory_space<vmem>>) attributes {dimension_semantics = [#tpu.dimension_semantics<arbitrary>], iteration_bounds = array<i64: 2>, scalar_prefetch = 0 : i64, scratch_operands = 1 : i64, tpu.core_type = #tpu.core_type<tc>, window_params = [{pipeline_mode = #tpu.pipeline_mode<synchronous>, transform_indices = @transform_0, window_bounds = array<i64: 2, 8, 32>}, {pipeline_mode = #tpu.pipeline_mode<synchronous>, transform_indices = @transform_1, window_bounds = array<i64: 2, 8, 8>}, {transform_indices = @transform_2, window_bounds = array<i64: 1, 32, 96>}, {transform_indices = @transform_3, window_bounds = array<i64: 1, 1, 96>}, {transform_indices = @transform_4, window_bounds = array<i64: 1, 32, 32>}, {transform_indices = @transform_5, window_bounds = array<i64: 1, 1, 32>}, {transform_indices = @transform_6, window_bounds = array<i64: 1, 1, 32>}, {transform_indices = @transform_7, window_bounds = array<i64: 1, 1, 32>}, {transform_indices = @transform_8, window_bounds = array<i64: 1, 32, 128>}, {transform_indices = @transform_9, window_bounds = array<i64: 1, 1, 128>}, {transform_indices = @transform_10, window_bounds = array<i64: 1, 128, 32>}, {transform_indices = @transform_11, window_bounds = array<i64: 1, 1, 32>}, {transform_indices = @transform_12, window_bounds = array<i64: 1, 1, 32>}, {transform_indices = @transform_13, window_bounds = array<i64: 1, 1, 32>}, {pipeline_mode = #tpu.pipeline_mode<synchronous>, transform_indices = @transform_14, window_bounds = array<i64: 32, 128>}, {pipeline_mode = #tpu.pipeline_mode<synchronous>, transform_indices = @transform_15, window_bounds = array<i64: 1, 128>}, {pipeline_mode = #tpu.pipeline_mode<synchronous>, transform_indices = @transform_16, window_bounds = array<i64: 2, 128>}]} {
    %c0_i32 = arith.constant 0 : i32
    %0 = arith.cmpi eq, %arg0, %c0_i32 : i32
    %1 = arith.extui %0 : i1 to i32
    %c0_i32_0 = arith.constant 0 : i32
    %2 = arith.cmpi ne, %1, %c0_i32_0 : i32
    scf.if %2 {
      %c0_83 = arith.constant 0 : index
      %c0_84 = arith.constant 0 : index
      %c0_85 = arith.constant 0 : index
      %190 = vector.load %arg1[%c0_83, %c0_84, %c0_85] : memref<2x8x32xbf16, #tpu.memory_space<vmem>>, vector<2x8x32xbf16>
      %191 = arith.extf %190 : vector<2x8x32xbf16> to vector<2x8x32xf32>
      %c0_86 = arith.constant 0 : index
      %c0_87 = arith.constant 0 : index
      %c0_88 = arith.constant 0 : index
      %192 = vector.load %arg18[%c0_86, %c0_87, %c0_88] : memref<2x8x32xf32, #tpu.memory_space<vmem>>, vector<2x8x32xf32>
      tpu.vector_store %arg18[%c0_86, %c0_87, %c0_88], %191 {strides = array<i32>} : memref<2x8x32xf32, #tpu.memory_space<vmem>>, vector<2x8x32xf32>,
    } else {
    }
    %c0 = arith.constant 0 : index
    %c0_1 = arith.constant 0 : index
    %c0_2 = arith.constant 0 : index
    %3 = vector.load %arg18[%c0, %c0_1, %c0_2] : memref<2x8x32xf32, #tpu.memory_space<vmem>>, vector<2x8x32xf32>
    %4 = vector.shape_cast %3 : vector<2x8x32xf32> to vector<16x32xf32>
    %c0_3 = arith.constant 0 : index
    %c0_4 = arith.constant 0 : index
    %c0_5 = arith.constant 0 : index
    %5 = vector.load %arg7[%c0_3, %c0_4, %c0_5] : memref<1x1x32xf32, #tpu.memory_space<vmem>>, vector<1x1x32xf32>
    %6 = vector.shape_cast %5 : vector<1x1x32xf32> to vector<1x32xf32>
    %c0_6 = arith.constant 0 : index
    %c0_7 = arith.constant 0 : index
    %c0_8 = arith.constant 0 : index
    %7 = vector.load %arg8[%c0_6, %c0_7, %c0_8] : memref<1x1x32xf32, #tpu.memory_space<vmem>>, vector<1x1x32xf32>
    %8 = vector.shape_cast %7 : vector<1x1x32xf32> to vector<1x32xf32>
    %cst = arith.constant dense<0.000000e+00> : vector<16xf32>
    %9 = vector.multi_reduction <add>, %4, %cst [1] : vector<16x32xf32> to vector<16xf32>
    %10 = vector.shape_cast %9 : vector<16xf32> to vector<16x1xf32>
    %cst_9 = arith.constant 3.200000e+01 : f32
    %11 = vector.broadcast %cst_9 : f32 to vector<16x1xf32>
    %12 = arith.divf %10, %11 : vector<16x1xf32>
    %13 = vector.broadcast %12 : vector<16x1xf32> to vector<16x32xf32>
    %14 = arith.subf %4, %13 : vector<16x32xf32>
    %15 = arith.mulf %14, %14 : vector<16x32xf32>
    %cst_10 = arith.constant dense<0.000000e+00> : vector<16xf32>
    %16 = vector.multi_reduction <add>, %15, %cst_10 [1] : vector<16x32xf32> to vector<16xf32>
    %17 = vector.shape_cast %16 : vector<16xf32> to vector<16x1xf32>
    %cst_11 = arith.constant 3.100000e+01 : f32
    %18 = vector.broadcast %cst_11 : f32 to vector<16x1xf32>
    %19 = arith.divf %17, %18 : vector<16x1xf32>
    %20 = vector.broadcast %12 : vector<16x1xf32> to vector<16x32xf32>
    %21 = arith.subf %4, %20 : vector<16x32xf32>
    %22 = vector.broadcast %6 : vector<1x32xf32> to vector<16x32xf32>
    %23 = arith.mulf %22, %21 : vector<16x32xf32>
    %24 = math.sqrt %19 : vector<16x1xf32>
    %cst_12 = arith.constant 9.99999997E-7 : f32
    %25 = vector.broadcast %cst_12 : f32 to vector<16x1xf32>
    %26 = arith.addf %24, %25 : vector<16x1xf32>
    %27 = vector.broadcast %26 : vector<16x1xf32> to vector<16x32xf32>
    %28 = arith.divf %23, %27 : vector<16x32xf32>
    %29 = vector.broadcast %8 : vector<1x32xf32> to vector<16x32xf32>
    %30 = arith.addf %28, %29 : vector<16x32xf32>
    %31 = arith.truncf %30 : vector<16x32xf32> to vector<16x32xbf16>
    %c0_13 = arith.constant 0 : index
    %c0_14 = arith.constant 0 : index
    %c0_15 = arith.constant 0 : index
    %32 = vector.load %arg3[%c0_13, %c0_14, %c0_15] : memref<1x32x96xbf16, #tpu.memory_space<vmem>>, vector<1x32x96xbf16>
    %33 = vector.shape_cast %32 : vector<1x32x96xbf16> to vector<32x96xbf16>
    %cst_16 = arith.constant dense<0.000000e+00> : vector<16x96xf32>
    %34 = tpu.matmul %31, %33, %cst_16 {dimension_numbers = #tpu.dot_dimension_numbers<[1], [0], [0], [1], [0, 0, 1, 1], [], []>} : vector<16x32xbf16>, vector<32x96xbf16>, vector<16x96xf32> -> vector<16x96xf32>
    %c0_17 = arith.constant 0 : index
    %c0_18 = arith.constant 0 : index
    %c0_19 = arith.constant 0 : index
    %35 = vector.load %arg4[%c0_17, %c0_18, %c0_19] : memref<1x1x96xf32, #tpu.memory_space<vmem>>, vector<1x1x96xf32>
    %36 = vector.shape_cast %35 : vector<1x1x96xf32> to vector<1x96xf32>
    %37 = vector.broadcast %36 : vector<1x96xf32> to vector<16x96xf32>
    %38 = arith.addf %34, %37 : vector<16x96xf32>
    %39 = vector.extract_strided_slice %38 {offsets = [0, 0], sizes = [16, 32], strides = [1, 1]} : vector<16x96xf32> to vector<16x32xf32>
    %40 = vector.shape_cast %39 : vector<16x32xf32> to vector<2x8x32xf32>
    %41 = vector.extract_strided_slice %38 {offsets = [0, 32], sizes = [16, 32], strides = [1, 1]} : vector<16x96xf32> to vector<16x32xf32>
    %42 = vector.shape_cast %41 : vector<16x32xf32> to vector<2x8x32xf32>
    %43 = vector.extract_strided_slice %38 {offsets = [0, 64], sizes = [16, 32], strides = [1, 1]} : vector<16x96xf32> to vector<16x32xf32>
    %44 = vector.shape_cast %43 : vector<16x32xf32> to vector<2x8x32xf32>
    %c0_20 = arith.constant 0 : index
    %c0_21 = arith.constant 0 : index
    %c0_22 = arith.constant 0 : index
    %45 = vector.load %arg2[%c0_20, %c0_21, %c0_22] : memref<2x8x8xf32, #tpu.memory_space<vmem>>, vector<2x8x8xf32>
    %46 = vector.extract_strided_slice %40 {offsets = [0, 0, 0], sizes = [2, 8, 8], strides = [1, 1, 1]} : vector<2x8x32xf32> to vector<2x8x8xf32>
    %47 = vector.extract_strided_slice %42 {offsets = [0, 0, 0], sizes = [2, 8, 8], strides = [1, 1, 1]} : vector<2x8x32xf32> to vector<2x8x8xf32>
    "tpu.trace_start"() <{level = 10 : i32, message = "bqd,bkd->bqk"}> : () -> ()
    %cst_23 = arith.constant dense<0.000000e+00> : vector<2x8x8xf32>
    %48 = tpu.matmul %46, %47, %cst_23 {dimension_numbers = #tpu.dot_dimension_numbers<[2], [2], [1], [1], [0, 0, 0, 1, 1, 1], [0], [0]>} : vector<2x8x8xf32>, vector<2x8x8xf32>, vector<2x8x8xf32> -> vector<2x8x8xf32>
    "tpu.trace_stop"() : () -> ()
    %cst_24 = arith.constant 0.353553385 : f32
    %49 = vector.broadcast %cst_24 : f32 to vector<2x8x8xf32>
    %50 = arith.mulf %48, %49 : vector<2x8x8xf32>
    %51 = arith.addf %50, %45 : vector<2x8x8xf32>
    %cst_25 = arith.constant dense<0xFF800000> : vector<2x8xf32>
    %52 = vector.multi_reduction <maximumf>, %51, %cst_25 [2] : vector<2x8x8xf32> to vector<2x8xf32>
    %53 = vector.shape_cast %52 : vector<2x8xf32> to vector<2x8x1xf32>
    %54 = vector.broadcast %53 : vector<2x8x1xf32> to vector<2x8x8xf32>
    %55 = arith.subf %51, %54 : vector<2x8x8xf32>
    %56 = math.exp %55 : vector<2x8x8xf32>
    %cst_26 = arith.constant dense<0.000000e+00> : vector<2x8xf32>
    %57 = vector.multi_reduction <add>, %56, %cst_26 [2] : vector<2x8x8xf32> to vector<2x8xf32>
    %58 = vector.shape_cast %57 : vector<2x8xf32> to vector<2x8x1xf32>
    %59 = tpu.reciprocal %58 {approx = true} : vector<2x8x1xf32> -> vector<2x8x1xf32>
    %60 = vector.broadcast %59 : vector<2x8x1xf32> to vector<2x8x8xf32>
    %61 = arith.mulf %56, %60 : vector<2x8x8xf32>
    %62 = vector.extract_strided_slice %44 {offsets = [0, 0, 0], sizes = [2, 8, 8], strides = [1, 1, 1]} : vector<2x8x32xf32> to vector<2x8x8xf32>
    "tpu.trace_start"() <{level = 10 : i32, message = "bqk,bkd->bqd"}> : () -> ()
    %cst_27 = arith.constant dense<0.000000e+00> : vector<2x8x8xf32>
    %63 = tpu.matmul %61, %62, %cst_27 {dimension_numbers = #tpu.dot_dimension_numbers<[2], [1], [1], [2], [0, 0, 0, 1, 1, 2], [0], [0]>} : vector<2x8x8xf32>, vector<2x8x8xf32>, vector<2x8x8xf32> -> vector<2x8x8xf32>
    "tpu.trace_stop"() : () -> ()
    %64 = vector.extract_strided_slice %40 {offsets = [0, 0, 8], sizes = [2, 8, 8], strides = [1, 1, 1]} : vector<2x8x32xf32> to vector<2x8x8xf32>
    %65 = vector.extract_strided_slice %42 {offsets = [0, 0, 8], sizes = [2, 8, 8], strides = [1, 1, 1]} : vector<2x8x32xf32> to vector<2x8x8xf32>
    "tpu.trace_start"() <{level = 10 : i32, message = "bqd,bkd->bqk"}> : () -> ()
    %cst_28 = arith.constant dense<0.000000e+00> : vector<2x8x8xf32>
    %66 = tpu.matmul %64, %65, %cst_28 {dimension_numbers = #tpu.dot_dimension_numbers<[2], [2], [1], [1], [0, 0, 0, 1, 1, 1], [0], [0]>} : vector<2x8x8xf32>, vector<2x8x8xf32>, vector<2x8x8xf32> -> vector<2x8x8xf32>
    "tpu.trace_stop"() : () -> ()
    %cst_29 = arith.constant 0.353553385 : f32
    %67 = vector.broadcast %cst_29 : f32 to vector<2x8x8xf32>
    %68 = arith.mulf %66, %67 : vector<2x8x8xf32>
    %69 = arith.addf %68, %45 : vector<2x8x8xf32>
    %cst_30 = arith.constant dense<0xFF800000> : vector<2x8xf32>
    %70 = vector.multi_reduction <maximumf>, %69, %cst_30 [2] : vector<2x8x8xf32> to vector<2x8xf32>
    %71 = vector.shape_cast %70 : vector<2x8xf32> to vector<2x8x1xf32>
    %72 = vector.broadcast %71 : vector<2x8x1xf32> to vector<2x8x8xf32>
    %73 = arith.subf %69, %72 : vector<2x8x8xf32>
    %74 = math.exp %73 : vector<2x8x8xf32>
    %cst_31 = arith.constant dense<0.000000e+00> : vector<2x8xf32>
    %75 = vector.multi_reduction <add>, %74, %cst_31 [2] : vector<2x8x8xf32> to vector<2x8xf32>
    %76 = vector.shape_cast %75 : vector<2x8xf32> to vector<2x8x1xf32>
    %77 = tpu.reciprocal %76 {approx = true} : vector<2x8x1xf32> -> vector<2x8x1xf32>
    %78 = vector.broadcast %77 : vector<2x8x1xf32> to vector<2x8x8xf32>
    %79 = arith.mulf %74, %78 : vector<2x8x8xf32>
    %80 = vector.extract_strided_slice %44 {offsets = [0, 0, 8], sizes = [2, 8, 8], strides = [1, 1, 1]} : vector<2x8x32xf32> to vector<2x8x8xf32>
    "tpu.trace_start"() <{level = 10 : i32, message = "bqk,bkd->bqd"}> : () -> ()
    %cst_32 = arith.constant dense<0.000000e+00> : vector<2x8x8xf32>
    %81 = tpu.matmul %79, %80, %cst_32 {dimension_numbers = #tpu.dot_dimension_numbers<[2], [1], [1], [2], [0, 0, 0, 1, 1, 2], [0], [0]>} : vector<2x8x8xf32>, vector<2x8x8xf32>, vector<2x8x8xf32> -> vector<2x8x8xf32>
    "tpu.trace_stop"() : () -> ()
    %82 = vector.extract_strided_slice %40 {offsets = [0, 0, 16], sizes = [2, 8, 8], strides = [1, 1, 1]} : vector<2x8x32xf32> to vector<2x8x8xf32>
    %83 = vector.extract_strided_slice %42 {offsets = [0, 0, 16], sizes = [2, 8, 8], strides = [1, 1, 1]} : vector<2x8x32xf32> to vector<2x8x8xf32>
    "tpu.trace_start"() <{level = 10 : i32, message = "bqd,bkd->bqk"}> : () -> ()
    %cst_33 = arith.constant dense<0.000000e+00> : vector<2x8x8xf32>
    %84 = tpu.matmul %82, %83, %cst_33 {dimension_numbers = #tpu.dot_dimension_numbers<[2], [2], [1], [1], [0, 0, 0, 1, 1, 1], [0], [0]>} : vector<2x8x8xf32>, vector<2x8x8xf32>, vector<2x8x8xf32> -> vector<2x8x8xf32>
    "tpu.trace_stop"() : () -> ()
    %cst_34 = arith.constant 0.353553385 : f32
    %85 = vector.broadcast %cst_34 : f32 to vector<2x8x8xf32>
    %86 = arith.mulf %84, %85 : vector<2x8x8xf32>
    %87 = arith.addf %86, %45 : vector<2x8x8xf32>
    %cst_35 = arith.constant dense<0xFF800000> : vector<2x8xf32>
    %88 = vector.multi_reduction <maximumf>, %87, %cst_35 [2] : vector<2x8x8xf32> to vector<2x8xf32>
    %89 = vector.shape_cast %88 : vector<2x8xf32> to vector<2x8x1xf32>
    %90 = vector.broadcast %89 : vector<2x8x1xf32> to vector<2x8x8xf32>
    %91 = arith.subf %87, %90 : vector<2x8x8xf32>
    %92 = math.exp %91 : vector<2x8x8xf32>
    %cst_36 = arith.constant dense<0.000000e+00> : vector<2x8xf32>
    %93 = vector.multi_reduction <add>, %92, %cst_36 [2] : vector<2x8x8xf32> to vector<2x8xf32>
    %94 = vector.shape_cast %93 : vector<2x8xf32> to vector<2x8x1xf32>
    %95 = tpu.reciprocal %94 {approx = true} : vector<2x8x1xf32> -> vector<2x8x1xf32>
    %96 = vector.broadcast %95 : vector<2x8x1xf32> to vector<2x8x8xf32>
    %97 = arith.mulf %92, %96 : vector<2x8x8xf32>
    %98 = vector.extract_strided_slice %44 {offsets = [0, 0, 16], sizes = [2, 8, 8], strides = [1, 1, 1]} : vector<2x8x32xf32> to vector<2x8x8xf32>
    "tpu.trace_start"() <{level = 10 : i32, message = "bqk,bkd->bqd"}> : () -> ()
    %cst_37 = arith.constant dense<0.000000e+00> : vector<2x8x8xf32>
    %99 = tpu.matmul %97, %98, %cst_37 {dimension_numbers = #tpu.dot_dimension_numbers<[2], [1], [1], [2], [0, 0, 0, 1, 1, 2], [0], [0]>} : vector<2x8x8xf32>, vector<2x8x8xf32>, vector<2x8x8xf32> -> vector<2x8x8xf32>
    "tpu.trace_stop"() : () -> ()
    %100 = vector.extract_strided_slice %40 {offsets = [0, 0, 24], sizes = [2, 8, 8], strides = [1, 1, 1]} : vector<2x8x32xf32> to vector<2x8x8xf32>
    %101 = vector.extract_strided_slice %42 {offsets = [0, 0, 24], sizes = [2, 8, 8], strides = [1, 1, 1]} : vector<2x8x32xf32> to vector<2x8x8xf32>
    "tpu.trace_start"() <{level = 10 : i32, message = "bqd,bkd->bqk"}> : () -> ()
    %cst_38 = arith.constant dense<0.000000e+00> : vector<2x8x8xf32>
    %102 = tpu.matmul %100, %101, %cst_38 {dimension_numbers = #tpu.dot_dimension_numbers<[2], [2], [1], [1], [0, 0, 0, 1, 1, 1], [0], [0]>} : vector<2x8x8xf32>, vector<2x8x8xf32>, vector<2x8x8xf32> -> vector<2x8x8xf32>
    "tpu.trace_stop"() : () -> ()
    %cst_39 = arith.constant 0.353553385 : f32
    %103 = vector.broadcast %cst_39 : f32 to vector<2x8x8xf32>
    %104 = arith.mulf %102, %103 : vector<2x8x8xf32>
    %105 = arith.addf %104, %45 : vector<2x8x8xf32>
    %cst_40 = arith.constant dense<0xFF800000> : vector<2x8xf32>
    %106 = vector.multi_reduction <maximumf>, %105, %cst_40 [2] : vector<2x8x8xf32> to vector<2x8xf32>
    %107 = vector.shape_cast %106 : vector<2x8xf32> to vector<2x8x1xf32>
    %108 = vector.broadcast %107 : vector<2x8x1xf32> to vector<2x8x8xf32>
    %109 = arith.subf %105, %108 : vector<2x8x8xf32>
    %110 = math.exp %109 : vector<2x8x8xf32>
    %cst_41 = arith.constant dense<0.000000e+00> : vector<2x8xf32>
    %111 = vector.multi_reduction <add>, %110, %cst_41 [2] : vector<2x8x8xf32> to vector<2x8xf32>
    %112 = vector.shape_cast %111 : vector<2x8xf32> to vector<2x8x1xf32>
    %113 = tpu.reciprocal %112 {approx = true} : vector<2x8x1xf32> -> vector<2x8x1xf32>
    %114 = vector.broadcast %113 : vector<2x8x1xf32> to vector<2x8x8xf32>
    %115 = arith.mulf %110, %114 : vector<2x8x8xf32>
    %116 = vector.extract_strided_slice %44 {offsets = [0, 0, 24], sizes = [2, 8, 8], strides = [1, 1, 1]} : vector<2x8x32xf32> to vector<2x8x8xf32>
    "tpu.trace_start"() <{level = 10 : i32, message = "bqk,bkd->bqd"}> : () -> ()
    %cst_42 = arith.constant dense<0.000000e+00> : vector<2x8x8xf32>
    %117 = tpu.matmul %115, %116, %cst_42 {dimension_numbers = #tpu.dot_dimension_numbers<[2], [1], [1], [2], [0, 0, 0, 1, 1, 2], [0], [0]>} : vector<2x8x8xf32>, vector<2x8x8xf32>, vector<2x8x8xf32> -> vector<2x8x8xf32>
    "tpu.trace_stop"() : () -> ()
    %118 = tpu.concatenate %63, %81, %99, %117 in 2 : vector<2x8x8xf32>, vector<2x8x8xf32>, vector<2x8x8xf32>, vector<2x8x8xf32> -> vector<2x8x32xf32>
    %119 = vector.shape_cast %118 : vector<2x8x32xf32> to vector<16x32xf32>
    %120 = arith.truncf %119 : vector<16x32xf32> to vector<16x32xbf16>
    %c0_43 = arith.constant 0 : index
    %c0_44 = arith.constant 0 : index
    %c0_45 = arith.constant 0 : index
    %121 = vector.load %arg5[%c0_43, %c0_44, %c0_45] : memref<1x32x32xbf16, #tpu.memory_space<vmem>>, vector<1x32x32xbf16>
    %122 = vector.shape_cast %121 : vector<1x32x32xbf16> to vector<32x32xbf16>
    %cst_46 = arith.constant dense<0.000000e+00> : vector<16x32xf32>
    %123 = tpu.matmul %120, %122, %cst_46 {dimension_numbers = #tpu.dot_dimension_numbers<[1], [0], [0], [1], [0, 0, 1, 1], [], []>} : vector<16x32xbf16>, vector<32x32xbf16>, vector<16x32xf32> -> vector<16x32xf32>
    %c0_47 = arith.constant 0 : index
    %c0_48 = arith.constant 0 : index
    %c0_49 = arith.constant 0 : index
    %124 = vector.load %arg6[%c0_47, %c0_48, %c0_49] : memref<1x1x32xf32, #tpu.memory_space<vmem>>, vector<1x1x32xf32>
    %125 = vector.shape_cast %124 : vector<1x1x32xf32> to vector<1x32xf32>
    %126 = vector.broadcast %125 : vector<1x32xf32> to vector<16x32xf32>
    %127 = arith.addf %123, %126 : vector<16x32xf32>
    %128 = arith.addf %4, %127 : vector<16x32xf32>
    %c0_50 = arith.constant 0 : index
    %c0_51 = arith.constant 0 : index
    %c0_52 = arith.constant 0 : index
    %129 = vector.load %arg13[%c0_50, %c0_51, %c0_52] : memref<1x1x32xf32, #tpu.memory_space<vmem>>, vector<1x1x32xf32>
    %130 = vector.shape_cast %129 : vector<1x1x32xf32> to vector<1x32xf32>
    %c0_53 = arith.constant 0 : index
    %c0_54 = arith.constant 0 : index
    %c0_55 = arith.constant 0 : index
    %131 = vector.load %arg14[%c0_53, %c0_54, %c0_55] : memref<1x1x32xf32, #tpu.memory_space<vmem>>, vector<1x1x32xf32>
    %132 = vector.shape_cast %131 : vector<1x1x32xf32> to vector<1x32xf32>
    %cst_56 = arith.constant dense<0.000000e+00> : vector<16xf32>
    %133 = vector.multi_reduction <add>, %128, %cst_56 [1] : vector<16x32xf32> to vector<16xf32>
    %134 = vector.shape_cast %133 : vector<16xf32> to vector<16x1xf32>
    %cst_57 = arith.constant 3.200000e+01 : f32
    %135 = vector.broadcast %cst_57 : f32 to vector<16x1xf32>
    %136 = arith.divf %134, %135 : vector<16x1xf32>
    %137 = vector.broadcast %136 : vector<16x1xf32> to vector<16x32xf32>
    %138 = arith.subf %128, %137 : vector<16x32xf32>
    %139 = arith.mulf %138, %138 : vector<16x32xf32>
    %cst_58 = arith.constant dense<0.000000e+00> : vector<16xf32>
    %140 = vector.multi_reduction <add>, %139, %cst_58 [1] : vector<16x32xf32> to vector<16xf32>
    %141 = vector.shape_cast %140 : vector<16xf32> to vector<16x1xf32>
    %cst_59 = arith.constant 3.100000e+01 : f32
    %142 = vector.broadcast %cst_59 : f32 to vector<16x1xf32>
    %143 = arith.divf %141, %142 : vector<16x1xf32>
    %144 = vector.broadcast %136 : vector<16x1xf32> to vector<16x32xf32>
    %145 = arith.subf %128, %144 : vector<16x32xf32>
    %146 = vector.broadcast %130 : vector<1x32xf32> to vector<16x32xf32>
    %147 = arith.mulf %146, %145 : vector<16x32xf32>
    %148 = math.sqrt %143 : vector<16x1xf32>
    %cst_60 = arith.constant 9.99999997E-7 : f32
    %149 = vector.broadcast %cst_60 : f32 to vector<16x1xf32>
    %150 = arith.addf %148, %149 : vector<16x1xf32>
    %151 = vector.broadcast %150 : vector<16x1xf32> to vector<16x32xf32>
    %152 = arith.divf %147, %151 : vector<16x32xf32>
    %153 = vector.broadcast %132 : vector<1x32xf32> to vector<16x32xf32>
    %154 = arith.addf %152, %153 : vector<16x32xf32>
    %155 = arith.truncf %154 : vector<16x32xf32> to vector<16x32xbf16>
    %c0_61 = arith.constant 0 : index
    %c0_62 = arith.constant 0 : index
    %c0_63 = arith.constant 0 : index
    %156 = vector.load %arg9[%c0_61, %c0_62, %c0_63] : memref<1x32x128xbf16, #tpu.memory_space<vmem>>, vector<1x32x128xbf16>
    %157 = vector.shape_cast %156 : vector<1x32x128xbf16> to vector<32x128xbf16>
    %cst_64 = arith.constant dense<0.000000e+00> : vector<16x128xf32>
    %158 = tpu.matmul %155, %157, %cst_64 {dimension_numbers = #tpu.dot_dimension_numbers<[1], [0], [0], [1], [0, 0, 1, 1], [], []>} : vector<16x32xbf16>, vector<32x128xbf16>, vector<16x128xf32> -> vector<16x128xf32>
    %c0_65 = arith.constant 0 : index
    %c0_66 = arith.constant 0 : index
    %c0_67 = arith.constant 0 : index
    %159 = vector.load %arg10[%c0_65, %c0_66, %c0_67] : memref<1x1x128xf32, #tpu.memory_space<vmem>>, vector<1x1x128xf32>
    %160 = vector.shape_cast %159 : vector<1x1x128xf32> to vector<1x128xf32>
    %161 = vector.broadcast %160 : vector<1x128xf32> to vector<16x128xf32>
    %162 = arith.addf %158, %161 : vector<16x128xf32>
    %cst_68 = arith.constant 5.000000e-01 : f32
    %163 = vector.broadcast %cst_68 : f32 to vector<16x128xf32>
    %164 = arith.mulf %163, %162 : vector<16x128xf32>
    %cst_69 = arith.constant 4.471500e-02 : f32
    %165 = vector.broadcast %cst_69 : f32 to vector<16x128xf32>
    %166 = arith.mulf %165, %162 : vector<16x128xf32>
    %167 = arith.mulf %166, %162 : vector<16x128xf32>
    %168 = arith.mulf %167, %162 : vector<16x128xf32>
    %169 = arith.addf %162, %168 : vector<16x128xf32>
    %cst_70 = arith.constant 0.797884583 : f32
    %170 = vector.broadcast %cst_70 : f32 to vector<16x128xf32>
    %171 = arith.mulf %170, %169 : vector<16x128xf32>
    %172 = math.tanh %171 : vector<16x128xf32>
    %cst_71 = arith.constant 1.000000e+00 : f32
    %173 = vector.broadcast %cst_71 : f32 to vector<16x128xf32>
    %174 = arith.addf %173, %172 : vector<16x128xf32>
    %175 = arith.mulf %164, %174 : vector<16x128xf32>
    %176 = arith.truncf %175 : vector<16x128xf32> to vector<16x128xbf16>
    %c0_72 = arith.constant 0 : index
    %c0_73 = arith.constant 0 : index
    %c0_74 = arith.constant 0 : index
    %177 = vector.load %arg11[%c0_72, %c0_73, %c0_74] : memref<1x128x32xbf16, #tpu.memory_space<vmem>>, vector<1x128x32xbf16>
    %178 = vector.shape_cast %177 : vector<1x128x32xbf16> to vector<128x32xbf16>
    %cst_75 = arith.constant dense<0.000000e+00> : vector<16x32xf32>
    %179 = tpu.matmul %176, %178, %cst_75 {dimension_numbers = #tpu.dot_dimension_numbers<[1], [0], [0], [1], [0, 0, 1, 1], [], []>} : vector<16x128xbf16>, vector<128x32xbf16>, vector<16x32xf32> -> vector<16x32xf32>
    %c0_76 = arith.constant 0 : index
    %c0_77 = arith.constant 0 : index
    %c0_78 = arith.constant 0 : index
    %180 = vector.load %arg12[%c0_76, %c0_77, %c0_78] : memref<1x1x32xf32, #tpu.memory_space<vmem>>, vector<1x1x32xf32>
    %181 = vector.shape_cast %180 : vector<1x1x32xf32> to vector<1x32xf32>
    %182 = vector.broadcast %181 : vector<1x32xf32> to vector<16x32xf32>
    %183 = arith.addf %179, %182 : vector<16x32xf32>
    %184 = arith.addf %128, %183 : vector<16x32xf32>
    %185 = vector.shape_cast %184 : vector<16x32xf32> to vector<2x8x32xf32>
    %c0_79 = arith.constant 0 : index
    %c0_80 = arith.constant 0 : index
    %c0_81 = arith.constant 0 : index
    %186 = vector.load %arg18[%c0_79, %c0_80, %c0_81] : memref<2x8x32xf32, #tpu.memory_space<vmem>>, vector<2x8x32xf32>
    tpu.vector_store %arg18[%c0_79, %c0_80, %c0_81], %185 {strides = array<i32>} : memref<2x8x32xf32, #tpu.memory_space<vmem>>, vector<2x8x32xf32>,
    %c1_i32 = arith.constant 1 : i32
    %187 = arith.cmpi eq, %arg0, %c1_i32 : i32
    %188 = arith.extui %187 : i1 to i32
    %c0_i32_82 = arith.constant 0 : i32
    %189 = arith.cmpi ne, %188, %c0_i32_82 : i32
    scf.if %189 {
      %190 = vector.shape_cast %184 : vector<16x32xf32> to vector<2x8x32xf32>
      %191 = vector.extract_strided_slice %190 {offsets = [0, 0, 0], sizes = [2, 1, 32], strides = [1, 1, 1]} : vector<2x8x32xf32> to vector<2x1x32xf32>
      %192 = vector.shape_cast %191 : vector<2x1x32xf32> to vector<2x32xf32>
      %c0_83 = arith.constant 0 : index
      %c0_84 = arith.constant 0 : index
      %193 = vector.load %arg15[%c0_83, %c0_84] : memref<32x128xf32, #tpu.memory_space<vmem>>, vector<32x128xf32>
      %cst_85 = arith.constant dense<0.000000e+00> : vector<2x128xf32>
      %194 = tpu.matmul %192, %193, %cst_85 {dimension_numbers = #tpu.dot_dimension_numbers<[1], [0], [0], [1], [0, 0, 1, 1], [], []>} : vector<2x32xf32>, vector<32x128xf32>, vector<2x128xf32> -> vector<2x128xf32>
      %c0_86 = arith.constant 0 : index
      %c0_87 = arith.constant 0 : index
      %195 = vector.load %arg16[%c0_86, %c0_87] : memref<1x128xf32, #tpu.memory_space<vmem>>, vector<1x128xf32>
      %196 = vector.broadcast %195 : vector<1x128xf32> to vector<2x128xf32>
      %197 = arith.addf %194, %196 : vector<2x128xf32>
      %c0_88 = arith.constant 0 : index
      %c0_89 = arith.constant 0 : index
      %198 = vector.load %arg17[%c0_88, %c0_89] : memref<2x128xf32, #tpu.memory_space<vmem>>, vector<2x128xf32>
      tpu.vector_store %arg17[%c0_88, %c0_89], %197 {strides = array<i32>} : memref<2x128xf32, #tpu.memory_space<vmem>>, vector<2x128xf32>,
    } else {
    }
    return
  }
  func.func @transform_0(%arg0: i32) -> (i32, i32, i32) {
    %c0_i32 = arith.constant 0 : i32
    %c0_i32_0 = arith.constant 0 : i32
    %c0_i32_1 = arith.constant 0 : i32
    %c0_i32_2 = arith.constant 0 : i32
    return %c0_i32, %c0_i32_0, %c0_i32_1 : i32, i32, i32
  }
  func.func @transform_1(%arg0: i32) -> (i32, i32, i32) {
    %c0_i32 = arith.constant 0 : i32
    %c0_i32_0 = arith.constant 0 : i32
    %c0_i32_1 = arith.constant 0 : i32
    %c0_i32_2 = arith.constant 0 : i32
    return %c0_i32, %c0_i32_0, %c0_i32_1 : i32, i32, i32
  }
  func.func @transform_2(%arg0: i32) -> (i32, i32, i32) {
    %c0_i32 = arith.constant 0 : i32
    %c0_i32_0 = arith.constant 0 : i32
    %c0_i32_1 = arith.constant 0 : i32
    return %arg0, %c0_i32, %c0_i32_0 : i32, i32, i32
  }
  func.func @transform_3(%arg0: i32) -> (i32, i32, i32) {
    %c0_i32 = arith.constant 0 : i32
    %c0_i32_0 = arith.constant 0 : i32
    %c0_i32_1 = arith.constant 0 : i32
    return %arg0, %c0_i32, %c0_i32_0 : i32, i32, i32
  }
  func.func @transform_4(%arg0: i32) -> (i32, i32, i32) {
    %c0_i32 = arith.constant 0 : i32
    %c0_i32_0 = arith.constant 0 : i32
    %c0_i32_1 = arith.constant 0 : i32
    return %arg0, %c0_i32, %c0_i32_0 : i32, i32, i32
  }
  func.func @transform_5(%arg0: i32) -> (i32, i32, i32) {
    %c0_i32 = arith.constant 0 : i32
    %c0_i32_0 = arith.constant 0 : i32
    %c0_i32_1 = arith.constant 0 : i32
    return %arg0, %c0_i32, %c0_i32_0 : i32, i32, i32
  }
  func.func @transform_6(%arg0: i32) -> (i32, i32, i32) {
    %c0_i32 = arith.constant 0 : i32
    %c0_i32_0 = arith.constant 0 : i32
    %c0_i32_1 = arith.constant 0 : i32
    return %arg0, %c0_i32, %c0_i32_0 : i32, i32, i32
  }
  func.func @transform_7(%arg0: i32) -> (i32, i32, i32) {
    %c0_i32 = arith.constant 0 : i32
    %c0_i32_0 = arith.constant 0 : i32
    %c0_i32_1 = arith.constant 0 : i32
    return %arg0, %c0_i32, %c0_i32_0 : i32, i32, i32
  }
  func.func @transform_8(%arg0: i32) -> (i32, i32, i32) {
    %c0_i32 = arith.constant 0 : i32
    %c0_i32_0 = arith.constant 0 : i32
    %c0_i32_1 = arith.constant 0 : i32
    return %arg0, %c0_i32, %c0_i32_0 : i32, i32, i32
  }
  func.func @transform_9(%arg0: i32) -> (i32, i32, i32) {
    %c0_i32 = arith.constant 0 : i32
    %c0_i32_0 = arith.constant 0 : i32
    %c0_i32_1 = arith.constant 0 : i32
    return %arg0, %c0_i32, %c0_i32_0 : i32, i32, i32
  }
  func.func @transform_10(%arg0: i32) -> (i32, i32, i32) {
    %c0_i32 = arith.constant 0 : i32
    %c0_i32_0 = arith.constant 0 : i32
    %c0_i32_1 = arith.constant 0 : i32
    return %arg0, %c0_i32, %c0_i32_0 : i32, i32, i32
  }
  func.func @transform_11(%arg0: i32) -> (i32, i32, i32) {
    %c0_i32 = arith.constant 0 : i32
    %c0_i32_0 = arith.constant 0 : i32
    %c0_i32_1 = arith.constant 0 : i32
    return %arg0, %c0_i32, %c0_i32_0 : i32, i32, i32
  }
  func.func @transform_12(%arg0: i32) -> (i32, i32, i32) {
    %c0_i32 = arith.constant 0 : i32
    %c0_i32_0 = arith.constant 0 : i32
    %c0_i32_1 = arith.constant 0 : i32
    return %arg0, %c0_i32, %c0_i32_0 : i32, i32, i32
  }
  func.func @transform_13(%arg0: i32) -> (i32, i32, i32) {
    %c0_i32 = arith.constant 0 : i32
    %c0_i32_0 = arith.constant 0 : i32
    %c0_i32_1 = arith.constant 0 : i32
    return %arg0, %c0_i32, %c0_i32_0 : i32, i32, i32
  }
  func.func @transform_14(%arg0: i32) -> (i32, i32) {
    %c0_i32 = arith.constant 0 : i32
    %c0_i32_0 = arith.constant 0 : i32
    %c0_i32_1 = arith.constant 0 : i32
    return %c0_i32, %c0_i32_0 : i32, i32
  }
  func.func @transform_15(%arg0: i32) -> (i32, i32) {
    %c0_i32 = arith.constant 0 : i32
    %c0_i32_0 = arith.constant 0 : i32
    %c0_i32_1 = arith.constant 0 : i32
    return %c0_i32, %c0_i32_0 : i32, i32
  }
  func.func @transform_16(%arg0: i32) -> (i32, i32) {
    %c0_i32 = arith.constant 0 : i32
    %c0_i32_0 = arith.constant 0 : i32
    %c0_i32_1 = arith.constant 0 : i32
    return %c0_i32, %c0_i32_0 : i32, i32
  }
}

</mosaic_0001>

<llo_original>
// kernel: tpu_custom_call.1
$region0: #{tpu_custom_call.1}
  #allocation0 [shape = 'u32[]', space=smem, size = 0x4, offset = 0x4, fixed_abs, tag = 'smem constant byte address 0x4 - core index']
  #allocation1 [shape = 'u32[144,128]{1,0:T(1,128)}', space=vmem, size = 0x12000, scoped, tag = 'internal scratch']
  #allocation2 [shape = 'f32[2,8,32]{2,1,0:T(8,128)}', space=vmem, size = 0x2000, scoped, tag = 'scratch operand']
  %s0 = inlined_call_operand.vmem [shape: bf16[2,8,32], index: 0, kind: input, shape index: {}]
  %s1 = inlined_call_operand.vmem [shape: f32[2,8,8], index: 1, kind: input, shape index: {}]
  %s2 = inlined_call_operand.vmem [shape: bf16[2,32,96], index: 2, kind: input, shape index: {}]
  %s3 = inlined_call_operand.vmem [shape: f32[2,1,96], index: 3, kind: input, shape index: {}]
  %s4 = inlined_call_operand.vmem [shape: bf16[2,32,32], index: 4, kind: input, shape index: {}]
  %s5 = inlined_call_operand.vmem [shape: f32[2,1,32], index: 5, kind: input, shape index: {}]
  %s6 = inlined_call_operand.vmem [shape: f32[2,1,32], index: 6, kind: input, shape index: {}]
  %s7 = inlined_call_operand.vmem [shape: f32[2,1,32], index: 7, kind: input, shape index: {}]
  %s8 = inlined_call_operand.vmem [shape: bf16[2,32,128], index: 8, kind: input, shape index: {}]
  %s9 = inlined_call_operand.vmem [shape: f32[2,1,128], index: 9, kind: input, shape index: {}]
  %s10 = inlined_call_operand.vmem [shape: bf16[2,128,32], index: 10, kind: input, shape index: {}]
  %s11 = inlined_call_operand.vmem [shape: f32[2,1,32], index: 11, kind: input, shape index: {}]
  %s12 = inlined_call_operand.vmem [shape: f32[2,1,32], index: 12, kind: input, shape index: {}]
  %s13 = inlined_call_operand.vmem [shape: f32[2,1,32], index: 13, kind: input, shape index: {}]
  %s14 = inlined_call_operand.vmem [shape: f32[32,128], index: 14, kind: input, shape index: {}]
  %s15 = inlined_call_operand.vmem [shape: f32[1,128], index: 15, kind: input, shape index: {}]
  %s16 = inlined_call_operand.hbm [shape: f32[2,128], index: 16, kind: output, shape index: {}]
  %s17 = sld [smem:[#allocation0]]
  $region105: #{tpu_custom_call.1} parent=0
    _
  %s19 = ssub.s32 1, %s17
  %s20 = scalar_select 0, %s19, %s17
  $region1: #{tpu_custom_call.1} parent=0
    #allocation3 [shape = 'u8[1024]{0}', space=vmem, size = 0x400, scoped, tag = 'output window, operand 0, single buffered']
    #allocation4 [shape = 's32[2]{0}', space=sflag, size = 0x8, scoped, tag = 'scoped memory for tpu_custom_call.1']
    %21 = vsyncpa [#allocation4], 0
    loop: start=0, step=1, limit=4
    $region2: #{tpu_custom_call.1} parent=1 // loop_pre_header
      _
    $region3: #{tpu_custom_call.1} parent=1 // loop_header
      %s23 = sphi 0, %s27
      %p24 = scmp.ge.s32.totalorder %s23, 4
      %s31 = sphi 0, %s31
      %s33 = sphi 0, %s31
      %s34 = sphi 0, %s33
      %s48 = sphi 0, %s34
      %s52 = sphi 0, %s52
      %s54 = sphi 0, %s52
      %s55 = sphi 0, %s54
      %s69 = sphi 0, %s55
      %s75 = sphi 0, %s77
      %s78 = sphi 0, %s75
      %s79 = sphi 0, %s78
      %s95 = sphi 0, %s79
      %s101 = sphi 0, %s103
      %s104 = sphi 0, %s101
      %s105 = sphi 0, %s104
      %s121 = sphi 0, %s105
      %s127 = sphi 0, %s129
      %s130 = sphi 0, %s127
      %s131 = sphi 0, %s130
      %s147 = sphi 0, %s131
      %s153 = sphi 0, %s155
      %s156 = sphi 0, %s153
      %s157 = sphi 0, %s156
      %s173 = sphi 0, %s157
      %s179 = sphi 0, %s181
      %s182 = sphi 0, %s179
      %s183 = sphi 0, %s182
      %s199 = sphi 0, %s183
      %s205 = sphi 0, %s207
      %s208 = sphi 0, %s205
      %s209 = sphi 0, %s208
      %s225 = sphi 0, %s209
      %s231 = sphi 0, %s233
      %s234 = sphi 0, %s231
      %s235 = sphi 0, %s234
      %s251 = sphi 0, %s235
      %s257 = sphi 0, %s259
      %s260 = sphi 0, %s257
      %s261 = sphi 0, %s260
      %s277 = sphi 0, %s261
      %s283 = sphi 0, %s285
      %s286 = sphi 0, %s283
      %s287 = sphi 0, %s286
      %s303 = sphi 0, %s287
      %s309 = sphi 0, %s311
      %s312 = sphi 0, %s309
      %s313 = sphi 0, %s312
      %s329 = sphi 0, %s313
      %s335 = sphi 0, %s337
      %s338 = sphi 0, %s335
      %s339 = sphi 0, %s338
      %s355 = sphi 0, %s339
      %s361 = sphi 0, %s363
      %s364 = sphi 0, %s361
      %s365 = sphi 0, %s364
      %s381 = sphi 0, %s365
      %s385 = sphi 0, %s385
      %s387 = sphi 0, %s385
      %s388 = sphi 0, %s387
      %s402 = sphi 0, %s388
      %s406 = sphi 0, %s406
      %s408 = sphi 0, %s406
      %s409 = sphi 0, %s408
      %s423 = sphi 0, %s409
      %s427 = sphi 0, %s427
      %s429 = sphi 0, %s427
      %s430 = sphi 0, %s429
      %s444 = sphi 0, %s430
    $region4: #{tpu_custom_call.1} parent=1 // loop_header_branch
      %26 = sbr.rel (%p24) target = $region8
    $region5: #{tpu_custom_call.1} parent=1 // loop_body
      %s28 = ssub.s32 %s23, 1
      %s29 = ssub.s32 %s23, 2
      %s30 = sadd.s32 %s23, 1
      %s32 = sadd.s32 %s31, 1
      %p35 = scmp.eq.s32.totalorder %s23, 1
      %p36 = scmp.ne.s32.totalorder %s31, %s33
      %p37 = scmp.eq.s32.totalorder %s23, 0
      %p38 = por %p36, %p37
      %p39 = scmp.ne.s32.totalorder %s31, %s33
      %p40 = scmp.eq.s32.totalorder %s28, 1
      %p41 = por %p39, %p40
      %p42 = scmp.ne.s32.totalorder %s33, %s34
      %p43 = scmp.eq.s32.totalorder %s28, 0
      %p44 = por %p42, %p43
      %p45 = scmp.ne.s32.totalorder %s33, %s34
      %p46 = scmp.eq.s32.totalorder %s29, 1
      %p47 = por %p45, %p46
      %p49 = scmp.ne.s32.totalorder %s34, %s48
      %p50 = scmp.eq.s32.totalorder %s29, 0
      %p51 = por %p49, %p50
      %s53 = sadd.s32 %s52, 1
      %p56 = scmp.eq.s32.totalorder %s23, 1
      %p57 = scmp.ne.s32.totalorder %s52, %s54
      %p58 = scmp.eq.s32.totalorder %s23, 0
      %p59 = por %p57, %p58
      %p60 = scmp.ne.s32.totalorder %s52, %s54
      %p61 = scmp.eq.s32.totalorder %s28, 1
      %p62 = por %p60, %p61
      %p63 = scmp.ne.s32.totalorder %s54, %s55
      %p64 = scmp.eq.s32.totalorder %s28, 0
      %p65 = por %p63, %p64
      %p66 = scmp.ne.s32.totalorder %s54, %s55
      %p67 = scmp.eq.s32.totalorder %s29, 1
      %p68 = por %p66, %p67
      %p70 = scmp.ne.s32.totalorder %s55, %s69
      %p71 = scmp.eq.s32.totalorder %s29, 0
      %p72 = por %p70, %p71
      %s73 = ssub.s32 %s23, %s30
      %p74 = scmp.eq.s32.totalorder %s73, 0
      %s76 = sadd.s32 %s75, 1
      %s77 = scalar_select %p74, %s75, %s76
      %p80 = pneg %p74
      %p81 = scmp.eq.s32.totalorder %s23, 1
      %p82 = por %p80, %p81
      %p83 = scmp.ne.s32.totalorder %s75, %s78
      %p84 = scmp.eq.s32.totalorder %s23, 0
      %p85 = por %p83, %p84
      %p86 = scmp.ne.s32.totalorder %s75, %s78
      %p87 = scmp.eq.s32.totalorder %s28, 1
      %p88 = por %p86, %p87
      %p89 = scmp.ne.s32.totalorder %s78, %s79
      %p90 = scmp.eq.s32.totalorder %s28, 0
      %p91 = por %p89, %p90
      %p92 = scmp.ne.s32.totalorder %s78, %s79
      %p93 = scmp.eq.s32.totalorder %s29, 1
      %p94 = por %p92, %p93
      %p96 = scmp.ne.s32.totalorder %s79, %s95
      %p97 = scmp.eq.s32.totalorder %s29, 0
      %p98 = por %p96, %p97
      %s99 = ssub.s32 %s23, %s30
      %p100 = scmp.eq.s32.totalorder %s99, 0
      %s102 = sadd.s32 %s101, 1
      %s103 = scalar_select %p100, %s101, %s102
      %p106 = pneg %p100
      %p107 = scmp.eq.s32.totalorder %s23, 1
      %p108 = por %p106, %p107
      %p109 = scmp.ne.s32.totalorder %s101, %s104
      %p110 = scmp.eq.s32.totalorder %s23, 0
      %p111 = por %p109, %p110
      %p112 = scmp.ne.s32.totalorder %s101, %s104
      %p113 = scmp.eq.s32.totalorder %s28, 1
      %p114 = por %p112, %p113
      %p115 = scmp.ne.s32.totalorder %s104, %s105
      %p116 = scmp.eq.s32.totalorder %s28, 0
      %p117 = por %p115, %p116
      %p118 = scmp.ne.s32.totalorder %s104, %s105
      %p119 = scmp.eq.s32.totalorder %s29, 1
      %p120 = por %p118, %p119
      %p122 = scmp.ne.s32.totalorder %s105, %s121
      %p123 = scmp.eq.s32.totalorder %s29, 0
      %p124 = por %p122, %p123
      %s125 = ssub.s32 %s23, %s30
      %p126 = scmp.eq.s32.totalorder %s125, 0
      %s128 = sadd.s32 %s127, 1
      %s129 = scalar_select %p126, %s127, %s128
      %p132 = pneg %p126
      %p133 = scmp.eq.s32.totalorder %s23, 1
      %p134 = por %p132, %p133
      %p135 = scmp.ne.s32.totalorder %s127, %s130
      %p136 = scmp.eq.s32.totalorder %s23, 0
      %p137 = por %p135, %p136
      %p138 = scmp.ne.s32.totalorder %s127, %s130
      %p139 = scmp.eq.s32.totalorder %s28, 1
      %p140 = por %p138, %p139
      %p141 = scmp.ne.s32.totalorder %s130, %s131
      %p142 = scmp.eq.s32.totalorder %s28, 0
      %p143 = por %p141, %p142
      %p144 = scmp.ne.s32.totalorder %s130, %s131
      %p145 = scmp.eq.s32.totalorder %s29, 1
      %p146 = por %p144, %p145
      %p148 = scmp.ne.s32.totalorder %s131, %s147
      %p149 = scmp.eq.s32.totalorder %s29, 0
      %p150 = por %p148, %p149
      %s151 = ssub.s32 %s23, %s30
      %p152 = scmp.eq.s32.totalorder %s151, 0
      %s154 = sadd.s32 %s153, 1
      %s155 = scalar_select %p152, %s153, %s154
      %p158 = pneg %p152
      %p159 = scmp.eq.s32.totalorder %s23, 1
      %p160 = por %p158, %p159
      %p161 = scmp.ne.s32.totalorder %s153, %s156
      %p162 = scmp.eq.s32.totalorder %s23, 0
      %p163 = por %p161, %p162
      %p164 = scmp.ne.s32.totalorder %s153, %s156
      %p165 = scmp.eq.s32.totalorder %s28, 1
      %p166 = por %p164, %p165
      %p167 = scmp.ne.s32.totalorder %s156, %s157
      %p168 = scmp.eq.s32.totalorder %s28, 0
      %p169 = por %p167, %p168
      %p170 = scmp.ne.s32.totalorder %s156, %s157
      %p171 = scmp.eq.s32.totalorder %s29, 1
      %p172 = por %p170, %p171
      %p174 = scmp.ne.s32.totalorder %s157, %s173
      %p175 = scmp.eq.s32.totalorder %s29, 0
      %p176 = por %p174, %p175
      %s177 = ssub.s32 %s23, %s30
      %p178 = scmp.eq.s32.totalorder %s177, 0
      %s180 = sadd.s32 %s179, 1
      %s181 = scalar_select %p178, %s179, %s180
      %p184 = pneg %p178
      %p185 = scmp.eq.s32.totalorder %s23, 1
      %p186 = por %p184, %p185
      %p187 = scmp.ne.s32.totalorder %s179, %s182
      %p188 = scmp.eq.s32.totalorder %s23, 0
      %p189 = por %p187, %p188
      %p190 = scmp.ne.s32.totalorder %s179, %s182
      %p191 = scmp.eq.s32.totalorder %s28, 1
      %p192 = por %p190, %p191
      %p193 = scmp.ne.s32.totalorder %s182, %s183
      %p194 = scmp.eq.s32.totalorder %s28, 0
      %p195 = por %p193, %p194
      %p196 = scmp.ne.s32.totalorder %s182, %s183
      %p197 = scmp.eq.s32.totalorder %s29, 1
      %p198 = por %p196, %p197
      %p200 = scmp.ne.s32.totalorder %s183, %s199
      %p201 = scmp.eq.s32.totalorder %s29, 0
      %p202 = por %p200, %p201
      %s203 = ssub.s32 %s23, %s30
      %p204 = scmp.eq.s32.totalorder %s203, 0
      %s206 = sadd.s32 %s205, 1
      %s207 = scalar_select %p204, %s205, %s206
      %p210 = pneg %p204
      %p211 = scmp.eq.s32.totalorder %s23, 1
      %p212 = por %p210, %p211
      %p213 = scmp.ne.s32.totalorder %s205, %s208
      %p214 = scmp.eq.s32.totalorder %s23, 0
      %p215 = por %p213, %p214
      %p216 = scmp.ne.s32.totalorder %s205, %s208
      %p217 = scmp.eq.s32.totalorder %s28, 1
      %p218 = por %p216, %p217
      %p219 = scmp.ne.s32.totalorder %s208, %s209
      %p220 = scmp.eq.s32.totalorder %s28, 0
      %p221 = por %p219, %p220
      %p222 = scmp.ne.s32.totalorder %s208, %s209
      %p223 = scmp.eq.s32.totalorder %s29, 1
      %p224 = por %p222, %p223
      %p226 = scmp.ne.s32.totalorder %s209, %s225
      %p227 = scmp.eq.s32.totalorder %s29, 0
      %p228 = por %p226, %p227
      %s229 = ssub.s32 %s23, %s30
      %p230 = scmp.eq.s32.totalorder %s229, 0
      %s232 = sadd.s32 %s231, 1
      %s233 = scalar_select %p230, %s231, %s232
      %p236 = pneg %p230
      %p237 = scmp.eq.s32.totalorder %s23, 1
      %p238 = por %p236, %p237
      %p239 = scmp.ne.s32.totalorder %s231, %s234
      %p240 = scmp.eq.s32.totalorder %s23, 0
      %p241 = por %p239, %p240
      %p242 = scmp.ne.s32.totalorder %s231, %s234
      %p243 = scmp.eq.s32.totalorder %s28, 1
      %p244 = por %p242, %p243
      %p245 = scmp.ne.s32.totalorder %s234, %s235
      %p246 = scmp.eq.s32.totalorder %s28, 0
      %p247 = por %p245, %p246
      %p248 = scmp.ne.s32.totalorder %s234, %s235
      %p249 = scmp.eq.s32.totalorder %s29, 1
      %p250 = por %p248, %p249
      %p252 = scmp.ne.s32.totalorder %s235, %s251
      %p253 = scmp.eq.s32.totalorder %s29, 0
      %p254 = por %p252, %p253
      %s255 = ssub.s32 %s23, %s30
      %p256 = scmp.eq.s32.totalorder %s255, 0
      %s258 = sadd.s32 %s257, 1
      %s259 = scalar_select %p256, %s257, %s258
      %p262 = pneg %p256
      %p263 = scmp.eq.s32.totalorder %s23, 1
      %p264 = por %p262, %p263
      %p265 = scmp.ne.s32.totalorder %s257, %s260
      %p266 = scmp.eq.s32.totalorder %s23, 0
      %p267 = por %p265, %p266
      %p268 = scmp.ne.s32.totalorder %s257, %s260
      %p269 = scmp.eq.s32.totalorder %s28, 1
      %p270 = por %p268, %p269
      %p271 = scmp.ne.s32.totalorder %s260, %s261
      %p272 = scmp.eq.s32.totalorder %s28, 0
      %p273 = por %p271, %p272
      %p274 = scmp.ne.s32.totalorder %s260, %s261
      %p275 = scmp.eq.s32.totalorder %s29, 1
      %p276 = por %p274, %p275
      %p278 = scmp.ne.s32.totalorder %s261, %s277
      %p279 = scmp.eq.s32.totalorder %s29, 0
      %p280 = por %p278, %p279
      %s281 = ssub.s32 %s23, %s30
      %p282 = scmp.eq.s32.totalorder %s281, 0
      %s284 = sadd.s32 %s283, 1
      %s285 = scalar_select %p282, %s283, %s284
      %p288 = pneg %p282
      %p289 = scmp.eq.s32.totalorder %s23, 1
      %p290 = por %p288, %p289
      %p291 = scmp.ne.s32.totalorder %s283, %s286
      %p292 = scmp.eq.s32.totalorder %s23, 0
      %p293 = por %p291, %p292
      %p294 = scmp.ne.s32.totalorder %s283, %s286
      %p295 = scmp.eq.s32.totalorder %s28, 1
      %p296 = por %p294, %p295
      %p297 = scmp.ne.s32.totalorder %s286, %s287
      %p298 = scmp.eq.s32.totalorder %s28, 0
      %p299 = por %p297, %p298
      %p300 = scmp.ne.s32.totalorder %s286, %s287
      %p301 = scmp.eq.s32.totalorder %s29, 1
      %p302 = por %p300, %p301
      %p304 = scmp.ne.s32.totalorder %s287, %s303
      %p305 = scmp.eq.s32.totalorder %s29, 0
      %p306 = por %p304, %p305
      %s307 = ssub.s32 %s23, %s30
      %p308 = scmp.eq.s32.totalorder %s307, 0
      %s310 = sadd.s32 %s309, 1
      %s311 = scalar_select %p308, %s309, %s310
      %p314 = pneg %p308
      %p315 = scmp.eq.s32.totalorder %s23, 1
      %p316 = por %p314, %p315
      %p317 = scmp.ne.s32.totalorder %s309, %s312
      %p318 = scmp.eq.s32.totalorder %s23, 0
      %p319 = por %p317, %p318
      %p320 = scmp.ne.s32.totalorder %s309, %s312
      %p321 = scmp.eq.s32.totalorder %s28, 1
      %p322 = por %p320, %p321
      %p323 = scmp.ne.s32.totalorder %s312, %s313
      %p324 = scmp.eq.s32.totalorder %s28, 0
      %p325 = por %p323, %p324
      %p326 = scmp.ne.s32.totalorder %s312, %s313
      %p327 = scmp.eq.s32.totalorder %s29, 1
      %p328 = por %p326, %p327
      %p330 = scmp.ne.s32.totalorder %s313, %s329
      %p331 = scmp.eq.s32.totalorder %s29, 0
      %p332 = por %p330, %p331
      %s333 = ssub.s32 %s23, %s30
      %p334 = scmp.eq.s32.totalorder %s333, 0
      %s336 = sadd.s32 %s335, 1
      %s337 = scalar_select %p334, %s335, %s336
      %p340 = pneg %p334
      %p341 = scmp.eq.s32.totalorder %s23, 1
      %p342 = por %p340, %p341
      %p343 = scmp.ne.s32.totalorder %s335, %s338
      %p344 = scmp.eq.s32.totalorder %s23, 0
      %p345 = por %p343, %p344
      %p346 = scmp.ne.s32.totalorder %s335, %s338
      %p347 = scmp.eq.s32.totalorder %s28, 1
      %p348 = por %p346, %p347
      %p349 = scmp.ne.s32.totalorder %s338, %s339
      %p350 = scmp.eq.s32.totalorder %s28, 0
      %p351 = por %p349, %p350
      %p352 = scmp.ne.s32.totalorder %s338, %s339
      %p353 = scmp.eq.s32.totalorder %s29, 1
      %p354 = por %p352, %p353
      %p356 = scmp.ne.s32.totalorder %s339, %s355
      %p357 = scmp.eq.s32.totalorder %s29, 0
      %p358 = por %p356, %p357
      %s359 = ssub.s32 %s23, %s30
      %p360 = scmp.eq.s32.totalorder %s359, 0
      %s362 = sadd.s32 %s361, 1
      %s363 = scalar_select %p360, %s361, %s362
      %p366 = pneg %p360
      %p367 = scmp.eq.s32.totalorder %s23, 1
      %p368 = por %p366, %p367
      %p369 = scmp.ne.s32.totalorder %s361, %s364
      %p370 = scmp.eq.s32.totalorder %s23, 0
      %p371 = por %p369, %p370
      %p372 = scmp.ne.s32.totalorder %s361, %s364
      %p373 = scmp.eq.s32.totalorder %s28, 1
      %p374 = por %p372, %p373
      %p375 = scmp.ne.s32.totalorder %s364, %s365
      %p376 = scmp.eq.s32.totalorder %s28, 0
      %p377 = por %p375, %p376
      %p378 = scmp.ne.s32.totalorder %s364, %s365
      %p379 = scmp.eq.s32.totalorder %s29, 1
      %p380 = por %p378, %p379
      %p382 = scmp.ne.s32.totalorder %s365, %s381
      %p383 = scmp.eq.s32.totalorder %s29, 0
      %p384 = por %p382, %p383
      %s386 = sadd.s32 %s385, 1
      %p389 = scmp.eq.s32.totalorder %s23, 1
      %p390 = scmp.ne.s32.totalorder %s385, %s387
      %p391 = scmp.eq.s32.totalorder %s23, 0
      %p392 = por %p390, %p391
      %p393 = scmp.ne.s32.totalorder %s385, %s387
      %p394 = scmp.eq.s32.totalorder %s28, 1
      %p395 = por %p393, %p394
      %p396 = scmp.ne.s32.totalorder %s387, %s388
      %p397 = scmp.eq.s32.totalorder %s28, 0
      %p398 = por %p396, %p397
      %p399 = scmp.ne.s32.totalorder %s387, %s388
      %p400 = scmp.eq.s32.totalorder %s29, 1
      %p401 = por %p399, %p400
      %p403 = scmp.ne.s32.totalorder %s388, %s402
      %p404 = scmp.eq.s32.totalorder %s29, 0
      %p405 = por %p403, %p404
      %s407 = sadd.s32 %s406, 1
      %p410 = scmp.eq.s32.totalorder %s23, 1
      %p411 = scmp.ne.s32.totalorder %s406, %s408
      %p412 = scmp.eq.s32.totalorder %s23, 0
      %p413 = por %p411, %p412
      %p414 = scmp.ne.s32.totalorder %s406, %s408
      %p415 = scmp.eq.s32.totalorder %s28, 1
      %p416 = por %p414, %p415
      %p417 = scmp.ne.s32.totalorder %s408, %s409
      %p418 = scmp.eq.s32.totalorder %s28, 0
      %p419 = por %p417, %p418
      %p420 = scmp.ne.s32.totalorder %s408, %s409
      %p421 = scmp.eq.s32.totalorder %s29, 1
      %p422 = por %p420, %p421
      %p424 = scmp.ne.s32.totalorder %s409, %s423
      %p425 = scmp.eq.s32.totalorder %s29, 0
      %p426 = por %p424, %p425
      %s428 = sadd.s32 %s427, 1
      %p431 = scmp.eq.s32.totalorder %s23, 1
      %p432 = scmp.ne.s32.totalorder %s427, %s429
      %p433 = scmp.eq.s32.totalorder %s23, 0
      %p434 = por %p432, %p433
      %p435 = scmp.ne.s32.totalorder %s427, %s429
      %p436 = scmp.eq.s32.totalorder %s28, 1
      %p437 = por %p435, %p436
      %p438 = scmp.ne.s32.totalorder %s429, %s430
      %p439 = scmp.eq.s32.totalorder %s28, 0
      %p440 = por %p438, %p439
      %p441 = scmp.ne.s32.totalorder %s429, %s430
      %p442 = scmp.eq.s32.totalorder %s29, 1
      %p443 = por %p441, %p442
      %p445 = scmp.ne.s32.totalorder %s430, %s444
      %p446 = scmp.eq.s32.totalorder %s29, 0
      %p447 = por %p445, %p446
      %p448 = scmp.le.s32.totalorder 1, %s23
      %p449 = scmp.lt.s32.totalorder %s23, 3
      %p450 = pnand %p448, %p449
      %p451 = pneg %p450
      // Predicated region
      $region9: #{tpu_custom_call.1} parent=5 // pred_check
        _
      $region10: #{tpu_custom_call.1} parent=5 // pred_check_branch
        %453 = sbr.rel (%p450) target = $region12
      $region11: #{tpu_custom_call.1} parent=5 // pred_region
        %s454 = ssub.s32 %s23, 1
        // Predicated region
        $region13: #{tpu_custom_call.1} parent=11 // pred_check
          %p455 = pneg %p44
        $region14: #{tpu_custom_call.1} parent=11 // pred_check_branch
          %457 = sbr.rel (%p455) target = $region16
        $region15: #{tpu_custom_call.1} parent=11 // pred_region
          _
        $region16: #{tpu_custom_call.1} parent=11 // pred_fallthru
          _
        // Predicated region
        $region17: #{tpu_custom_call.1} parent=11 // pred_check
          %p458 = pneg %p65
        $region18: #{tpu_custom_call.1} parent=11 // pred_check_branch
          %460 = sbr.rel (%p458) target = $region20
        $region19: #{tpu_custom_call.1} parent=11 // pred_region
          _
        $region20: #{tpu_custom_call.1} parent=11 // pred_fallthru
          _
        // Predicated region
        $region21: #{tpu_custom_call.1} parent=11 // pred_check
          %p461 = pneg %p398
        $region22: #{tpu_custom_call.1} parent=11 // pred_check_branch
          %463 = sbr.rel (%p461) target = $region24
        $region23: #{tpu_custom_call.1} parent=11 // pred_region
          _
        $region24: #{tpu_custom_call.1} parent=11 // pred_fallthru
          _
        // Predicated region
        $region25: #{tpu_custom_call.1} parent=11 // pred_check
          %p464 = pneg %p419
        $region26: #{tpu_custom_call.1} parent=11 // pred_check_branch
          %466 = sbr.rel (%p464) target = $region28
        $region27: #{tpu_custom_call.1} parent=11 // pred_region
          _
        $region28: #{tpu_custom_call.1} parent=11 // pred_fallthru
          _
      $region12: #{tpu_custom_call.1} parent=5 // pred_fallthru
        _
      %p467 = scmp.lt.s32.totalorder %s23, 2
      // Predicated region
      $region29: #{tpu_custom_call.1} parent=5 // pred_check
        %p468 = pneg %p467
      $region30: #{tpu_custom_call.1} parent=5 // pred_check_branch
        %470 = sbr.rel (%p468) target = $region32
      $region31: #{tpu_custom_call.1} parent=5 // pred_region
        // Predicated region
        $region33: #{tpu_custom_call.1} parent=31 // pred_check
          %p471 = pneg %p85
        $region34: #{tpu_custom_call.1} parent=31 // pred_check_branch
          %473 = sbr.rel (%p471) target = $region36
        $region35: #{tpu_custom_call.1} parent=31 // pred_region
          %p474 = scmp.lt.s32.totalorder %s23, 1
          %s475 = scalar_select %p474, %s23, 1
          %s476 = smul.addr %s475, 4
          %s477 = smul.addr %s476, 4
          %s478 = scalar_lea.vmem %s2, %s477
        $region36: #{tpu_custom_call.1} parent=31 // pred_fallthru
          _
        // Predicated region
        $region37: #{tpu_custom_call.1} parent=31 // pred_check
          %p479 = pneg %p111
        $region38: #{tpu_custom_call.1} parent=31 // pred_check_branch
          %481 = sbr.rel (%p479) target = $region40
        $region39: #{tpu_custom_call.1} parent=31 // pred_region
          %p482 = scmp.lt.s32.totalorder %s23, 1
          %s483 = scalar_select %p482, %s23, 1
          %s484 = scalar_lea.vmem %s3, %s483
        $region40: #{tpu_custom_call.1} parent=31 // pred_fallthru
          _
        // Predicated region
        $region41: #{tpu_custom_call.1} parent=31 // pred_check
          %p485 = pneg %p137
        $region42: #{tpu_custom_call.1} parent=31 // pred_check_branch
          %487 = sbr.rel (%p485) target = $region44
        $region43: #{tpu_custom_call.1} parent=31 // pred_region
          %p488 = scmp.lt.s32.totalorder %s23, 1
          %s489 = scalar_select %p488, %s23, 1
          %s490 = smul.addr %s489, 4
          %s491 = smul.addr %s490, 4
          %s492 = scalar_lea.vmem %s4, %s491
        $region44: #{tpu_custom_call.1} parent=31 // pred_fallthru
          _
        // Predicated region
        $region45: #{tpu_custom_call.1} parent=31 // pred_check
          %p493 = pneg %p163
        $region46: #{tpu_custom_call.1} parent=31 // pred_check_branch
          %495 = sbr.rel (%p493) target = $region48
        $region47: #{tpu_custom_call.1} parent=31 // pred_region
          %p496 = scmp.lt.s32.totalorder %s23, 1
          %s497 = scalar_select %p496, %s23, 1
          %s498 = scalar_lea.vmem %s5, %s497
        $region48: #{tpu_custom_call.1} parent=31 // pred_fallthru
          _
        // Predicated region
        $region49: #{tpu_custom_call.1} parent=31 // pred_check
          %p499 = pneg %p189
        $region50: #{tpu_custom_call.1} parent=31 // pred_check_branch
          %501 = sbr.rel (%p499) target = $region52
        $region51: #{tpu_custom_call.1} parent=31 // pred_region
          %p502 = scmp.lt.s32.totalorder %s23, 1
          %s503 = scalar_select %p502, %s23, 1
          %s504 = scalar_lea.vmem %s6, %s503
        $region52: #{tpu_custom_call.1} parent=31 // pred_fallthru
          _
        // Predicated region
        $region53: #{tpu_custom_call.1} parent=31 // pred_check
          %p505 = pneg %p215
        $region54: #{tpu_custom_call.1} parent=31 // pred_check_branch
          %507 = sbr.rel (%p505) target = $region56
        $region55: #{tpu_custom_call.1} parent=31 // pred_region
          %p508 = scmp.lt.s32.totalorder %s23, 1
          %s509 = scalar_select %p508, %s23, 1
          %s510 = scalar_lea.vmem %s7, %s509
        $region56: #{tpu_custom_call.1} parent=31 // pred_fallthru
          _
        // Predicated region
        $region57: #{tpu_custom_call.1} parent=31 // pred_check
          %p511 = pneg %p241
        $region58: #{tpu_custom_call.1} parent=31 // pred_check_branch
          %513 = sbr.rel (%p511) target = $region60
        $region59: #{tpu_custom_call.1} parent=31 // pred_region
          %p514 = scmp.lt.s32.totalorder %s23, 1
          %s515 = scalar_select %p514, %s23, 1
          %s516 = smul.addr %s515, 4
          %s517 = smul.addr %s516, 4
          %s518 = scalar_lea.vmem %s8, %s517
        $region60: #{tpu_custom_call.1} parent=31 // pred_fallthru
          _
        // Predicated region
        $region61: #{tpu_custom_call.1} parent=31 // pred_check
          %p519 = pneg %p267
        $region62: #{tpu_custom_call.1} parent=31 // pred_check_branch
          %521 = sbr.rel (%p519) target = $region64
        $region63: #{tpu_custom_call.1} parent=31 // pred_region
          %p522 = scmp.lt.s32.totalorder %s23, 1
          %s523 = scalar_select %p522, %s23, 1
          %s524 = scalar_lea.vmem %s9, %s523
        $region64: #{tpu_custom_call.1} parent=31 // pred_fallthru
          _
        // Predicated region
        $region65: #{tpu_custom_call.1} parent=31 // pred_check
          %p525 = pneg %p293
        $region66: #{tpu_custom_call.1} parent=31 // pred_check_branch
          %527 = sbr.rel (%p525) target = $region68
        $region67: #{tpu_custom_call.1} parent=31 // pred_region
          %p528 = scmp.lt.s32.totalorder %s23, 1
          %s529 = scalar_select %p528, %s23, 1
          %s530 = smul.addr %s529, 16
          %s531 = smul.addr %s530, 4
          %s532 = scalar_lea.vmem %s10, %s531
        $region68: #{tpu_custom_call.1} parent=31 // pred_fallthru
          _
        // Predicated region
        $region69: #{tpu_custom_call.1} parent=31 // pred_check
          %p533 = pneg %p319
        $region70: #{tpu_custom_call.1} parent=31 // pred_check_branch
          %535 = sbr.rel (%p533) target = $region72
        $region71: #{tpu_custom_call.1} parent=31 // pred_region
          %p536 = scmp.lt.s32.totalorder %s23, 1
          %s537 = scalar_select %p536, %s23, 1
          %s538 = scalar_lea.vmem %s11, %s537
        $region72: #{tpu_custom_call.1} parent=31 // pred_fallthru
          _
        // Predicated region
        $region73: #{tpu_custom_call.1} parent=31 // pred_check
          %p539 = pneg %p345
        $region74: #{tpu_custom_call.1} parent=31 // pred_check_branch
          %541 = sbr.rel (%p539) target = $region76
        $region75: #{tpu_custom_call.1} parent=31 // pred_region
          %p542 = scmp.lt.s32.totalorder %s23, 1
          %s543 = scalar_select %p542, %s23, 1
          %s544 = scalar_lea.vmem %s12, %s543
        $region76: #{tpu_custom_call.1} parent=31 // pred_fallthru
          _
        // Predicated region
        $region77: #{tpu_custom_call.1} parent=31 // pred_check
          %p545 = pneg %p371
        $region78: #{tpu_custom_call.1} parent=31 // pred_check_branch
          %547 = sbr.rel (%p545) target = $region80
        $region79: #{tpu_custom_call.1} parent=31 // pred_region
          %p548 = scmp.lt.s32.totalorder %s23, 1
          %s549 = scalar_select %p548, %s23, 1
          %s550 = scalar_lea.vmem %s13, %s549
        $region80: #{tpu_custom_call.1} parent=31 // pred_fallthru
          _
      $region32: #{tpu_custom_call.1} parent=5 // pred_fallthru
        _
      %p551 = scmp.le.s32.totalorder 1, %s23
      %p552 = scmp.lt.s32.totalorder %s23, 3
      %p553 = pnand %p551, %p552
      %p554 = pneg %p553
      // Predicated region
      $region81: #{tpu_custom_call.1} parent=5 // pred_check
        _
      $region82: #{tpu_custom_call.1} parent=5 // pred_check_branch
        %556 = sbr.rel (%p553) target = $region84
      $region83: #{tpu_custom_call.1} parent=5 // pred_region
        %s557 = ssub.s32 %s23, 1
        %p558 = pneg %p44
        %p559 = pneg %p41
        %p560 = pneg %p65
        %p561 = pneg %p62
        %p562 = scmp.lt.s32.totalorder %s28, 1
        %s563 = scalar_select %p562, %s28, 1
        %s564 = smul.addr %s563, 4
        %s565 = smul.addr %s564, 4
        %s566 = scalar_lea.vmem %s2, %s565
        %p567 = pneg %p91
        %p568 = pneg %p88
        %p569 = scmp.lt.s32.totalorder %s28, 1
        %s570 = scalar_select %p569, %s28, 1
        %s571 = scalar_lea.vmem %s3, %s570
        %p572 = pneg %p117
        %p573 = pneg %p114
        %p574 = scmp.lt.s32.totalorder %s28, 1
        %s575 = scalar_select %p574, %s28, 1
        %s576 = smul.addr %s575, 4
        %s577 = smul.addr %s576, 4
        %s578 = scalar_lea.vmem %s4, %s577
        %p579 = pneg %p143
        %p580 = pneg %p140
        %p581 = scmp.lt.s32.totalorder %s28, 1
        %s582 = scalar_select %p581, %s28, 1
        %s583 = scalar_lea.vmem %s5, %s582
        %p584 = pneg %p169
        %p585 = pneg %p166
        %p586 = scmp.lt.s32.totalorder %s28, 1
        %s587 = scalar_select %p586, %s28, 1
        %s588 = scalar_lea.vmem %s6, %s587
        %p589 = pneg %p195
        %p590 = pneg %p192
        %p591 = scmp.lt.s32.totalorder %s28, 1
        %s592 = scalar_select %p591, %s28, 1
        %s593 = scalar_lea.vmem %s7, %s592
        %p594 = pneg %p221
        %p595 = pneg %p218
        %p596 = scmp.lt.s32.totalorder %s28, 1
        %s597 = scalar_select %p596, %s28, 1
        %s598 = smul.addr %s597, 4
        %s599 = smul.addr %s598, 4
        %s600 = scalar_lea.vmem %s8, %s599
        %p601 = pneg %p247
        %p602 = pneg %p244
        %p603 = scmp.lt.s32.totalorder %s28, 1
        %s604 = scalar_select %p603, %s28, 1
        %s605 = scalar_lea.vmem %s9, %s604
        %p606 = pneg %p273
        %p607 = pneg %p270
        %p608 = scmp.lt.s32.totalorder %s28, 1
        %s609 = scalar_select %p608, %s28, 1
        %s610 = smul.addr %s609, 16
        %s611 = smul.addr %s610, 4
        %s612 = scalar_lea.vmem %s10, %s611
        %p613 = pneg %p299
        %p614 = pneg %p296
        %p615 = scmp.lt.s32.totalorder %s28, 1
        %s616 = scalar_select %p615, %s28, 1
        %s617 = scalar_lea.vmem %s11, %s616
        %p618 = pneg %p325
        %p619 = pneg %p322
        %p620 = scmp.lt.s32.totalorder %s28, 1
        %s621 = scalar_select %p620, %s28, 1
        %s622 = scalar_lea.vmem %s12, %s621
        %p623 = pneg %p351
        %p624 = pneg %p348
        %p625 = scmp.lt.s32.totalorder %s28, 1
        %s626 = scalar_select %p625, %s28, 1
        %s627 = scalar_lea.vmem %s13, %s626
        %p628 = pneg %p377
        %p629 = pneg %p374
        %p630 = pneg %p398
        %p631 = pneg %p395
        %p632 = pneg %p419
        %p633 = pneg %p416
        %p634 = pneg %p440
        %p635 = pneg %p437
        %p636 = scmp.lt.s32.totalorder %s28, 1
        %s637 = scalar_select %p636, %s28, 1
        %s638 = smul.addr %s637, 4
        %s639 = smul.addr %s638, 4
        %s640 = scalar_lea.vmem %s2, %s639
        %p641 = scmp.lt.s32.totalorder %s28, 1
        %s642 = scalar_select %p641, %s28, 1
        %s643 = scalar_lea.vmem %s3, %s642
        %p644 = scmp.lt.s32.totalorder %s28, 1
        %s645 = scalar_select %p644, %s28, 1
        %s646 = smul.addr %s645, 4
        %s647 = smul.addr %s646, 4
        %s648 = scalar_lea.vmem %s4, %s647
        %p649 = scmp.lt.s32.totalorder %s28, 1
        %s650 = scalar_select %p649, %s28, 1
        %s651 = scalar_lea.vmem %s5, %s650
        %p652 = scmp.lt.s32.totalorder %s28, 1
        %s653 = scalar_select %p652, %s28, 1
        %s654 = scalar_lea.vmem %s6, %s653
        %p655 = scmp.lt.s32.totalorder %s28, 1
        %s656 = scalar_select %p655, %s28, 1
        %s657 = scalar_lea.vmem %s7, %s656
        %p658 = scmp.lt.s32.totalorder %s28, 1
        %s659 = scalar_select %p658, %s28, 1
        %s660 = smul.addr %s659, 4
        %s661 = smul.addr %s660, 4
        %s662 = scalar_lea.vmem %s8, %s661
        %p663 = scmp.lt.s32.totalorder %s28, 1
        %s664 = scalar_select %p663, %s28, 1
        %s665 = scalar_lea.vmem %s9, %s664
        %p666 = scmp.lt.s32.totalorder %s28, 1
        %s667 = scalar_select %p666, %s28, 1
        %s668 = smul.addr %s667, 16
        %s669 = smul.addr %s668, 4
        %s670 = scalar_lea.vmem %s10, %s669
        %p671 = scmp.lt.s32.totalorder %s28, 1
        %s672 = scalar_select %p671, %s28, 1
        %s673 = scalar_lea.vmem %s11, %s672
        %p674 = scmp.lt.s32.totalorder %s28, 1
        %s675 = scalar_select %p674, %s28, 1
        %s676 = scalar_lea.vmem %s12, %s675
        %p677 = scmp.lt.s32.totalorder %s28, 1
        %s678 = scalar_select %p677, %s28, 1
        %s679 = scalar_lea.vmem %s13, %s678
        %p681 = scmp.eq.s32.totalorder %s28, 0
        // Predicated region
        $region85: #{tpu_custom_call.1} parent=83 // pred_check
          %p682 = pneg %p681
        $region86: #{tpu_custom_call.1} parent=83 // pred_check_branch
          %684 = sbr.rel (%p682) target = $region88
        $region87: #{tpu_custom_call.1} parent=83 // pred_region
          %v685 = vld [vmem:[%s0] sm:$0xf]
          %v686 = vld [vmem:[%s0 + $0x4] sm:$0xf]
          %v687 = vunpack.c.l.bf16 %v685
          %v688 = vunpack.c.l.bf16 %v686
          %vm689 = vcmask 261120
          %690 = vst.msk [vmem:[#allocation2] sm:$0xff] %vm689, %v687
          %691 = vst.msk [vmem:[#allocation2 + $0x8] sm:$0xff] %vm689, %v688
        $region88: #{tpu_custom_call.1} parent=83 // pred_fallthru
          _
        %v692 = vld [vmem:[#allocation2] sm:$0xff]
        %v693 = vld [vmem:[#allocation2 + $0x8] sm:$0xff]
        %v694 = vld [vmem:[%s654] sm:$0x1]
        %v695 = vld [vmem:[%s657] sm:$0x1]
        %vm696 = vcmask 261120
        %v697 = vsel %vm696, %v692, 0.0
        %698 = vadd.xlane.f32.xlu0 %v697
        %v699 = vpop.xlane.xlu0 %698
        %v700 = vsel %vm696, %v693, 0.0
        %701 = vadd.xlane.f32.xlu0 %v700
        %v702 = vpop.xlane.xlu0 %701
        %v703 = vrcp.pop 32.0
        %v704 = vmul.f32 %v699, %v703
        %v705 = vmul.f32 %v702, %v703
        %v706 = vsub.f32 %v692, %v704
        %v707 = vsub.f32 %v693, %v705
        %v708 = vmul.f32 %v706, %v706
        %v709 = vmul.f32 %v707, %v707
        %v710 = vsel %vm696, %v708, 0.0
        %711 = vadd.xlane.f32.xlu0 %v710
        %v712 = vpop.xlane.xlu0 %711
        %v713 = vsel %vm696, %v709, 0.0
        %714 = vadd.xlane.f32.xlu0 %v713
        %v715 = vpop.xlane.xlu0 %714
        %v716 = vrcp.pop 31.0
        %v717 = vmul.f32 %v712, %v716
        %v718 = vmul.f32 %v715, %v716
        %v720 = vlaneseq
        %v721 = vshrl.u32 %v720, 7
        %v722 = vsub.s32 0, %v721
        %v723 = vrot.slane %v694, %v722
        %v725 = vmul.f32 %v723, %v706
        %v726 = vmul.f32 %v723, %v707
        %v727 = vrsqrt.pop %v717
        %v728 = vmul.f32 %v717, %v727
        %vm729 = vcmp.eq.f32.partialorder %v717, inf
        %v730 = vsel %vm729, %v717, %v728
        %vm731 = vcmp.eq.f32.partialorder %v717, 0.0
        %v732 = vand.u32 %v717, 2147483648
        %v733 = vsel %vm731, %v732, %v730
        %v734 = vrsqrt.pop %v718
        %v735 = vmul.f32 %v718, %v734
        %vm736 = vcmp.eq.f32.partialorder %v718, inf
        %v737 = vsel %vm736, %v718, %v735
        %vm738 = vcmp.eq.f32.partialorder %v718, 0.0
        %v739 = vand.u32 %v718, 2147483648
        %v740 = vsel %vm738, %v739, %v737
        %v741 = vadd.f32 %v733, 1e-06
        %v742 = vadd.f32 %v740, 1e-06
        %v743 = vrcp.pop %v741
        %v744 = vmul.f32 %v725, %v743
        %v745 = vrcp.pop %v742
        %v746 = vmul.f32 %v726, %v745
        %v748 = vlaneseq
        %v749 = vshrl.u32 %v748, 7
        %v750 = vsub.s32 0, %v749
        %v751 = vrot.slane %v695, %v750
        %v753 = vadd.f32 %v744, %v751
        %v754 = vadd.f32 %v746, %v751
        %v755 = vpack.c.bf16 %v754, %v753
        %v756 = vld [vmem:[%s640] sm:$0xf]
        %v757 = vld [vmem:[%s640 + $0x4] sm:$0xf]
        %v758 = vld [vmem:[%s640 + $0x8] sm:$0xf]
        %v759 = vld [vmem:[%s640 + $0xc] sm:$0xf]
        %v760 = vld [vmem:[%s643] sm:$0x1]
        %v762 = vlaneseq
        %v763 = vshrl.u32 %v762, 7
        %v764 = vsub.s32 0, %v763
        %v765 = vrot.slane %v760, %v764
        %v771 = vunpack.c.l.b16 %v756
        %v772 = vunpack.c.l.b16 %v757
        %v773 = vunpack.c.l.b16 %v758
        %v774 = vunpack.c.l.b16 %v759
        %v775 = vpack.c.b16 %v772, %v771
        %v776 = vpack.c.b16 %v774, %v773
        %v780 = vsel %vm696, %v755, 0
        %782 = vmatprep.subr.bf16.mxu0 0
        %783 = vmatpush1.bf16.msra.mxu0 %v775
        %784 = vmatprep.subr.bf16.mxu0 0
        %785 = vmatpush1.bf16.msra.mxu0 %v776
        %786 = vmatprep.subr.bf16.mxu0 0
        %787 = vmatpush1.bf16.msra.mxu0 0
        %788 = vmatprep.subr.bf16.mxu0 0
        %789 = vmatpush1.bf16.msra.mxu0 0
        %790 = vmatprep.subr.bf16.mxu0 0
        %791 = vmatpush1.bf16.msra.mxu0 0
        %792 = vmatprep.subr.bf16.mxu0 0
        %793 = vmatpush1.bf16.msra.mxu0 0
        %794 = vmatprep.subr.bf16.mxu0 0
        %795 = vmatpush1.bf16.msra.mxu0 0
        %796 = vmatprep.subr.bf16.mxu0 0
        %797 = vmatpush1.bf16.msra.mxu0 0
        %798 = vmatprep.subr.bf16.mxu0 0
        %799 = vmatpush1.bf16.msra.mxu0 0
        %800 = vmatprep.subr.bf16.mxu0 0
        %801 = vmatpush1.bf16.msra.mxu0 0
        %802 = vmatprep.subr.bf16.mxu0 0
        %803 = vmatpush1.bf16.msra.mxu0 0
        %804 = vmatprep.subr.bf16.mxu0 0
        %805 = vmatpush1.bf16.msra.mxu0 0
        %806 = vmatprep.subr.bf16.mxu0 0
        %807 = vmatpush1.bf16.msra.mxu0 0
        %808 = vmatprep.subr.bf16.mxu0 0
        %809 = vmatpush1.bf16.msra.mxu0 0
        %810 = vmatprep.subr.bf16.mxu0 0
        %811 = vmatpush1.bf16.msra.mxu0 0
        %812 = vmatprep.subr.bf16.mxu0 0
        %813 = vmatpush1.bf16.msra.mxu0 0
        %814 = vmatprep.mubr.bf16.mxu0 0
        %815 = vmatmul.mubr.bf16.gmra.mrb[0].mxu0 %v780
        %v816 = vpop.f32.mrb[0].mxu0
        %v817 = vadd.f32 %v765, %v816
        %v818 = vpop.f32.mrb[0].mxu0
        %v819 = vpop.f32.mrb[0].mxu0
        %v820 = vadd.f32 %v765, %v819
        %v821 = vpop.f32.mrb[0].mxu0
        %822 = vdwg.mxu0
        %v823 = vld [vmem:[%s1] sm:$0xff]
        %v824 = vld [vmem:[%s1 + $0x8] sm:$0xff]
        %826 = vrot.lane.b32.xlu0 %v817, 96
        %v827 = vpop.permute.xlu0 %826
        %vm828 = vcmask 64512
        %v829 = vsel %vm828, %v817, 0
        %v831 = vsel %vm828, %v827, 0
        %833 = vmatprep.subr.mxu0 0.0
        %834 = vmatpush1.xpose.msra.mxu0 %v831
        %835 = vmatprep.subr.mxu0 0.0
        %836 = vmatpush1.xpose.msra.mxu0 0.0
        %837 = vmatprep.subr.mxu0 0.0
        %838 = vmatpush1.xpose.msra.mxu0 0.0
        %839 = vmatprep.subr.mxu0 0.0
        %840 = vmatpush1.xpose.msra.mxu0 0.0
        %841 = vmatprep.subr.mxu0 0.0
        %842 = vmatpush1.xpose.msra.mxu0 0.0
        %843 = vmatprep.subr.mxu0 0.0
        %844 = vmatpush1.xpose.msra.mxu0 0.0
        %845 = vmatprep.subr.mxu0 0.0
        %846 = vmatpush1.xpose.msra.mxu0 0.0
        %847 = vmatprep.subr.mxu0 0.0
        %848 = vmatpush1.xpose.msra.mxu0 0.0
        %849 = vmatprep.subr.mxu0 0.0
        %850 = vmatpush1.xpose.msra.mxu0 0.0
        %851 = vmatprep.subr.mxu0 0.0
        %852 = vmatpush1.xpose.msra.mxu0 0.0
        %853 = vmatprep.subr.mxu0 0.0
        %854 = vmatpush1.xpose.msra.mxu0 0.0
        %855 = vmatprep.subr.mxu0 0.0
        %856 = vmatpush1.xpose.msra.mxu0 0.0
        %857 = vmatprep.subr.mxu0 0.0
        %858 = vmatpush1.xpose.msra.mxu0 0.0
        %859 = vmatprep.subr.mxu0 0.0
        %860 = vmatpush1.xpose.msra.mxu0 0.0
        %861 = vmatprep.subr.mxu0 0.0
        %862 = vmatpush1.xpose.msra.mxu0 0.0
        %863 = vmatprep.subr.mxu0 0.0
        %864 = vmatpush1.xpose.msra.mxu0 0.0
        %865 = vmatprep.subr.mxu0 0.0
        %866 = vmatpush1.xpose.msra.mxu0 0.0
        %867 = vmatprep.subr.mxu0 0.0
        %868 = vmatpush1.xpose.msra.mxu0 0.0
        %869 = vmatprep.subr.mxu0 0.0
        %870 = vmatpush1.xpose.msra.mxu0 0.0
        %871 = vmatprep.subr.mxu0 0.0
        %872 = vmatpush1.xpose.msra.mxu0 0.0
        %873 = vmatprep.subr.mxu0 0.0
        %874 = vmatpush1.xpose.msra.mxu0 0.0
        %875 = vmatprep.subr.mxu0 0.0
        %876 = vmatpush1.xpose.msra.mxu0 0.0
        %877 = vmatprep.subr.mxu0 0.0
        %878 = vmatpush1.xpose.msra.mxu0 0.0
        %879 = vmatprep.subr.mxu0 0.0
        %880 = vmatpush1.xpose.msra.mxu0 0.0
        %881 = vmatprep.subr.mxu0 0.0
        %882 = vmatpush1.xpose.msra.mxu0 0.0
        %883 = vmatprep.subr.mxu0 0.0
        %884 = vmatpush1.xpose.msra.mxu0 0.0
        %885 = vmatprep.subr.mxu0 0.0
        %886 = vmatpush1.xpose.msra.mxu0 0.0
        %887 = vmatprep.subr.mxu0 0.0
        %888 = vmatpush1.xpose.msra.mxu0 0.0
        %889 = vmatprep.subr.mxu0 0.0
        %890 = vmatpush1.xpose.msra.mxu0 0.0
        %891 = vmatprep.subr.mxu0 0.0
        %892 = vmatpush1.xpose.msra.mxu0 0.0
        %893 = vmatprep.subr.mxu0 0.0
        %894 = vmatpush1.xpose.msra.mxu0 0.0
        %895 = vmatprep.subr.mxu0 0.0
        %896 = vmatpush1.xpose.msra.mxu0 0.0
        %897 = vmatprep.mubr.f32.mxu0 0.0
        %898 = vmatmul.mubr.f32.gmra.mrb[0].mxu0 %v829
        %v899 = vpop.f32.mrb[0].mxu0
        %v900 = vadd.f32 0.0, %v899
        %v901 = vpop.f32.mrb[0].mxu0
        %902 = vdwg.mxu0
        %904 = vrot.lane.b32.xlu0 %v820, 96
        %v905 = vpop.permute.xlu0 %904
        %v906 = vsel %vm828, %v820, 0
        %v908 = vsel %vm828, %v905, 0
        %910 = vmatprep.subr.mxu0 0.0
        %911 = vmatpush1.xpose.msra.mxu0 %v908
        %912 = vmatprep.subr.mxu0 0.0
        %913 = vmatpush1.xpose.msra.mxu0 0.0
        %914 = vmatprep.subr.mxu0 0.0
        %915 = vmatpush1.xpose.msra.mxu0 0.0
        %916 = vmatprep.subr.mxu0 0.0
        %917 = vmatpush1.xpose.msra.mxu0 0.0
        %918 = vmatprep.subr.mxu0 0.0
        %919 = vmatpush1.xpose.msra.mxu0 0.0
        %920 = vmatprep.subr.mxu0 0.0
        %921 = vmatpush1.xpose.msra.mxu0 0.0
        %922 = vmatprep.subr.mxu0 0.0
        %923 = vmatpush1.xpose.msra.mxu0 0.0
        %924 = vmatprep.subr.mxu0 0.0
        %925 = vmatpush1.xpose.msra.mxu0 0.0
        %926 = vmatprep.subr.mxu0 0.0
        %927 = vmatpush1.xpose.msra.mxu0 0.0
        %928 = vmatprep.subr.mxu0 0.0
        %929 = vmatpush1.xpose.msra.mxu0 0.0
        %930 = vmatprep.subr.mxu0 0.0
        %931 = vmatpush1.xpose.msra.mxu0 0.0
        %932 = vmatprep.subr.mxu0 0.0
        %933 = vmatpush1.xpose.msra.mxu0 0.0
        %934 = vmatprep.subr.mxu0 0.0
        %935 = vmatpush1.xpose.msra.mxu0 0.0
        %936 = vmatprep.subr.mxu0 0.0
        %937 = vmatpush1.xpose.msra.mxu0 0.0
        %938 = vmatprep.subr.mxu0 0.0
        %939 = vmatpush1.xpose.msra.mxu0 0.0
        %940 = vmatprep.subr.mxu0 0.0
        %941 = vmatpush1.xpose.msra.mxu0 0.0
        %942 = vmatprep.subr.mxu0 0.0
        %943 = vmatpush1.xpose.msra.mxu0 0.0
        %944 = vmatprep.subr.mxu0 0.0
        %945 = vmatpush1.xpose.msra.mxu0 0.0
        %946 = vmatprep.subr.mxu0 0.0
        %947 = vmatpush1.xpose.msra.mxu0 0.0
        %948 = vmatprep.subr.mxu0 0.0
        %949 = vmatpush1.xpose.msra.mxu0 0.0
        %950 = vmatprep.subr.mxu0 0.0
        %951 = vmatpush1.xpose.msra.mxu0 0.0
        %952 = vmatprep.subr.mxu0 0.0
        %953 = vmatpush1.xpose.msra.mxu0 0.0
        %954 = vmatprep.subr.mxu0 0.0
        %955 = vmatpush1.xpose.msra.mxu0 0.0
        %956 = vmatprep.subr.mxu0 0.0
        %957 = vmatpush1.xpose.msra.mxu0 0.0
        %958 = vmatprep.subr.mxu0 0.0
        %959 = vmatpush1.xpose.msra.mxu0 0.0
        %960 = vmatprep.subr.mxu0 0.0
        %961 = vmatpush1.xpose.msra.mxu0 0.0
        %962 = vmatprep.subr.mxu0 0.0
        %963 = vmatpush1.xpose.msra.mxu0 0.0
        %964 = vmatprep.subr.mxu0 0.0
        %965 = vmatpush1.xpose.msra.mxu0 0.0
        %966 = vmatprep.subr.mxu0 0.0
        %967 = vmatpush1.xpose.msra.mxu0 0.0
        %968 = vmatprep.subr.mxu0 0.0
        %969 = vmatpush1.xpose.msra.mxu0 0.0
        %970 = vmatprep.subr.mxu0 0.0
        %971 = vmatpush1.xpose.msra.mxu0 0.0
        %972 = vmatprep.subr.mxu0 0.0
        %973 = vmatpush1.xpose.msra.mxu0 0.0
        %974 = vmatprep.mubr.f32.mxu0 0.0
        %975 = vmatmul.mubr.f32.gmra.mrb[0].mxu0 %v906
        %v976 = vpop.f32.mrb[0].mxu0
        %v977 = vadd.f32 0.0, %v976
        %v978 = vpop.f32.mrb[0].mxu0
        %979 = vdwg.mxu0
        %v980 = vmul.f32 %v900, 0.35355338
        %v981 = vmul.f32 %v977, 0.35355338
        %v982 = vadd.f32 %v980, %v823
        %v983 = vadd.f32 %v981, %v824
        %v984 = vsel %vm828, %v982, -inf
        %985 = vmax.xlane.f32.xlu0 %v984
        %v986 = vpop.xlane.xlu0 %985
        %v987 = vsel %vm828, %v983, -inf
        %988 = vmax.xlane.f32.xlu0 %v987
        %v989 = vpop.xlane.xlu0 %988
        %v990 = vsub.f32 %v982, %v986
        %v991 = vsub.f32 %v983, %v989
        %v992 = vmul.f32 %v990, 1.442695
        %v993 = vpow.pop %v992
        %v994 = vmul.f32 %v991, 1.442695
        %v995 = vpow.pop %v994
        %v996 = vsel %vm828, %v993, 0.0
        %997 = vadd.xlane.f32.xlu0 %v996
        %v998 = vpop.xlane.xlu0 %997
        %v999 = vsel %vm828, %v995, 0.0
        %1000 = vadd.xlane.f32.xlu0 %v999
        %v1001 = vpop.xlane.xlu0 %1000
        %v1002 = vrcp.pop %v998
        %v1003 = vrcp.pop %v1001
        %v1004 = vmul.f32 %v993, %v1002
        %v1005 = vmul.f32 %v995, %v1003
        %1006 = vrot.lane.b32.xlu0 %v817, 64
        %v1007 = vpop.permute.xlu0 %1006
        %v1010 = vsel %vm828, %v1004, 0
        %1012 = vmatprep.subr.mxu0 0.0
        %1013 = vmatpush1.msra.mxu0 %v1007
        %1014 = vmatprep.subr.mxu0 0.0
        %1015 = vmatpush1.msra.mxu0 0.0
        %1016 = vmatprep.subr.mxu0 0.0
        %1017 = vmatpush1.msra.mxu0 0.0
        %1018 = vmatprep.subr.mxu0 0.0
        %1019 = vmatpush1.msra.mxu0 0.0
        %1020 = vmatprep.subr.mxu0 0.0
        %1021 = vmatpush1.msra.mxu0 0.0
        %1022 = vmatprep.subr.mxu0 0.0
        %1023 = vmatpush1.msra.mxu0 0.0
        %1024 = vmatprep.subr.mxu0 0.0
        %1025 = vmatpush1.msra.mxu0 0.0
        %1026 = vmatprep.subr.mxu0 0.0
        %1027 = vmatpush1.msra.mxu0 0.0
        %1028 = vmatprep.subr.mxu0 0.0
        %1029 = vmatpush1.msra.mxu0 0.0
        %1030 = vmatprep.subr.mxu0 0.0
        %1031 = vmatpush1.msra.mxu0 0.0
        %1032 = vmatprep.subr.mxu0 0.0
        %1033 = vmatpush1.msra.mxu0 0.0
        %1034 = vmatprep.subr.mxu0 0.0
        %1035 = vmatpush1.msra.mxu0 0.0
        %1036 = vmatprep.subr.mxu0 0.0
        %1037 = vmatpush1.msra.mxu0 0.0
        %1038 = vmatprep.subr.mxu0 0.0
        %1039 = vmatpush1.msra.mxu0 0.0
        %1040 = vmatprep.subr.mxu0 0.0
        %1041 = vmatpush1.msra.mxu0 0.0
        %1042 = vmatprep.subr.mxu0 0.0
        %1043 = vmatpush1.msra.mxu0 0.0
        %1044 = vmatprep.subr.mxu0 0.0
        %1045 = vmatpush1.msra.mxu0 0.0
        %1046 = vmatprep.subr.mxu0 0.0
        %1047 = vmatpush1.msra.mxu0 0.0
        %1048 = vmatprep.subr.mxu0 0.0
        %1049 = vmatpush1.msra.mxu0 0.0
        %1050 = vmatprep.subr.mxu0 0.0
        %1051 = vmatpush1.msra.mxu0 0.0
        %1052 = vmatprep.subr.mxu0 0.0
        %1053 = vmatpush1.msra.mxu0 0.0
        %1054 = vmatprep.subr.mxu0 0.0
        %1055 = vmatpush1.msra.mxu0 0.0
        %1056 = vmatprep.subr.mxu0 0.0
        %1057 = vmatpush1.msra.mxu0 0.0
        %1058 = vmatprep.subr.mxu0 0.0
        %1059 = vmatpush1.msra.mxu0 0.0
        %1060 = vmatprep.subr.mxu0 0.0
        %1061 = vmatpush1.msra.mxu0 0.0
        %1062 = vmatprep.subr.mxu0 0.0
        %1063 = vmatpush1.msra.mxu0 0.0
        %1064 = vmatprep.subr.mxu0 0.0
        %1065 = vmatpush1.msra.mxu0 0.0
        %1066 = vmatprep.subr.mxu0 0.0
        %1067 = vmatpush1.msra.mxu0 0.0
        %1068 = vmatprep.subr.mxu0 0.0
        %1069 = vmatpush1.msra.mxu0 0.0
        %1070 = vmatprep.subr.mxu0 0.0
        %1071 = vmatpush1.msra.mxu0 0.0
        %1072 = vmatprep.subr.mxu0 0.0
        %1073 = vmatpush1.msra.mxu0 0.0
        %1074 = vmatprep.subr.mxu0 0.0
        %1075 = vmatpush1.msra.mxu0 0.0
        %1076 = vmatprep.mubr.f32.mxu0 0.0
        %1077 = vmatmul.mubr.f32.gmra.mrb[0].mxu0 %v1010
        %v1078 = vpop.f32.mrb[0].mxu0
        %v1079 = vadd.f32 0.0, %v1078
        %v1080 = vpop.f32.mrb[0].mxu0
        %1081 = vdwg.mxu0
        %1082 = vrot.lane.b32.xlu0 %v820, 64
        %v1083 = vpop.permute.xlu0 %1082
        %v1086 = vsel %vm828, %v1005, 0
        %1088 = vmatprep.subr.mxu0 0.0
        %1089 = vmatpush1.msra.mxu0 %v1083
        %1090 = vmatprep.subr.mxu0 0.0
        %1091 = vmatpush1.msra.mxu0 0.0
        %1092 = vmatprep.subr.mxu0 0.0
        %1093 = vmatpush1.msra.mxu0 0.0
        %1094 = vmatprep.subr.mxu0 0.0
        %1095 = vmatpush1.msra.mxu0 0.0
        %1096 = vmatprep.subr.mxu0 0.0
        %1097 = vmatpush1.msra.mxu0 0.0
        %1098 = vmatprep.subr.mxu0 0.0
        %1099 = vmatpush1.msra.mxu0 0.0
        %1100 = vmatprep.subr.mxu0 0.0
        %1101 = vmatpush1.msra.mxu0 0.0
        %1102 = vmatprep.subr.mxu0 0.0
        %1103 = vmatpush1.msra.mxu0 0.0
        %1104 = vmatprep.subr.mxu0 0.0
        %1105 = vmatpush1.msra.mxu0 0.0
        %1106 = vmatprep.subr.mxu0 0.0
        %1107 = vmatpush1.msra.mxu0 0.0
        %1108 = vmatprep.subr.mxu0 0.0
        %1109 = vmatpush1.msra.mxu0 0.0
        %1110 = vmatprep.subr.mxu0 0.0
        %1111 = vmatpush1.msra.mxu0 0.0
        %1112 = vmatprep.subr.mxu0 0.0
        %1113 = vmatpush1.msra.mxu0 0.0
        %1114 = vmatprep.subr.mxu0 0.0
        %1115 = vmatpush1.msra.mxu0 0.0
        %1116 = vmatprep.subr.mxu0 0.0
        %1117 = vmatpush1.msra.mxu0 0.0
        %1118 = vmatprep.subr.mxu0 0.0
        %1119 = vmatpush1.msra.mxu0 0.0
        %1120 = vmatprep.subr.mxu0 0.0
        %1121 = vmatpush1.msra.mxu0 0.0
        %1122 = vmatprep.subr.mxu0 0.0
        %1123 = vmatpush1.msra.mxu0 0.0
        %1124 = vmatprep.subr.mxu0 0.0
        %1125 = vmatpush1.msra.mxu0 0.0
        %1126 = vmatprep.subr.mxu0 0.0
        %1127 = vmatpush1.msra.mxu0 0.0
        %1128 = vmatprep.subr.mxu0 0.0
        %1129 = vmatpush1.msra.mxu0 0.0
        %1130 = vmatprep.subr.mxu0 0.0
        %1131 = vmatpush1.msra.mxu0 0.0
        %1132 = vmatprep.subr.mxu0 0.0
        %1133 = vmatpush1.msra.mxu0 0.0
        %1134 = vmatprep.subr.mxu0 0.0
        %1135 = vmatpush1.msra.mxu0 0.0
        %1136 = vmatprep.subr.mxu0 0.0
        %1137 = vmatpush1.msra.mxu0 0.0
        %1138 = vmatprep.subr.mxu0 0.0
        %1139 = vmatpush1.msra.mxu0 0.0
        %1140 = vmatprep.subr.mxu0 0.0
        %1141 = vmatpush1.msra.mxu0 0.0
        %1142 = vmatprep.subr.mxu0 0.0
        %1143 = vmatpush1.msra.mxu0 0.0
        %1144 = vmatprep.subr.mxu0 0.0
        %1145 = vmatpush1.msra.mxu0 0.0
        %1146 = vmatprep.subr.mxu0 0.0
        %1147 = vmatpush1.msra.mxu0 0.0
        %1148 = vmatprep.subr.mxu0 0.0
        %1149 = vmatpush1.msra.mxu0 0.0
        %1150 = vmatprep.subr.mxu0 0.0
        %1151 = vmatpush1.msra.mxu0 0.0
        %1152 = vmatprep.mubr.f32.mxu0 0.0
        %1153 = vmatmul.mubr.f32.gmra.mrb[0].mxu0 %v1086
        %v1154 = vpop.f32.mrb[0].mxu0
        %v1155 = vadd.f32 0.0, %v1154
        %v1156 = vpop.f32.mrb[0].mxu0
        %1157 = vdwg.mxu0
        %1158 = vrot.lane.b32.xlu0 %v817, 120
        %v1159 = vpop.permute.xlu0 %1158
        %1160 = vrot.lane.b32.xlu0 %v817, 88
        %v1161 = vpop.permute.xlu0 %1160
        %v1162 = vsel %vm828, %v1159, 0
        %v1164 = vsel %vm828, %v1161, 0
        %1166 = vmatprep.subr.mxu0 0.0
        %1167 = vmatpush1.xpose.msra.mxu0 %v1164
        %1168 = vmatprep.subr.mxu0 0.0
        %1169 = vmatpush1.xpose.msra.mxu0 0.0
        %1170 = vmatprep.subr.mxu0 0.0
        %1171 = vmatpush1.xpose.msra.mxu0 0.0
        %1172 = vmatprep.subr.mxu0 0.0
        %1173 = vmatpush1.xpose.msra.mxu0 0.0
        %1174 = vmatprep.subr.mxu0 0.0
        %1175 = vmatpush1.xpose.msra.mxu0 0.0
        %1176 = vmatprep.subr.mxu0 0.0
        %1177 = vmatpush1.xpose.msra.mxu0 0.0
        %1178 = vmatprep.subr.mxu0 0.0
        %1179 = vmatpush1.xpose.msra.mxu0 0.0
        %1180 = vmatprep.subr.mxu0 0.0
        %1181 = vmatpush1.xpose.msra.mxu0 0.0
        %1182 = vmatprep.subr.mxu0 0.0
        %1183 = vmatpush1.xpose.msra.mxu0 0.0
        %1184 = vmatprep.subr.mxu0 0.0
        %1185 = vmatpush1.xpose.msra.mxu0 0.0
        %1186 = vmatprep.subr.mxu0 0.0
        %1187 = vmatpush1.xpose.msra.mxu0 0.0
        %1188 = vmatprep.subr.mxu0 0.0
        %1189 = vmatpush1.xpose.msra.mxu0 0.0
        %1190 = vmatprep.subr.mxu0 0.0
        %1191 = vmatpush1.xpose.msra.mxu0 0.0
        %1192 = vmatprep.subr.mxu0 0.0
        %1193 = vmatpush1.xpose.msra.mxu0 0.0
        %1194 = vmatprep.subr.mxu0 0.0
        %1195 = vmatpush1.xpose.msra.mxu0 0.0
        %1196 = vmatprep.subr.mxu0 0.0
        %1197 = vmatpush1.xpose.msra.mxu0 0.0
        %1198 = vmatprep.subr.mxu0 0.0
        %1199 = vmatpush1.xpose.msra.mxu0 0.0
        %1200 = vmatprep.subr.mxu0 0.0
        %1201 = vmatpush1.xpose.msra.mxu0 0.0
        %1202 = vmatprep.subr.mxu0 0.0
        %1203 = vmatpush1.xpose.msra.mxu0 0.0
        %1204 = vmatprep.subr.mxu0 0.0
        %1205 = vmatpush1.xpose.msra.mxu0 0.0
        %1206 = vmatprep.subr.mxu0 0.0
        %1207 = vmatpush1.xpose.msra.mxu0 0.0
        %1208 = vmatprep.subr.mxu0 0.0
        %1209 = vmatpush1.xpose.msra.mxu0 0.0
        %1210 = vmatprep.subr.mxu0 0.0
        %1211 = vmatpush1.xpose.msra.mxu0 0.0
        %1212 = vmatprep.subr.mxu0 0.0
        %1213 = vmatpush1.xpose.msra.mxu0 0.0
        %1214 = vmatprep.subr.mxu0 0.0
        %1215 = vmatpush1.xpose.msra.mxu0 0.0
        %1216 = vmatprep.subr.mxu0 0.0
        %1217 = vmatpush1.xpose.msra.mxu0 0.0
        %1218 = vmatprep.subr.mxu0 0.0
        %1219 = vmatpush1.xpose.msra.mxu0 0.0
        %1220 = vmatprep.subr.mxu0 0.0
        %1221 = vmatpush1.xpose.msra.mxu0 0.0
        %1222 = vmatprep.subr.mxu0 0.0
        %1223 = vmatpush1.xpose.msra.mxu0 0.0
        %1224 = vmatprep.subr.mxu0 0.0
        %1225 = vmatpush1.xpose.msra.mxu0 0.0
        %1226 = vmatprep.subr.mxu0 0.0
        %1227 = vmatpush1.xpose.msra.mxu0 0.0
        %1228 = vmatprep.subr.mxu0 0.0
        %1229 = vmatpush1.xpose.msra.mxu0 0.0
        %1230 = vmatprep.mubr.f32.mxu0 0.0
        %1231 = vmatmul.mubr.f32.gmra.mrb[0].mxu0 %v1162
        %v1232 = vpop.f32.mrb[0].mxu0
        %v1233 = vadd.f32 0.0, %v1232
        %v1234 = vpop.f32.mrb[0].mxu0
        %1235 = vdwg.mxu0
        %1236 = vrot.lane.b32.xlu0 %v820, 120
        %v1237 = vpop.permute.xlu0 %1236
        %1238 = vrot.lane.b32.xlu0 %v820, 88
        %v1239 = vpop.permute.xlu0 %1238
        %v1240 = vsel %vm828, %v1237, 0
        %v1242 = vsel %vm828, %v1239, 0
        %1244 = vmatprep.subr.mxu0 0.0
        %1245 = vmatpush1.xpose.msra.mxu0 %v1242
        %1246 = vmatprep.subr.mxu0 0.0
        %1247 = vmatpush1.xpose.msra.mxu0 0.0
        %1248 = vmatprep.subr.mxu0 0.0
        %1249 = vmatpush1.xpose.msra.mxu0 0.0
        %1250 = vmatprep.subr.mxu0 0.0
        %1251 = vmatpush1.xpose.msra.mxu0 0.0
        %1252 = vmatprep.subr.mxu0 0.0
        %1253 = vmatpush1.xpose.msra.mxu0 0.0
        %1254 = vmatprep.subr.mxu0 0.0
        %1255 = vmatpush1.xpose.msra.mxu0 0.0
        %1256 = vmatprep.subr.mxu0 0.0
        %1257 = vmatpush1.xpose.msra.mxu0 0.0
        %1258 = vmatprep.subr.mxu0 0.0
        %1259 = vmatpush1.xpose.msra.mxu0 0.0
        %1260 = vmatprep.subr.mxu0 0.0
        %1261 = vmatpush1.xpose.msra.mxu0 0.0
        %1262 = vmatprep.subr.mxu0 0.0
        %1263 = vmatpush1.xpose.msra.mxu0 0.0
        %1264 = vmatprep.subr.mxu0 0.0
        %1265 = vmatpush1.xpose.msra.mxu0 0.0
        %1266 = vmatprep.subr.mxu0 0.0
        %1267 = vmatpush1.xpose.msra.mxu0 0.0
        %1268 = vmatprep.subr.mxu0 0.0
        %1269 = vmatpush1.xpose.msra.mxu0 0.0
        %1270 = vmatprep.subr.mxu0 0.0
        %1271 = vmatpush1.xpose.msra.mxu0 0.0
        %1272 = vmatprep.subr.mxu0 0.0
        %1273 = vmatpush1.xpose.msra.mxu0 0.0
        %1274 = vmatprep.subr.mxu0 0.0
        %1275 = vmatpush1.xpose.msra.mxu0 0.0
        %1276 = vmatprep.subr.mxu0 0.0
        %1277 = vmatpush1.xpose.msra.mxu0 0.0
        %1278 = vmatprep.subr.mxu0 0.0
        %1279 = vmatpush1.xpose.msra.mxu0 0.0
        %1280 = vmatprep.subr.mxu0 0.0
        %1281 = vmatpush1.xpose.msra.mxu0 0.0
        %1282 = vmatprep.subr.mxu0 0.0
        %1283 = vmatpush1.xpose.msra.mxu0 0.0
        %1284 = vmatprep.subr.mxu0 0.0
        %1285 = vmatpush1.xpose.msra.mxu0 0.0
        %1286 = vmatprep.subr.mxu0 0.0
        %1287 = vmatpush1.xpose.msra.mxu0 0.0
        %1288 = vmatprep.subr.mxu0 0.0
        %1289 = vmatpush1.xpose.msra.mxu0 0.0
        %1290 = vmatprep.subr.mxu0 0.0
        %1291 = vmatpush1.xpose.msra.mxu0 0.0
        %1292 = vmatprep.subr.mxu0 0.0
        %1293 = vmatpush1.xpose.msra.mxu0 0.0
        %1294 = vmatprep.subr.mxu0 0.0
        %1295 = vmatpush1.xpose.msra.mxu0 0.0
        %1296 = vmatprep.subr.mxu0 0.0
        %1297 = vmatpush1.xpose.msra.mxu0 0.0
        %1298 = vmatprep.subr.mxu0 0.0
        %1299 = vmatpush1.xpose.msra.mxu0 0.0
        %1300 = vmatprep.subr.mxu0 0.0
        %1301 = vmatpush1.xpose.msra.mxu0 0.0
        %1302 = vmatprep.subr.mxu0 0.0
        %1303 = vmatpush1.xpose.msra.mxu0 0.0
        %1304 = vmatprep.subr.mxu0 0.0
        %1305 = vmatpush1.xpose.msra.mxu0 0.0
        %1306 = vmatprep.subr.mxu0 0.0
        %1307 = vmatpush1.xpose.msra.mxu0 0.0
        %1308 = vmatprep.mubr.f32.mxu0 0.0
        %1309 = vmatmul.mubr.f32.gmra.mrb[0].mxu0 %v1240
        %v1310 = vpop.f32.mrb[0].mxu0
        %v1311 = vadd.f32 0.0, %v1310
        %v1312 = vpop.f32.mrb[0].mxu0
        %1313 = vdwg.mxu0
        %v1314 = vmul.f32 %v1233, 0.35355338
        %v1315 = vmul.f32 %v1311, 0.35355338
        %v1316 = vadd.f32 %v1314, %v823
        %v1317 = vadd.f32 %v1315, %v824
        %v1318 = vsel %vm828, %v1316, -inf
        %1319 = vmax.xlane.f32.xlu0 %v1318
        %v1320 = vpop.xlane.xlu0 %1319
        %v1321 = vsel %vm828, %v1317, -inf
        %1322 = vmax.xlane.f32.xlu0 %v1321
        %v1323 = vpop.xlane.xlu0 %1322
        %v1324 = vsub.f32 %v1316, %v1320
        %v1325 = vsub.f32 %v1317, %v1323
        %v1326 = vmul.f32 %v1324, 1.442695
        %v1327 = vpow.pop %v1326
        %v1328 = vmul.f32 %v1325, 1.442695
        %v1329 = vpow.pop %v1328
        %v1330 = vsel %vm828, %v1327, 0.0
        %1331 = vadd.xlane.f32.xlu0 %v1330
        %v1332 = vpop.xlane.xlu0 %1331
        %v1333 = vsel %vm828, %v1329, 0.0
        %1334 = vadd.xlane.f32.xlu0 %v1333
        %v1335 = vpop.xlane.xlu0 %1334
        %v1336 = vrcp.pop %v1332
        %v1337 = vrcp.pop %v1335
        %v1338 = vmul.f32 %v1327, %v1336
        %v1339 = vmul.f32 %v1329, %v1337
        %1340 = vrot.lane.b32.xlu0 %v817, 56
        %v1341 = vpop.permute.xlu0 %1340
        %v1344 = vsel %vm828, %v1338, 0
        %1346 = vmatprep.subr.mxu0 0.0
        %1347 = vmatpush1.msra.mxu0 %v1341
        %1348 = vmatprep.subr.mxu0 0.0
        %1349 = vmatpush1.msra.mxu0 0.0
        %1350 = vmatprep.subr.mxu0 0.0
        %1351 = vmatpush1.msra.mxu0 0.0
        %1352 = vmatprep.subr.mxu0 0.0
        %1353 = vmatpush1.msra.mxu0 0.0
        %1354 = vmatprep.subr.mxu0 0.0
        %1355 = vmatpush1.msra.mxu0 0.0
        %1356 = vmatprep.subr.mxu0 0.0
        %1357 = vmatpush1.msra.mxu0 0.0
        %1358 = vmatprep.subr.mxu0 0.0
        %1359 = vmatpush1.msra.mxu0 0.0
        %1360 = vmatprep.subr.mxu0 0.0
        %1361 = vmatpush1.msra.mxu0 0.0
        %1362 = vmatprep.subr.mxu0 0.0
        %1363 = vmatpush1.msra.mxu0 0.0
        %1364 = vmatprep.subr.mxu0 0.0
        %1365 = vmatpush1.msra.mxu0 0.0
        %1366 = vmatprep.subr.mxu0 0.0
        %1367 = vmatpush1.msra.mxu0 0.0
        %1368 = vmatprep.subr.mxu0 0.0
        %1369 = vmatpush1.msra.mxu0 0.0
        %1370 = vmatprep.subr.mxu0 0.0
        %1371 = vmatpush1.msra.mxu0 0.0
        %1372 = vmatprep.subr.mxu0 0.0
        %1373 = vmatpush1.msra.mxu0 0.0
        %1374 = vmatprep.subr.mxu0 0.0
        %1375 = vmatpush1.msra.mxu0 0.0
        %1376 = vmatprep.subr.mxu0 0.0
        %1377 = vmatpush1.msra.mxu0 0.0
        %1378 = vmatprep.subr.mxu0 0.0
        %1379 = vmatpush1.msra.mxu0 0.0
        %1380 = vmatprep.subr.mxu0 0.0
        %1381 = vmatpush1.msra.mxu0 0.0
        %1382 = vmatprep.subr.mxu0 0.0
        %1383 = vmatpush1.msra.mxu0 0.0
        %1384 = vmatprep.subr.mxu0 0.0
        %1385 = vmatpush1.msra.mxu0 0.0
        %1386 = vmatprep.subr.mxu0 0.0
        %1387 = vmatpush1.msra.mxu0 0.0
        %1388 = vmatprep.subr.mxu0 0.0
        %1389 = vmatpush1.msra.mxu0 0.0
        %1390 = vmatprep.subr.mxu0 0.0
        %1391 = vmatpush1.msra.mxu0 0.0
        %1392 = vmatprep.subr.mxu0 0.0
        %1393 = vmatpush1.msra.mxu0 0.0
        %1394 = vmatprep.subr.mxu0 0.0
        %1395 = vmatpush1.msra.mxu0 0.0
        %1396 = vmatprep.subr.mxu0 0.0
        %1397 = vmatpush1.msra.mxu0 0.0
        %1398 = vmatprep.subr.mxu0 0.0
        %1399 = vmatpush1.msra.mxu0 0.0
        %1400 = vmatprep.subr.mxu0 0.0
        %1401 = vmatpush1.msra.mxu0 0.0
        %1402 = vmatprep.subr.mxu0 0.0
        %1403 = vmatpush1.msra.mxu0 0.0
        %1404 = vmatprep.subr.mxu0 0.0
        %1405 = vmatpush1.msra.mxu0 0.0
        %1406 = vmatprep.subr.mxu0 0.0
        %1407 = vmatpush1.msra.mxu0 0.0
        %1408 = vmatprep.subr.mxu0 0.0
        %1409 = vmatpush1.msra.mxu0 0.0
        %1410 = vmatprep.mubr.f32.mxu0 0.0
        %1411 = vmatmul.mubr.f32.gmra.mrb[0].mxu0 %v1344
        %v1412 = vpop.f32.mrb[0].mxu0
        %v1413 = vadd.f32 0.0, %v1412
        %v1414 = vpop.f32.mrb[0].mxu0
        %1415 = vdwg.mxu0
        %1416 = vrot.lane.b32.xlu0 %v820, 56
        %v1417 = vpop.permute.xlu0 %1416
        %v1420 = vsel %vm828, %v1339, 0
        %1422 = vmatprep.subr.mxu0 0.0
        %1423 = vmatpush1.msra.mxu0 %v1417
        %1424 = vmatprep.subr.mxu0 0.0
        %1425 = vmatpush1.msra.mxu0 0.0
        %1426 = vmatprep.subr.mxu0 0.0
        %1427 = vmatpush1.msra.mxu0 0.0
        %1428 = vmatprep.subr.mxu0 0.0
        %1429 = vmatpush1.msra.mxu0 0.0
        %1430 = vmatprep.subr.mxu0 0.0
        %1431 = vmatpush1.msra.mxu0 0.0
        %1432 = vmatprep.subr.mxu0 0.0
        %1433 = vmatpush1.msra.mxu0 0.0
        %1434 = vmatprep.subr.mxu0 0.0
        %1435 = vmatpush1.msra.mxu0 0.0
        %1436 = vmatprep.subr.mxu0 0.0
        %1437 = vmatpush1.msra.mxu0 0.0
        %1438 = vmatprep.subr.mxu0 0.0
        %1439 = vmatpush1.msra.mxu0 0.0
        %1440 = vmatprep.subr.mxu0 0.0
        %1441 = vmatpush1.msra.mxu0 0.0
        %1442 = vmatprep.subr.mxu0 0.0
        %1443 = vmatpush1.msra.mxu0 0.0
        %1444 = vmatprep.subr.mxu0 0.0
        %1445 = vmatpush1.msra.mxu0 0.0
        %1446 = vmatprep.subr.mxu0 0.0
        %1447 = vmatpush1.msra.mxu0 0.0
        %1448 = vmatprep.subr.mxu0 0.0
        %1449 = vmatpush1.msra.mxu0 0.0
        %1450 = vmatprep.subr.mxu0 0.0
        %1451 = vmatpush1.msra.mxu0 0.0
        %1452 = vmatprep.subr.mxu0 0.0
        %1453 = vmatpush1.msra.mxu0 0.0
        %1454 = vmatprep.subr.mxu0 0.0
        %1455 = vmatpush1.msra.mxu0 0.0
        %1456 = vmatprep.subr.mxu0 0.0
        %1457 = vmatpush1.msra.mxu0 0.0
        %1458 = vmatprep.subr.mxu0 0.0
        %1459 = vmatpush1.msra.mxu0 0.0
        %1460 = vmatprep.subr.mxu0 0.0
        %1461 = vmatpush1.msra.mxu0 0.0
        %1462 = vmatprep.subr.mxu0 0.0
        %1463 = vmatpush1.msra.mxu0 0.0
        %1464 = vmatprep.subr.mxu0 0.0
        %1465 = vmatpush1.msra.mxu0 0.0
        %1466 = vmatprep.subr.mxu0 0.0
        %1467 = vmatpush1.msra.mxu0 0.0
        %1468 = vmatprep.subr.mxu0 0.0
        %1469 = vmatpush1.msra.mxu0 0.0
        %1470 = vmatprep.subr.mxu0 0.0
        %1471 = vmatpush1.msra.mxu0 0.0
        %1472 = vmatprep.subr.mxu0 0.0
        %1473 = vmatpush1.msra.mxu0 0.0
        %1474 = vmatprep.subr.mxu0 0.0
        %1475 = vmatpush1.msra.mxu0 0.0
        %1476 = vmatprep.subr.mxu0 0.0
        %1477 = vmatpush1.msra.mxu0 0.0
        %1478 = vmatprep.subr.mxu0 0.0
        %1479 = vmatpush1.msra.mxu0 0.0
        %1480 = vmatprep.subr.mxu0 0.0
        %1481 = vmatpush1.msra.mxu0 0.0
        %1482 = vmatprep.subr.mxu0 0.0
        %1483 = vmatpush1.msra.mxu0 0.0
        %1484 = vmatprep.subr.mxu0 0.0
        %1485 = vmatpush1.msra.mxu0 0.0
        %1486 = vmatprep.mubr.f32.mxu0 0.0
        %1487 = vmatmul.mubr.f32.gmra.mrb[0].mxu0 %v1420
        %v1488 = vpop.f32.mrb[0].mxu0
        %v1489 = vadd.f32 0.0, %v1488
        %v1490 = vpop.f32.mrb[0].mxu0
        %1491 = vdwg.mxu0
        %1492 = vrot.lane.b32.xlu0 %v817, 112
        %v1493 = vpop.permute.xlu0 %1492
        %1494 = vrot.lane.b32.xlu0 %v817, 80
        %v1495 = vpop.permute.xlu0 %1494
        %v1496 = vsel %vm828, %v1493, 0
        %v1498 = vsel %vm828, %v1495, 0
        %1500 = vmatprep.subr.mxu0 0.0
        %1501 = vmatpush1.xpose.msra.mxu0 %v1498
        %1502 = vmatprep.subr.mxu0 0.0
        %1503 = vmatpush1.xpose.msra.mxu0 0.0
        %1504 = vmatprep.subr.mxu0 0.0
        %1505 = vmatpush1.xpose.msra.mxu0 0.0
        %1506 = vmatprep.subr.mxu0 0.0
        %1507 = vmatpush1.xpose.msra.mxu0 0.0
        %1508 = vmatprep.subr.mxu0 0.0
        %1509 = vmatpush1.xpose.msra.mxu0 0.0
        %1510 = vmatprep.subr.mxu0 0.0
        %1511 = vmatpush1.xpose.msra.mxu0 0.0
        %1512 = vmatprep.subr.mxu0 0.0
        %1513 = vmatpush1.xpose.msra.mxu0 0.0
        %1514 = vmatprep.subr.mxu0 0.0
        %1515 = vmatpush1.xpose.msra.mxu0 0.0
        %1516 = vmatprep.subr.mxu0 0.0
        %1517 = vmatpush1.xpose.msra.mxu0 0.0
        %1518 = vmatprep.subr.mxu0 0.0
        %1519 = vmatpush1.xpose.msra.mxu0 0.0
        %1520 = vmatprep.subr.mxu0 0.0
        %1521 = vmatpush1.xpose.msra.mxu0 0.0
        %1522 = vmatprep.subr.mxu0 0.0
        %1523 = vmatpush1.xpose.msra.mxu0 0.0
        %1524 = vmatprep.subr.mxu0 0.0
        %1525 = vmatpush1.xpose.msra.mxu0 0.0
        %1526 = vmatprep.subr.mxu0 0.0
        %1527 = vmatpush1.xpose.msra.mxu0 0.0
        %1528 = vmatprep.subr.mxu0 0.0
        %1529 = vmatpush1.xpose.msra.mxu0 0.0
        %1530 = vmatprep.subr.mxu0 0.0
        %1531 = vmatpush1.xpose.msra.mxu0 0.0
        %1532 = vmatprep.subr.mxu0 0.0
        %1533 = vmatpush1.xpose.msra.mxu0 0.0
        %1534 = vmatprep.subr.mxu0 0.0
        %1535 = vmatpush1.xpose.msra.mxu0 0.0
        %1536 = vmatprep.subr.mxu0 0.0
        %1537 = vmatpush1.xpose.msra.mxu0 0.0
        %1538 = vmatprep.subr.mxu0 0.0
        %1539 = vmatpush1.xpose.msra.mxu0 0.0
        %1540 = vmatprep.subr.mxu0 0.0
        %1541 = vmatpush1.xpose.msra.mxu0 0.0
        %1542 = vmatprep.subr.mxu0 0.0
        %1543 = vmatpush1.xpose.msra.mxu0 0.0
        %1544 = vmatprep.subr.mxu0 0.0
        %1545 = vmatpush1.xpose.msra.mxu0 0.0
        %1546 = vmatprep.subr.mxu0 0.0
        %1547 = vmatpush1.xpose.msra.mxu0 0.0
        %1548 = vmatprep.subr.mxu0 0.0
        %1549 = vmatpush1.xpose.msra.mxu0 0.0
        %1550 = vmatprep.subr.mxu0 0.0
        %1551 = vmatpush1.xpose.msra.mxu0 0.0
        %1552 = vmatprep.subr.mxu0 0.0
        %1553 = vmatpush1.xpose.msra.mxu0 0.0
        %1554 = vmatprep.subr.mxu0 0.0
        %1555 = vmatpush1.xpose.msra.mxu0 0.0
        %1556 = vmatprep.subr.mxu0 0.0
        %1557 = vmatpush1.xpose.msra.mxu0 0.0
        %1558 = vmatprep.subr.mxu0 0.0
        %1559 = vmatpush1.xpose.msra.mxu0 0.0
        %1560 = vmatprep.subr.mxu0 0.0
        %1561 = vmatpush1.xpose.msra.mxu0 0.0
        %1562 = vmatprep.subr.mxu0 0.0
        %1563 = vmatpush1.xpose.msra.mxu0 0.0
        %1564 = vmatprep.mubr.f32.mxu0 0.0
        %1565 = vmatmul.mubr.f32.gmra.mrb[0].mxu0 %v1496
        %v1566 = vpop.f32.mrb[0].mxu0
        %v1567 = vadd.f32 0.0, %v1566
        %v1568 = vpop.f32.mrb[0].mxu0
        %1569 = vdwg.mxu0
        %1570 = vrot.lane.b32.xlu0 %v820, 112
        %v1571 = vpop.permute.xlu0 %1570
        %1572 = vrot.lane.b32.xlu0 %v820, 80
        %v1573 = vpop.permute.xlu0 %1572
        %v1574 = vsel %vm828, %v1571, 0
        %v1576 = vsel %vm828, %v1573, 0
        %1578 = vmatprep.subr.mxu0 0.0
        %1579 = vmatpush1.xpose.msra.mxu0 %v1576
        %1580 = vmatprep.subr.mxu0 0.0
        %1581 = vmatpush1.xpose.msra.mxu0 0.0
        %1582 = vmatprep.subr.mxu0 0.0
        %1583 = vmatpush1.xpose.msra.mxu0 0.0
        %1584 = vmatprep.subr.mxu0 0.0
        %1585 = vmatpush1.xpose.msra.mxu0 0.0
        %1586 = vmatprep.subr.mxu0 0.0
        %1587 = vmatpush1.xpose.msra.mxu0 0.0
        %1588 = vmatprep.subr.mxu0 0.0
        %1589 = vmatpush1.xpose.msra.mxu0 0.0
        %1590 = vmatprep.subr.mxu0 0.0
        %1591 = vmatpush1.xpose.msra.mxu0 0.0
        %1592 = vmatprep.subr.mxu0 0.0
        %1593 = vmatpush1.xpose.msra.mxu0 0.0
        %1594 = vmatprep.subr.mxu0 0.0
        %1595 = vmatpush1.xpose.msra.mxu0 0.0
        %1596 = vmatprep.subr.mxu0 0.0
        %1597 = vmatpush1.xpose.msra.mxu0 0.0
        %1598 = vmatprep.subr.mxu0 0.0
        %1599 = vmatpush1.xpose.msra.mxu0 0.0
        %1600 = vmatprep.subr.mxu0 0.0
        %1601 = vmatpush1.xpose.msra.mxu0 0.0
        %1602 = vmatprep.subr.mxu0 0.0
        %1603 = vmatpush1.xpose.msra.mxu0 0.0
        %1604 = vmatprep.subr.mxu0 0.0
        %1605 = vmatpush1.xpose.msra.mxu0 0.0
        %1606 = vmatprep.subr.mxu0 0.0
        %1607 = vmatpush1.xpose.msra.mxu0 0.0
        %1608 = vmatprep.subr.mxu0 0.0
        %1609 = vmatpush1.xpose.msra.mxu0 0.0
        %1610 = vmatprep.subr.mxu0 0.0
        %1611 = vmatpush1.xpose.msra.mxu0 0.0
        %1612 = vmatprep.subr.mxu0 0.0
        %1613 = vmatpush1.xpose.msra.mxu0 0.0
        %1614 = vmatprep.subr.mxu0 0.0
        %1615 = vmatpush1.xpose.msra.mxu0 0.0
        %1616 = vmatprep.subr.mxu0 0.0
        %1617 = vmatpush1.xpose.msra.mxu0 0.0
        %1618 = vmatprep.subr.mxu0 0.0
        %1619 = vmatpush1.xpose.msra.mxu0 0.0
        %1620 = vmatprep.subr.mxu0 0.0
        %1621 = vmatpush1.xpose.msra.mxu0 0.0
        %1622 = vmatprep.subr.mxu0 0.0
        %1623 = vmatpush1.xpose.msra.mxu0 0.0
        %1624 = vmatprep.subr.mxu0 0.0
        %1625 = vmatpush1.xpose.msra.mxu0 0.0
        %1626 = vmatprep.subr.mxu0 0.0
        %1627 = vmatpush1.xpose.msra.mxu0 0.0
        %1628 = vmatprep.subr.mxu0 0.0
        %1629 = vmatpush1.xpose.msra.mxu0 0.0
        %1630 = vmatprep.subr.mxu0 0.0
        %1631 = vmatpush1.xpose.msra.mxu0 0.0
        %1632 = vmatprep.subr.mxu0 0.0
        %1633 = vmatpush1.xpose.msra.mxu0 0.0
        %1634 = vmatprep.subr.mxu0 0.0
        %1635 = vmatpush1.xpose.msra.mxu0 0.0
        %1636 = vmatprep.subr.mxu0 0.0
        %1637 = vmatpush1.xpose.msra.mxu0 0.0
        %1638 = vmatprep.subr.mxu0 0.0
        %1639 = vmatpush1.xpose.msra.mxu0 0.0
        %1640 = vmatprep.subr.mxu0 0.0
        %1641 = vmatpush1.xpose.msra.mxu0 0.0
        %1642 = vmatprep.mubr.f32.mxu0 0.0
        %1643 = vmatmul.mubr.f32.gmra.mrb[0].mxu0 %v1574
        %v1644 = vpop.f32.mrb[0].mxu0
        %v1645 = vadd.f32 0.0, %v1644
        %v1646 = vpop.f32.mrb[0].mxu0
        %1647 = vdwg.mxu0
        %v1648 = vmul.f32 %v1567, 0.35355338
        %v1649 = vmul.f32 %v1645, 0.35355338
        %v1650 = vadd.f32 %v1648, %v823
        %v1651 = vadd.f32 %v1649, %v824
        %v1652 = vsel %vm828, %v1650, -inf
        %1653 = vmax.xlane.f32.xlu0 %v1652
        %v1654 = vpop.xlane.xlu0 %1653
        %v1655 = vsel %vm828, %v1651, -inf
        %1656 = vmax.xlane.f32.xlu0 %v1655
        %v1657 = vpop.xlane.xlu0 %1656
        %v1658 = vsub.f32 %v1650, %v1654
        %v1659 = vsub.f32 %v1651, %v1657
        %v1660 = vmul.f32 %v1658, 1.442695
        %v1661 = vpow.pop %v1660
        %v1662 = vmul.f32 %v1659, 1.442695
        %v1663 = vpow.pop %v1662
        %v1664 = vsel %vm828, %v1661, 0.0
        %1665 = vadd.xlane.f32.xlu0 %v1664
        %v1666 = vpop.xlane.xlu0 %1665
        %v1667 = vsel %vm828, %v1663, 0.0
        %1668 = vadd.xlane.f32.xlu0 %v1667
        %v1669 = vpop.xlane.xlu0 %1668
        %v1670 = vrcp.pop %v1666
        %v1671 = vrcp.pop %v1669
        %v1672 = vmul.f32 %v1661, %v1670
        %v1673 = vmul.f32 %v1663, %v1671
        %1674 = vrot.lane.b32.xlu0 %v817, 48
        %v1675 = vpop.permute.xlu0 %1674
        %v1678 = vsel %vm828, %v1672, 0
        %1680 = vmatprep.subr.mxu0 0.0
        %1681 = vmatpush1.msra.mxu0 %v1675
        %1682 = vmatprep.subr.mxu0 0.0
        %1683 = vmatpush1.msra.mxu0 0.0
        %1684 = vmatprep.subr.mxu0 0.0
        %1685 = vmatpush1.msra.mxu0 0.0
        %1686 = vmatprep.subr.mxu0 0.0
        %1687 = vmatpush1.msra.mxu0 0.0
        %1688 = vmatprep.subr.mxu0 0.0
        %1689 = vmatpush1.msra.mxu0 0.0
        %1690 = vmatprep.subr.mxu0 0.0
        %1691 = vmatpush1.msra.mxu0 0.0
        %1692 = vmatprep.subr.mxu0 0.0
        %1693 = vmatpush1.msra.mxu0 0.0
        %1694 = vmatprep.subr.mxu0 0.0
        %1695 = vmatpush1.msra.mxu0 0.0
        %1696 = vmatprep.subr.mxu0 0.0
        %1697 = vmatpush1.msra.mxu0 0.0
        %1698 = vmatprep.subr.mxu0 0.0
        %1699 = vmatpush1.msra.mxu0 0.0
        %1700 = vmatprep.subr.mxu0 0.0
        %1701 = vmatpush1.msra.mxu0 0.0
        %1702 = vmatprep.subr.mxu0 0.0
        %1703 = vmatpush1.msra.mxu0 0.0
        %1704 = vmatprep.subr.mxu0 0.0
        %1705 = vmatpush1.msra.mxu0 0.0
        %1706 = vmatprep.subr.mxu0 0.0
        %1707 = vmatpush1.msra.mxu0 0.0
        %1708 = vmatprep.subr.mxu0 0.0
        %1709 = vmatpush1.msra.mxu0 0.0
        %1710 = vmatprep.subr.mxu0 0.0
        %1711 = vmatpush1.msra.mxu0 0.0
        %1712 = vmatprep.subr.mxu0 0.0
        %1713 = vmatpush1.msra.mxu0 0.0
        %1714 = vmatprep.subr.mxu0 0.0
        %1715 = vmatpush1.msra.mxu0 0.0
        %1716 = vmatprep.subr.mxu0 0.0
        %1717 = vmatpush1.msra.mxu0 0.0
        %1718 = vmatprep.subr.mxu0 0.0
        %1719 = vmatpush1.msra.mxu0 0.0
        %1720 = vmatprep.subr.mxu0 0.0
        %1721 = vmatpush1.msra.mxu0 0.0
        %1722 = vmatprep.subr.mxu0 0.0
        %1723 = vmatpush1.msra.mxu0 0.0
        %1724 = vmatprep.subr.mxu0 0.0
        %1725 = vmatpush1.msra.mxu0 0.0
        %1726 = vmatprep.subr.mxu0 0.0
        %1727 = vmatpush1.msra.mxu0 0.0
        %1728 = vmatprep.subr.mxu0 0.0
        %1729 = vmatpush1.msra.mxu0 0.0
        %1730 = vmatprep.subr.mxu0 0.0
        %1731 = vmatpush1.msra.mxu0 0.0
        %1732 = vmatprep.subr.mxu0 0.0
        %1733 = vmatpush1.msra.mxu0 0.0
        %1734 = vmatprep.subr.mxu0 0.0
        %1735 = vmatpush1.msra.mxu0 0.0
        %1736 = vmatprep.subr.mxu0 0.0
        %1737 = vmatpush1.msra.mxu0 0.0
        %1738 = vmatprep.subr.mxu0 0.0
        %1739 = vmatpush1.msra.mxu0 0.0
        %1740 = vmatprep.subr.mxu0 0.0
        %1741 = vmatpush1.msra.mxu0 0.0
        %1742 = vmatprep.subr.mxu0 0.0
        %1743 = vmatpush1.msra.mxu0 0.0
        %1744 = vmatprep.mubr.f32.mxu0 0.0
        %1745 = vmatmul.mubr.f32.gmra.mrb[0].mxu0 %v1678
        %v1746 = vpop.f32.mrb[0].mxu0
        %v1747 = vadd.f32 0.0, %v1746
        %v1748 = vpop.f32.mrb[0].mxu0
        %1749 = vdwg.mxu0
        %1750 = vrot.lane.b32.xlu0 %v820, 48
        %v1751 = vpop.permute.xlu0 %1750
        %v1754 = vsel %vm828, %v1673, 0
        %1756 = vmatprep.subr.mxu0 0.0
        %1757 = vmatpush1.msra.mxu0 %v1751
        %1758 = vmatprep.subr.mxu0 0.0
        %1759 = vmatpush1.msra.mxu0 0.0
        %1760 = vmatprep.subr.mxu0 0.0
        %1761 = vmatpush1.msra.mxu0 0.0
        %1762 = vmatprep.subr.mxu0 0.0
        %1763 = vmatpush1.msra.mxu0 0.0
        %1764 = vmatprep.subr.mxu0 0.0
        %1765 = vmatpush1.msra.mxu0 0.0
        %1766 = vmatprep.subr.mxu0 0.0
        %1767 = vmatpush1.msra.mxu0 0.0
        %1768 = vmatprep.subr.mxu0 0.0
        %1769 = vmatpush1.msra.mxu0 0.0
        %1770 = vmatprep.subr.mxu0 0.0
        %1771 = vmatpush1.msra.mxu0 0.0
        %1772 = vmatprep.subr.mxu0 0.0
        %1773 = vmatpush1.msra.mxu0 0.0
        %1774 = vmatprep.subr.mxu0 0.0
        %1775 = vmatpush1.msra.mxu0 0.0
        %1776 = vmatprep.subr.mxu0 0.0
        %1777 = vmatpush1.msra.mxu0 0.0
        %1778 = vmatprep.subr.mxu0 0.0
        %1779 = vmatpush1.msra.mxu0 0.0
        %1780 = vmatprep.subr.mxu0 0.0
        %1781 = vmatpush1.msra.mxu0 0.0
        %1782 = vmatprep.subr.mxu0 0.0
        %1783 = vmatpush1.msra.mxu0 0.0
        %1784 = vmatprep.subr.mxu0 0.0
        %1785 = vmatpush1.msra.mxu0 0.0
        %1786 = vmatprep.subr.mxu0 0.0
        %1787 = vmatpush1.msra.mxu0 0.0
        %1788 = vmatprep.subr.mxu0 0.0
        %1789 = vmatpush1.msra.mxu0 0.0
        %1790 = vmatprep.subr.mxu0 0.0
        %1791 = vmatpush1.msra.mxu0 0.0
        %1792 = vmatprep.subr.mxu0 0.0
        %1793 = vmatpush1.msra.mxu0 0.0
        %1794 = vmatprep.subr.mxu0 0.0
        %1795 = vmatpush1.msra.mxu0 0.0
        %1796 = vmatprep.subr.mxu0 0.0
        %1797 = vmatpush1.msra.mxu0 0.0
        %1798 = vmatprep.subr.mxu0 0.0
        %1799 = vmatpush1.msra.mxu0 0.0
        %1800 = vmatprep.subr.mxu0 0.0
        %1801 = vmatpush1.msra.mxu0 0.0
        %1802 = vmatprep.subr.mxu0 0.0
        %1803 = vmatpush1.msra.mxu0 0.0
        %1804 = vmatprep.subr.mxu0 0.0
        %1805 = vmatpush1.msra.mxu0 0.0
        %1806 = vmatprep.subr.mxu0 0.0
        %1807 = vmatpush1.msra.mxu0 0.0
        %1808 = vmatprep.subr.mxu0 0.0
        %1809 = vmatpush1.msra.mxu0 0.0
        %1810 = vmatprep.subr.mxu0 0.0
        %1811 = vmatpush1.msra.mxu0 0.0
        %1812 = vmatprep.subr.mxu0 0.0
        %1813 = vmatpush1.msra.mxu0 0.0
        %1814 = vmatprep.subr.mxu0 0.0
        %1815 = vmatpush1.msra.mxu0 0.0
        %1816 = vmatprep.subr.mxu0 0.0
        %1817 = vmatpush1.msra.mxu0 0.0
        %1818 = vmatprep.subr.mxu0 0.0
        %1819 = vmatpush1.msra.mxu0 0.0
        %1820 = vmatprep.mubr.f32.mxu0 0.0
        %1821 = vmatmul.mubr.f32.gmra.mrb[0].mxu0 %v1754
        %v1822 = vpop.f32.mrb[0].mxu0
        %v1823 = vadd.f32 0.0, %v1822
        %v1824 = vpop.f32.mrb[0].mxu0
        %1825 = vdwg.mxu0
        %1826 = vrot.lane.b32.xlu0 %v817, 104
        %v1827 = vpop.permute.xlu0 %1826
        %1828 = vrot.lane.b32.xlu0 %v817, 72
        %v1829 = vpop.permute.xlu0 %1828
        %v1830 = vsel %vm828, %v1827, 0
        %v1832 = vsel %vm828, %v1829, 0
        %1834 = vmatprep.subr.mxu0 0.0
        %1835 = vmatpush1.xpose.msra.mxu0 %v1832
        %1836 = vmatprep.subr.mxu0 0.0
        %1837 = vmatpush1.xpose.msra.mxu0 0.0
        %1838 = vmatprep.subr.mxu0 0.0
        %1839 = vmatpush1.xpose.msra.mxu0 0.0
        %1840 = vmatprep.subr.mxu0 0.0
        %1841 = vmatpush1.xpose.msra.mxu0 0.0
        %1842 = vmatprep.subr.mxu0 0.0
        %1843 = vmatpush1.xpose.msra.mxu0 0.0
        %1844 = vmatprep.subr.mxu0 0.0
        %1845 = vmatpush1.xpose.msra.mxu0 0.0
        %1846 = vmatprep.subr.mxu0 0.0
        %1847 = vmatpush1.xpose.msra.mxu0 0.0
        %1848 = vmatprep.subr.mxu0 0.0
        %1849 = vmatpush1.xpose.msra.mxu0 0.0
        %1850 = vmatprep.subr.mxu0 0.0
        %1851 = vmatpush1.xpose.msra.mxu0 0.0
        %1852 = vmatprep.subr.mxu0 0.0
        %1853 = vmatpush1.xpose.msra.mxu0 0.0
        %1854 = vmatprep.subr.mxu0 0.0
        %1855 = vmatpush1.xpose.msra.mxu0 0.0
        %1856 = vmatprep.subr.mxu0 0.0
        %1857 = vmatpush1.xpose.msra.mxu0 0.0
        %1858 = vmatprep.subr.mxu0 0.0
        %1859 = vmatpush1.xpose.msra.mxu0 0.0
        %1860 = vmatprep.subr.mxu0 0.0
        %1861 = vmatpush1.xpose.msra.mxu0 0.0
        %1862 = vmatprep.subr.mxu0 0.0
        %1863 = vmatpush1.xpose.msra.mxu0 0.0
        %1864 = vmatprep.subr.mxu0 0.0
        %1865 = vmatpush1.xpose.msra.mxu0 0.0
        %1866 = vmatprep.subr.mxu0 0.0
        %1867 = vmatpush1.xpose.msra.mxu0 0.0
        %1868 = vmatprep.subr.mxu0 0.0
        %1869 = vmatpush1.xpose.msra.mxu0 0.0
        %1870 = vmatprep.subr.mxu0 0.0
        %1871 = vmatpush1.xpose.msra.mxu0 0.0
        %1872 = vmatprep.subr.mxu0 0.0
        %1873 = vmatpush1.xpose.msra.mxu0 0.0
        %1874 = vmatprep.subr.mxu0 0.0
        %1875 = vmatpush1.xpose.msra.mxu0 0.0
        %1876 = vmatprep.subr.mxu0 0.0
        %1877 = vmatpush1.xpose.msra.mxu0 0.0
        %1878 = vmatprep.subr.mxu0 0.0
        %1879 = vmatpush1.xpose.msra.mxu0 0.0
        %1880 = vmatprep.subr.mxu0 0.0
        %1881 = vmatpush1.xpose.msra.mxu0 0.0
        %1882 = vmatprep.subr.mxu0 0.0
        %1883 = vmatpush1.xpose.msra.mxu0 0.0
        %1884 = vmatprep.subr.mxu0 0.0
        %1885 = vmatpush1.xpose.msra.mxu0 0.0
        %1886 = vmatprep.subr.mxu0 0.0
        %1887 = vmatpush1.xpose.msra.mxu0 0.0
        %1888 = vmatprep.subr.mxu0 0.0
        %1889 = vmatpush1.xpose.msra.mxu0 0.0
        %1890 = vmatprep.subr.mxu0 0.0
        %1891 = vmatpush1.xpose.msra.mxu0 0.0
        %1892 = vmatprep.subr.mxu0 0.0
        %1893 = vmatpush1.xpose.msra.mxu0 0.0
        %1894 = vmatprep.subr.mxu0 0.0
        %1895 = vmatpush1.xpose.msra.mxu0 0.0
        %1896 = vmatprep.subr.mxu0 0.0
        %1897 = vmatpush1.xpose.msra.mxu0 0.0
        %1898 = vmatprep.mubr.f32.mxu0 0.0
        %1899 = vmatmul.mubr.f32.gmra.mrb[0].mxu0 %v1830
        %v1900 = vpop.f32.mrb[0].mxu0
        %v1901 = vadd.f32 0.0, %v1900
        %v1902 = vpop.f32.mrb[0].mxu0
        %1903 = vdwg.mxu0
        %1904 = vrot.lane.b32.xlu0 %v820, 104
        %v1905 = vpop.permute.xlu0 %1904
        %1906 = vrot.lane.b32.xlu0 %v820, 72
        %v1907 = vpop.permute.xlu0 %1906
        %v1908 = vsel %vm828, %v1905, 0
        %v1910 = vsel %vm828, %v1907, 0
        %1912 = vmatprep.subr.mxu0 0.0
        %1913 = vmatpush1.xpose.msra.mxu0 %v1910
        %1914 = vmatprep.subr.mxu0 0.0
        %1915 = vmatpush1.xpose.msra.mxu0 0.0
        %1916 = vmatprep.subr.mxu0 0.0
        %1917 = vmatpush1.xpose.msra.mxu0 0.0
        %1918 = vmatprep.subr.mxu0 0.0
        %1919 = vmatpush1.xpose.msra.mxu0 0.0
        %1920 = vmatprep.subr.mxu0 0.0
        %1921 = vmatpush1.xpose.msra.mxu0 0.0
        %1922 = vmatprep.subr.mxu0 0.0
        %1923 = vmatpush1.xpose.msra.mxu0 0.0
        %1924 = vmatprep.subr.mxu0 0.0
        %1925 = vmatpush1.xpose.msra.mxu0 0.0
        %1926 = vmatprep.subr.mxu0 0.0
        %1927 = vmatpush1.xpose.msra.mxu0 0.0
        %1928 = vmatprep.subr.mxu0 0.0
        %1929 = vmatpush1.xpose.msra.mxu0 0.0
        %1930 = vmatprep.subr.mxu0 0.0
        %1931 = vmatpush1.xpose.msra.mxu0 0.0
        %1932 = vmatprep.subr.mxu0 0.0
        %1933 = vmatpush1.xpose.msra.mxu0 0.0
        %1934 = vmatprep.subr.mxu0 0.0
        %1935 = vmatpush1.xpose.msra.mxu0 0.0
        %1936 = vmatprep.subr.mxu0 0.0
        %1937 = vmatpush1.xpose.msra.mxu0 0.0
        %1938 = vmatprep.subr.mxu0 0.0
        %1939 = vmatpush1.xpose.msra.mxu0 0.0
        %1940 = vmatprep.subr.mxu0 0.0
        %1941 = vmatpush1.xpose.msra.mxu0 0.0
        %1942 = vmatprep.subr.mxu0 0.0
        %1943 = vmatpush1.xpose.msra.mxu0 0.0
        %1944 = vmatprep.subr.mxu0 0.0
        %1945 = vmatpush1.xpose.msra.mxu0 0.0
        %1946 = vmatprep.subr.mxu0 0.0
        %1947 = vmatpush1.xpose.msra.mxu0 0.0
        %1948 = vmatprep.subr.mxu0 0.0
        %1949 = vmatpush1.xpose.msra.mxu0 0.0
        %1950 = vmatprep.subr.mxu0 0.0
        %1951 = vmatpush1.xpose.msra.mxu0 0.0
        %1952 = vmatprep.subr.mxu0 0.0
        %1953 = vmatpush1.xpose.msra.mxu0 0.0
        %1954 = vmatprep.subr.mxu0 0.0
        %1955 = vmatpush1.xpose.msra.mxu0 0.0
        %1956 = vmatprep.subr.mxu0 0.0
        %1957 = vmatpush1.xpose.msra.mxu0 0.0
        %1958 = vmatprep.subr.mxu0 0.0
        %1959 = vmatpush1.xpose.msra.mxu0 0.0
        %1960 = vmatprep.subr.mxu0 0.0
        %1961 = vmatpush1.xpose.msra.mxu0 0.0
        %1962 = vmatprep.subr.mxu0 0.0
        %1963 = vmatpush1.xpose.msra.mxu0 0.0
        %1964 = vmatprep.subr.mxu0 0.0
        %1965 = vmatpush1.xpose.msra.mxu0 0.0
        %1966 = vmatprep.subr.mxu0 0.0
        %1967 = vmatpush1.xpose.msra.mxu0 0.0
        %1968 = vmatprep.subr.mxu0 0.0
        %1969 = vmatpush1.xpose.msra.mxu0 0.0
        %1970 = vmatprep.subr.mxu0 0.0
        %1971 = vmatpush1.xpose.msra.mxu0 0.0
        %1972 = vmatprep.subr.mxu0 0.0
        %1973 = vmatpush1.xpose.msra.mxu0 0.0
        %1974 = vmatprep.subr.mxu0 0.0
        %1975 = vmatpush1.xpose.msra.mxu0 0.0
        %1976 = vmatprep.mubr.f32.mxu0 0.0
        %1977 = vmatmul.mubr.f32.gmra.mrb[0].mxu0 %v1908
        %v1978 = vpop.f32.mrb[0].mxu0
        %v1979 = vadd.f32 0.0, %v1978
        %v1980 = vpop.f32.mrb[0].mxu0
        %1981 = vdwg.mxu0
        %v1982 = vmul.f32 %v1901, 0.35355338
        %v1983 = vmul.f32 %v1979, 0.35355338
        %v1984 = vadd.f32 %v1982, %v823
        %v1985 = vadd.f32 %v1983, %v824
        %v1986 = vsel %vm828, %v1984, -inf
        %1987 = vmax.xlane.f32.xlu0 %v1986
        %v1988 = vpop.xlane.xlu0 %1987
        %v1989 = vsel %vm828, %v1985, -inf
        %1990 = vmax.xlane.f32.xlu0 %v1989
        %v1991 = vpop.xlane.xlu0 %1990
        %v1992 = vsub.f32 %v1984, %v1988
        %v1993 = vsub.f32 %v1985, %v1991
        %v1994 = vmul.f32 %v1992, 1.442695
        %v1995 = vpow.pop %v1994
        %v1996 = vmul.f32 %v1993, 1.442695
        %v1997 = vpow.pop %v1996
        %v1998 = vsel %vm828, %v1995, 0.0
        %1999 = vadd.xlane.f32.xlu0 %v1998
        %v2000 = vpop.xlane.xlu0 %1999
        %v2001 = vsel %vm828, %v1997, 0.0
        %2002 = vadd.xlane.f32.xlu0 %v2001
        %v2003 = vpop.xlane.xlu0 %2002
        %v2004 = vrcp.pop %v2000
        %v2005 = vrcp.pop %v2003
        %v2006 = vmul.f32 %v1995, %v2004
        %v2007 = vmul.f32 %v1997, %v2005
        %2008 = vrot.lane.b32.xlu0 %v817, 40
        %v2009 = vpop.permute.xlu0 %2008
        %v2012 = vsel %vm828, %v2006, 0
        %2014 = vmatprep.subr.mxu0 0.0
        %2015 = vmatpush1.msra.mxu0 %v2009
        %2016 = vmatprep.subr.mxu0 0.0
        %2017 = vmatpush1.msra.mxu0 0.0
        %2018 = vmatprep.subr.mxu0 0.0
        %2019 = vmatpush1.msra.mxu0 0.0
        %2020 = vmatprep.subr.mxu0 0.0
        %2021 = vmatpush1.msra.mxu0 0.0
        %2022 = vmatprep.subr.mxu0 0.0
        %2023 = vmatpush1.msra.mxu0 0.0
        %2024 = vmatprep.subr.mxu0 0.0
        %2025 = vmatpush1.msra.mxu0 0.0
        %2026 = vmatprep.subr.mxu0 0.0
        %2027 = vmatpush1.msra.mxu0 0.0
        %2028 = vmatprep.subr.mxu0 0.0
        %2029 = vmatpush1.msra.mxu0 0.0
        %2030 = vmatprep.subr.mxu0 0.0
        %2031 = vmatpush1.msra.mxu0 0.0
        %2032 = vmatprep.subr.mxu0 0.0
        %2033 = vmatpush1.msra.mxu0 0.0
        %2034 = vmatprep.subr.mxu0 0.0
        %2035 = vmatpush1.msra.mxu0 0.0
        %2036 = vmatprep.subr.mxu0 0.0
        %2037 = vmatpush1.msra.mxu0 0.0
        %2038 = vmatprep.subr.mxu0 0.0
        %2039 = vmatpush1.msra.mxu0 0.0
        %2040 = vmatprep.subr.mxu0 0.0
        %2041 = vmatpush1.msra.mxu0 0.0
        %2042 = vmatprep.subr.mxu0 0.0
        %2043 = vmatpush1.msra.mxu0 0.0
        %2044 = vmatprep.subr.mxu0 0.0
        %2045 = vmatpush1.msra.mxu0 0.0
        %2046 = vmatprep.subr.mxu0 0.0
        %2047 = vmatpush1.msra.mxu0 0.0
        %2048 = vmatprep.subr.mxu0 0.0
        %2049 = vmatpush1.msra.mxu0 0.0
        %2050 = vmatprep.subr.mxu0 0.0
        %2051 = vmatpush1.msra.mxu0 0.0
        %2052 = vmatprep.subr.mxu0 0.0
        %2053 = vmatpush1.msra.mxu0 0.0
        %2054 = vmatprep.subr.mxu0 0.0
        %2055 = vmatpush1.msra.mxu0 0.0
        %2056 = vmatprep.subr.mxu0 0.0
        %2057 = vmatpush1.msra.mxu0 0.0
        %2058 = vmatprep.subr.mxu0 0.0
        %2059 = vmatpush1.msra.mxu0 0.0
        %2060 = vmatprep.subr.mxu0 0.0
        %2061 = vmatpush1.msra.mxu0 0.0
        %2062 = vmatprep.subr.mxu0 0.0
        %2063 = vmatpush1.msra.mxu0 0.0
        %2064 = vmatprep.subr.mxu0 0.0
        %2065 = vmatpush1.msra.mxu0 0.0
        %2066 = vmatprep.subr.mxu0 0.0
        %2067 = vmatpush1.msra.mxu0 0.0
        %2068 = vmatprep.subr.mxu0 0.0
        %2069 = vmatpush1.msra.mxu0 0.0
        %2070 = vmatprep.subr.mxu0 0.0
        %2071 = vmatpush1.msra.mxu0 0.0
        %2072 = vmatprep.subr.mxu0 0.0
        %2073 = vmatpush1.msra.mxu0 0.0
        %2074 = vmatprep.subr.mxu0 0.0
        %2075 = vmatpush1.msra.mxu0 0.0
        %2076 = vmatprep.subr.mxu0 0.0
        %2077 = vmatpush1.msra.mxu0 0.0
        %2078 = vmatprep.mubr.f32.mxu0 0.0
        %2079 = vmatmul.mubr.f32.gmra.mrb[0].mxu0 %v2012
        %v2080 = vpop.f32.mrb[0].mxu0
        %v2081 = vadd.f32 0.0, %v2080
        %v2082 = vpop.f32.mrb[0].mxu0
        %2083 = vdwg.mxu0
        %2084 = vrot.lane.b32.xlu0 %v820, 40
        %v2085 = vpop.permute.xlu0 %2084
        %v2088 = vsel %vm828, %v2007, 0
        %2090 = vmatprep.subr.mxu0 0.0
        %2091 = vmatpush1.msra.mxu0 %v2085
        %2092 = vmatprep.subr.mxu0 0.0
        %2093 = vmatpush1.msra.mxu0 0.0
        %2094 = vmatprep.subr.mxu0 0.0
        %2095 = vmatpush1.msra.mxu0 0.0
        %2096 = vmatprep.subr.mxu0 0.0
        %2097 = vmatpush1.msra.mxu0 0.0
        %2098 = vmatprep.subr.mxu0 0.0
        %2099 = vmatpush1.msra.mxu0 0.0
        %2100 = vmatprep.subr.mxu0 0.0
        %2101 = vmatpush1.msra.mxu0 0.0
        %2102 = vmatprep.subr.mxu0 0.0
        %2103 = vmatpush1.msra.mxu0 0.0
        %2104 = vmatprep.subr.mxu0 0.0
        %2105 = vmatpush1.msra.mxu0 0.0
        %2106 = vmatprep.subr.mxu0 0.0
        %2107 = vmatpush1.msra.mxu0 0.0
        %2108 = vmatprep.subr.mxu0 0.0
        %2109 = vmatpush1.msra.mxu0 0.0
        %2110 = vmatprep.subr.mxu0 0.0
        %2111 = vmatpush1.msra.mxu0 0.0
        %2112 = vmatprep.subr.mxu0 0.0
        %2113 = vmatpush1.msra.mxu0 0.0
        %2114 = vmatprep.subr.mxu0 0.0
        %2115 = vmatpush1.msra.mxu0 0.0
        %2116 = vmatprep.subr.mxu0 0.0
        %2117 = vmatpush1.msra.mxu0 0.0
        %2118 = vmatprep.subr.mxu0 0.0
        %2119 = vmatpush1.msra.mxu0 0.0
        %2120 = vmatprep.subr.mxu0 0.0
        %2121 = vmatpush1.msra.mxu0 0.0
        %2122 = vmatprep.subr.mxu0 0.0
        %2123 = vmatpush1.msra.mxu0 0.0
        %2124 = vmatprep.subr.mxu0 0.0
        %2125 = vmatpush1.msra.mxu0 0.0
        %2126 = vmatprep.subr.mxu0 0.0
        %2127 = vmatpush1.msra.mxu0 0.0
        %2128 = vmatprep.subr.mxu0 0.0
        %2129 = vmatpush1.msra.mxu0 0.0
        %2130 = vmatprep.subr.mxu0 0.0
        %2131 = vmatpush1.msra.mxu0 0.0
        %2132 = vmatprep.subr.mxu0 0.0
        %2133 = vmatpush1.msra.mxu0 0.0
        %2134 = vmatprep.subr.mxu0 0.0
        %2135 = vmatpush1.msra.mxu0 0.0
        %2136 = vmatprep.subr.mxu0 0.0
        %2137 = vmatpush1.msra.mxu0 0.0
        %2138 = vmatprep.subr.mxu0 0.0
        %2139 = vmatpush1.msra.mxu0 0.0
        %2140 = vmatprep.subr.mxu0 0.0
        %2141 = vmatpush1.msra.mxu0 0.0
        %2142 = vmatprep.subr.mxu0 0.0
        %2143 = vmatpush1.msra.mxu0 0.0
        %2144 = vmatprep.subr.mxu0 0.0
        %2145 = vmatpush1.msra.mxu0 0.0
        %2146 = vmatprep.subr.mxu0 0.0
        %2147 = vmatpush1.msra.mxu0 0.0
        %2148 = vmatprep.subr.mxu0 0.0
        %2149 = vmatpush1.msra.mxu0 0.0
        %2150 = vmatprep.subr.mxu0 0.0
        %2151 = vmatpush1.msra.mxu0 0.0
        %2152 = vmatprep.subr.mxu0 0.0
        %2153 = vmatpush1.msra.mxu0 0.0
        %2154 = vmatprep.mubr.f32.mxu0 0.0
        %2155 = vmatmul.mubr.f32.gmra.mrb[0].mxu0 %v2088
        %v2156 = vpop.f32.mrb[0].mxu0
        %v2157 = vadd.f32 0.0, %v2156
        %v2158 = vpop.f32.mrb[0].mxu0
        %2159 = vdwg.mxu0
        %2162 = vrot.lane.b32.xlu0 %v1413, 8
        %v2163 = vpop.permute.xlu0 %2162
        %2164 = vrot.lane.b32.xlu0 %v1489, 8
        %v2165 = vpop.permute.xlu0 %2164
        %2170 = vrot.lane.b32.xlu0 %v1747, 16
        %v2171 = vpop.permute.xlu0 %2170
        %2172 = vrot.lane.b32.xlu0 %v1823, 16
        %v2173 = vpop.permute.xlu0 %2172
        %2178 = vrot.lane.b32.xlu0 %v2081, 24
        %v2179 = vpop.permute.xlu0 %2178
        %2180 = vrot.lane.b32.xlu0 %v2157, 24
        %v2181 = vpop.permute.xlu0 %2180
        %v2184 = vsel %vm828, %v1079, %v2163
        %v2185 = vsel %vm828, %v1155, %v2165
        %vm2186 = vcmask 130048
        %v2187 = vsel %vm2186, %v2184, %v2171
        %v2188 = vsel %vm2186, %v2185, %v2173
        %vm2189 = vcmask 195584
        %v2190 = vsel %vm2189, %v2187, %v2179
        %v2191 = vsel %vm2189, %v2188, %v2181
        %v2192 = vpack.c.bf16 %v2191, %v2190
        %v2193 = vld [vmem:[%s648] sm:$0xf]
        %v2194 = vld [vmem:[%s648 + $0x4] sm:$0xf]
        %v2195 = vld [vmem:[%s648 + $0x8] sm:$0xf]
        %v2196 = vld [vmem:[%s648 + $0xc] sm:$0xf]
        %v2197 = vld [vmem:[%s651] sm:$0x1]
        %v2199 = vlaneseq
        %v2200 = vshrl.u32 %v2199, 7
        %v2201 = vsub.s32 0, %v2200
        %v2202 = vrot.slane %v2197, %v2201
        %v2208 = vunpack.c.l.b16 %v2193
        %v2209 = vunpack.c.l.b16 %v2194
        %v2210 = vunpack.c.l.b16 %v2195
        %v2211 = vunpack.c.l.b16 %v2196
        %v2212 = vpack.c.b16 %v2209, %v2208
        %v2213 = vpack.c.b16 %v2211, %v2210
        %v2217 = vsel %vm696, %v2192, 0
        %2219 = vmatprep.subr.bf16.mxu0 0
        %2220 = vmatpush1.bf16.msra.mxu0 %v2212
        %2221 = vmatprep.subr.bf16.mxu0 0
        %2222 = vmatpush1.bf16.msra.mxu0 %v2213
        %2223 = vmatprep.subr.bf16.mxu0 0
        %2224 = vmatpush1.bf16.msra.mxu0 0
        %2225 = vmatprep.subr.bf16.mxu0 0
        %2226 = vmatpush1.bf16.msra.mxu0 0
        %2227 = vmatprep.subr.bf16.mxu0 0
        %2228 = vmatpush1.bf16.msra.mxu0 0
        %2229 = vmatprep.subr.bf16.mxu0 0
        %2230 = vmatpush1.bf16.msra.mxu0 0
        %2231 = vmatprep.subr.bf16.mxu0 0
        %2232 = vmatpush1.bf16.msra.mxu0 0
        %2233 = vmatprep.subr.bf16.mxu0 0
        %2234 = vmatpush1.bf16.msra.mxu0 0
        %2235 = vmatprep.subr.bf16.mxu0 0
        %2236 = vmatpush1.bf16.msra.mxu0 0
        %2237 = vmatprep.subr.bf16.mxu0 0
        %2238 = vmatpush1.bf16.msra.mxu0 0
        %2239 = vmatprep.subr.bf16.mxu0 0
        %2240 = vmatpush1.bf16.msra.mxu0 0
        %2241 = vmatprep.subr.bf16.mxu0 0
        %2242 = vmatpush1.bf16.msra.mxu0 0
        %2243 = vmatprep.subr.bf16.mxu0 0
        %2244 = vmatpush1.bf16.msra.mxu0 0
        %2245 = vmatprep.subr.bf16.mxu0 0
        %2246 = vmatpush1.bf16.msra.mxu0 0
        %2247 = vmatprep.subr.bf16.mxu0 0
        %2248 = vmatpush1.bf16.msra.mxu0 0
        %2249 = vmatprep.subr.bf16.mxu0 0
        %2250 = vmatpush1.bf16.msra.mxu0 0
        %2251 = vmatprep.mubr.bf16.mxu0 0
        %2252 = vmatmul.mubr.bf16.gmra.mrb[0].mxu0 %v2217
        %v2253 = vpop.f32.mrb[0].mxu0
        %v2254 = vadd.f32 %v2202, %v2253
        %v2255 = vpop.f32.mrb[0].mxu0
        %v2256 = vpop.f32.mrb[0].mxu0
        %v2257 = vadd.f32 %v2202, %v2256
        %v2258 = vpop.f32.mrb[0].mxu0
        %2259 = vdwg.mxu0
        %v2260 = vadd.f32 %v692, %v2254
        %v2261 = vadd.f32 %v693, %v2257
        %v2262 = vld [vmem:[%s676] sm:$0x1]
        %v2263 = vld [vmem:[%s679] sm:$0x1]
        %v2264 = vsel %vm696, %v2260, 0.0
        %2265 = vadd.xlane.f32.xlu0 %v2264
        %v2266 = vpop.xlane.xlu0 %2265
        %v2267 = vsel %vm696, %v2261, 0.0
        %2268 = vadd.xlane.f32.xlu0 %v2267
        %v2269 = vpop.xlane.xlu0 %2268
        %v2270 = vmul.f32 %v2266, %v703
        %v2271 = vmul.f32 %v2269, %v703
        %v2272 = vsub.f32 %v2260, %v2270
        %v2273 = vsub.f32 %v2261, %v2271
        %v2274 = vmul.f32 %v2272, %v2272
        %v2275 = vmul.f32 %v2273, %v2273
        %v2276 = vsel %vm696, %v2274, 0.0
        %2277 = vadd.xlane.f32.xlu0 %v2276
        %v2278 = vpop.xlane.xlu0 %2277
        %v2279 = vsel %vm696, %v2275, 0.0
        %2280 = vadd.xlane.f32.xlu0 %v2279
        %v2281 = vpop.xlane.xlu0 %2280
        %v2282 = vmul.f32 %v2278, %v716
        %v2283 = vmul.f32 %v2281, %v716
        %v2285 = vlaneseq
        %v2286 = vshrl.u32 %v2285, 7
        %v2287 = vsub.s32 0, %v2286
        %v2288 = vrot.slane %v2262, %v2287
        %v2290 = vmul.f32 %v2288, %v2272
        %v2291 = vmul.f32 %v2288, %v2273
        %v2292 = vrsqrt.pop %v2282
        %v2293 = vmul.f32 %v2282, %v2292
        %vm2294 = vcmp.eq.f32.partialorder %v2282, inf
        %v2295 = vsel %vm2294, %v2282, %v2293
        %vm2296 = vcmp.eq.f32.partialorder %v2282, 0.0
        %v2297 = vand.u32 %v2282, 2147483648
        %v2298 = vsel %vm2296, %v2297, %v2295
        %v2299 = vrsqrt.pop %v2283
        %v2300 = vmul.f32 %v2283, %v2299
        %vm2301 = vcmp.eq.f32.partialorder %v2283, inf
        %v2302 = vsel %vm2301, %v2283, %v2300
        %vm2303 = vcmp.eq.f32.partialorder %v2283, 0.0
        %v2304 = vand.u32 %v2283, 2147483648
        %v2305 = vsel %vm2303, %v2304, %v2302
        %v2306 = vadd.f32 %v2298, 1e-06
        %v2307 = vadd.f32 %v2305, 1e-06
        %v2308 = vrcp.pop %v2306
        %v2309 = vmul.f32 %v2290, %v2308
        %v2310 = vrcp.pop %v2307
        %v2311 = vmul.f32 %v2291, %v2310
        %v2313 = vlaneseq
        %v2314 = vshrl.u32 %v2313, 7
        %v2315 = vsub.s32 0, %v2314
        %v2316 = vrot.slane %v2263, %v2315
        %v2318 = vadd.f32 %v2309, %v2316
        %v2319 = vadd.f32 %v2311, %v2316
        %v2320 = vpack.c.bf16 %v2319, %v2318
        %v2321 = vld [vmem:[%s662] sm:$0xf]
        %v2322 = vld [vmem:[%s662 + $0x4] sm:$0xf]
        %v2323 = vld [vmem:[%s662 + $0x8] sm:$0xf]
        %v2324 = vld [vmem:[%s662 + $0xc] sm:$0xf]
        %v2325 = vld [vmem:[%s665] sm:$0x1]
        %v2327 = vlaneseq
        %v2328 = vshrl.u32 %v2327, 7
        %v2329 = vsub.s32 0, %v2328
        %v2330 = vrot.slane %v2325, %v2329
        %v2336 = vunpack.c.l.b16 %v2321
        %v2337 = vunpack.c.l.b16 %v2322
        %v2338 = vunpack.c.l.b16 %v2323
        %v2339 = vunpack.c.l.b16 %v2324
        %v2340 = vpack.c.b16 %v2337, %v2336
        %v2341 = vpack.c.b16 %v2339, %v2338
        %v2345 = vsel %vm696, %v2320, 0
        %2347 = vmatprep.subr.bf16.mxu0 0
        %2348 = vmatpush1.bf16.msra.mxu0 %v2340
        %2349 = vmatprep.subr.bf16.mxu0 0
        %2350 = vmatpush1.bf16.msra.mxu0 %v2341
        %2351 = vmatprep.subr.bf16.mxu0 0
        %2352 = vmatpush1.bf16.msra.mxu0 0
        %2353 = vmatprep.subr.bf16.mxu0 0
        %2354 = vmatpush1.bf16.msra.mxu0 0
        %2355 = vmatprep.subr.bf16.mxu0 0
        %2356 = vmatpush1.bf16.msra.mxu0 0
        %2357 = vmatprep.subr.bf16.mxu0 0
        %2358 = vmatpush1.bf16.msra.mxu0 0
        %2359 = vmatprep.subr.bf16.mxu0 0
        %2360 = vmatpush1.bf16.msra.mxu0 0
        %2361 = vmatprep.subr.bf16.mxu0 0
        %2362 = vmatpush1.bf16.msra.mxu0 0
        %2363 = vmatprep.subr.bf16.mxu0 0
        %2364 = vmatpush1.bf16.msra.mxu0 0
        %2365 = vmatprep.subr.bf16.mxu0 0
        %2366 = vmatpush1.bf16.msra.mxu0 0
        %2367 = vmatprep.subr.bf16.mxu0 0
        %2368 = vmatpush1.bf16.msra.mxu0 0
        %2369 = vmatprep.subr.bf16.mxu0 0
        %2370 = vmatpush1.bf16.msra.mxu0 0
        %2371 = vmatprep.subr.bf16.mxu0 0
        %2372 = vmatpush1.bf16.msra.mxu0 0
        %2373 = vmatprep.subr.bf16.mxu0 0
        %2374 = vmatpush1.bf16.msra.mxu0 0
        %2375 = vmatprep.subr.bf16.mxu0 0
        %2376 = vmatpush1.bf16.msra.mxu0 0
        %2377 = vmatprep.subr.bf16.mxu0 0
        %2378 = vmatpush1.bf16.msra.mxu0 0
        %2379 = vmatprep.mubr.bf16.mxu0 0
        %2380 = vmatmul.mubr.bf16.gmra.mrb[0].mxu0 %v2345
        %v2381 = vpop.f32.mrb[0].mxu0
        %v2382 = vadd.f32 %v2330, %v2381
        %v2383 = vpop.f32.mrb[0].mxu0
        %v2384 = vpop.f32.mrb[0].mxu0
        %v2385 = vadd.f32 %v2330, %v2384
        %v2386 = vpop.f32.mrb[0].mxu0
        %2387 = vdwg.mxu0
        %v2388 = vmul.f32 %v2382, 0.5
        %v2389 = vmul.f32 %v2385, 0.5
        %v2390 = vmul.f32 %v2382, 0.044715
        %v2391 = vmul.f32 %v2385, 0.044715
        %v2392 = vmul.f32 %v2390, %v2382
        %v2393 = vmul.f32 %v2391, %v2385
        %v2394 = vmul.f32 %v2392, %v2382
        %v2395 = vmul.f32 %v2393, %v2385
        %v2396 = vadd.f32 %v2382, %v2394
        %v2397 = vadd.f32 %v2385, %v2395
        %v2398 = vmul.f32 %v2396, 0.7978846
        %v2399 = vmul.f32 %v2397, 0.7978846
        %v2400 = vtanh.pop %v2398
        %v2401 = vtanh.pop %v2399
        %v2402 = vadd.f32 %v2400, 1.0
        %v2403 = vadd.f32 %v2401, 1.0
        %v2404 = vmul.f32 %v2388, %v2402
        %v2405 = vmul.f32 %v2389, %v2403
        %v2406 = vpack.c.bf16 %v2405, %v2404
        %v2407 = vld [vmem:[%s670] sm:$0xf]
        %v2408 = vld [vmem:[%s670 + $0x4] sm:$0xf]
        %v2409 = vld [vmem:[%s670 + $0x8] sm:$0xf]
        %v2410 = vld [vmem:[%s670 + $0xc] sm:$0xf]
        %v2411 = vld [vmem:[%s670 + $0x10] sm:$0xf]
        %v2412 = vld [vmem:[%s670 + $0x14] sm:$0xf]
        %v2413 = vld [vmem:[%s670 + $0x18] sm:$0xf]
        %v2414 = vld [vmem:[%s670 + $0x1c] sm:$0xf]
        %v2415 = vld [vmem:[%s670 + $0x20] sm:$0xf]
        %v2416 = vld [vmem:[%s670 + $0x24] sm:$0xf]
        %v2417 = vld [vmem:[%s670 + $0x28] sm:$0xf]
        %v2418 = vld [vmem:[%s670 + $0x2c] sm:$0xf]
        %v2419 = vld [vmem:[%s670 + $0x30] sm:$0xf]
        %v2420 = vld [vmem:[%s670 + $0x34] sm:$0xf]
        %v2421 = vld [vmem:[%s670 + $0x38] sm:$0xf]
        %v2422 = vld [vmem:[%s670 + $0x3c] sm:$0xf]
        %v2423 = vld [vmem:[%s673] sm:$0x1]
        %v2425 = vlaneseq
        %v2426 = vshrl.u32 %v2425, 7
        %v2427 = vsub.s32 0, %v2426
        %v2428 = vrot.slane %v2423, %v2427
        %v2446 = vunpack.c.l.b16 %v2407
        %v2447 = vunpack.c.l.b16 %v2408
        %v2448 = vunpack.c.l.b16 %v2409
        %v2449 = vunpack.c.l.b16 %v2410
        %v2450 = vunpack.c.l.b16 %v2411
        %v2451 = vunpack.c.l.b16 %v2412
        %v2452 = vunpack.c.l.b16 %v2413
        %v2453 = vunpack.c.l.b16 %v2414
        %v2454 = vunpack.c.l.b16 %v2415
        %v2455 = vunpack.c.l.b16 %v2416
        %v2456 = vunpack.c.l.b16 %v2417
        %v2457 = vunpack.c.l.b16 %v2418
        %v2458 = vunpack.c.l.b16 %v2419
        %v2459 = vunpack.c.l.b16 %v2420
        %v2460 = vunpack.c.l.b16 %v2421
        %v2461 = vunpack.c.l.b16 %v2422
        %v2462 = vpack.c.b16 %v2447, %v2446
        %v2463 = vpack.c.b16 %v2449, %v2448
        %v2464 = vpack.c.b16 %v2451, %v2450
        %v2465 = vpack.c.b16 %v2453, %v2452
        %v2466 = vpack.c.b16 %v2455, %v2454
        %v2467 = vpack.c.b16 %v2457, %v2456
        %v2468 = vpack.c.b16 %v2459, %v2458
        %v2469 = vpack.c.b16 %v2461, %v2460
        %2478 = vmatprep.subr.bf16.mxu0 0
        %2479 = vmatpush1.bf16.msra.mxu0 %v2462
        %2480 = vmatprep.subr.bf16.mxu0 0
        %2481 = vmatpush1.bf16.msra.mxu0 %v2463
        %2482 = vmatprep.subr.bf16.mxu0 0
        %2483 = vmatpush1.bf16.msra.mxu0 %v2464
        %2484 = vmatprep.subr.bf16.mxu0 0
        %2485 = vmatpush1.bf16.msra.mxu0 %v2465
        %2486 = vmatprep.subr.bf16.mxu0 0
        %2487 = vmatpush1.bf16.msra.mxu0 %v2466
        %2488 = vmatprep.subr.bf16.mxu0 0
        %2489 = vmatpush1.bf16.msra.mxu0 %v2467
        %2490 = vmatprep.subr.bf16.mxu0 0
        %2491 = vmatpush1.bf16.msra.mxu0 %v2468
        %2492 = vmatprep.subr.bf16.mxu0 0
        %2493 = vmatpush1.bf16.msra.mxu0 %v2469
        %2494 = vmatprep.subr.bf16.mxu0 0
        %2495 = vmatpush1.bf16.msra.mxu0 0
        %2496 = vmatprep.subr.bf16.mxu0 0
        %2497 = vmatpush1.bf16.msra.mxu0 0
        %2498 = vmatprep.subr.bf16.mxu0 0
        %2499 = vmatpush1.bf16.msra.mxu0 0
        %2500 = vmatprep.subr.bf16.mxu0 0
        %2501 = vmatpush1.bf16.msra.mxu0 0
        %2502 = vmatprep.subr.bf16.mxu0 0
        %2503 = vmatpush1.bf16.msra.mxu0 0
        %2504 = vmatprep.subr.bf16.mxu0 0
        %2505 = vmatpush1.bf16.msra.mxu0 0
        %2506 = vmatprep.subr.bf16.mxu0 0
        %2507 = vmatpush1.bf16.msra.mxu0 0
        %2508 = vmatprep.subr.bf16.mxu0 0
        %2509 = vmatpush1.bf16.msra.mxu0 0
        %2510 = vmatprep.mubr.bf16.mxu0 0
        %2511 = vmatmul.mubr.bf16.gmra.mrb[0].mxu0 %v2406
        %v2512 = vpop.f32.mrb[0].mxu0
        %v2513 = vadd.f32 %v2428, %v2512
        %v2514 = vpop.f32.mrb[0].mxu0
        %v2515 = vpop.f32.mrb[0].mxu0
        %v2516 = vadd.f32 %v2428, %v2515
        %v2517 = vpop.f32.mrb[0].mxu0
        %2518 = vdwg.mxu0
        %v2519 = vadd.f32 %v2260, %v2513
        %v2520 = vadd.f32 %v2261, %v2516
        %2521 = vst.msk [vmem:[#allocation2] sm:$0xff] %vm696, %v2519
        %2522 = vst.msk [vmem:[#allocation2 + $0x8] sm:$0xff] %vm696, %v2520
        %p2523 = scmp.eq.s32.totalorder %s28, 1
        // Predicated region
        $region89: #{tpu_custom_call.1} parent=83 // pred_check
          %p2524 = pneg %p2523
        $region90: #{tpu_custom_call.1} parent=83 // pred_check_branch
          %2526 = sbr.rel (%p2524) target = $region92
        $region91: #{tpu_custom_call.1} parent=83 // pred_region
          %v2527 = vld [vmem:[%s14] sm:$0xff]
          %v2528 = vld [vmem:[%s14 + $0x8] sm:$0xff]
          %v2529 = vld [vmem:[%s14 + $0x10] sm:$0xff]
          %v2530 = vld [vmem:[%s14 + $0x18] sm:$0xff]
          %v2531 = vld [vmem:[%s15] sm:$0x1]
          %v2533 = vlaneseq
          %v2534 = vshrl.u32 %v2533, 7
          %v2535 = vsub.s32 0, %v2534
          %v2536 = vrot.slane %v2531, %v2535
          %v2540 = vrot.slane %v2520, 7
          %vm2541 = vcmask 1041409
          %v2542 = vsel %vm2541, %v2540, %v2519
          %v2543 = vsel %vm696, %v2542, 0
          %2545 = vmatprep.subr.mxu0 0.0
          %2546 = vmatpush1.msra.mxu0 %v2527
          %2547 = vmatprep.subr.mxu0 0.0
          %2548 = vmatpush1.msra.mxu0 %v2528
          %2549 = vmatprep.subr.mxu0 0.0
          %2550 = vmatpush1.msra.mxu0 %v2529
          %2551 = vmatprep.subr.mxu0 0.0
          %2552 = vmatpush1.msra.mxu0 %v2530
          %2553 = vmatprep.subr.mxu0 0.0
          %2554 = vmatpush1.msra.mxu0 0.0
          %2555 = vmatprep.subr.mxu0 0.0
          %2556 = vmatpush1.msra.mxu0 0.0
          %2557 = vmatprep.subr.mxu0 0.0
          %2558 = vmatpush1.msra.mxu0 0.0
          %2559 = vmatprep.subr.mxu0 0.0
          %2560 = vmatpush1.msra.mxu0 0.0
          %2561 = vmatprep.subr.mxu0 0.0
          %2562 = vmatpush1.msra.mxu0 0.0
          %2563 = vmatprep.subr.mxu0 0.0
          %2564 = vmatpush1.msra.mxu0 0.0
          %2565 = vmatprep.subr.mxu0 0.0
          %2566 = vmatpush1.msra.mxu0 0.0
          %2567 = vmatprep.subr.mxu0 0.0
          %2568 = vmatpush1.msra.mxu0 0.0
          %2569 = vmatprep.subr.mxu0 0.0
          %2570 = vmatpush1.msra.mxu0 0.0
          %2571 = vmatprep.subr.mxu0 0.0
          %2572 = vmatpush1.msra.mxu0 0.0
          %2573 = vmatprep.subr.mxu0 0.0
          %2574 = vmatpush1.msra.mxu0 0.0
          %2575 = vmatprep.subr.mxu0 0.0
          %2576 = vmatpush1.msra.mxu0 0.0
          %2577 = vmatprep.subr.mxu0 0.0
          %2578 = vmatpush1.msra.mxu0 0.0
          %2579 = vmatprep.subr.mxu0 0.0
          %2580 = vmatpush1.msra.mxu0 0.0
          %2581 = vmatprep.subr.mxu0 0.0
          %2582 = vmatpush1.msra.mxu0 0.0
          %2583 = vmatprep.subr.mxu0 0.0
          %2584 = vmatpush1.msra.mxu0 0.0
          %2585 = vmatprep.subr.mxu0 0.0
          %2586 = vmatpush1.msra.mxu0 0.0
          %2587 = vmatprep.subr.mxu0 0.0
          %2588 = vmatpush1.msra.mxu0 0.0
          %2589 = vmatprep.subr.mxu0 0.0
          %2590 = vmatpush1.msra.mxu0 0.0
          %2591 = vmatprep.subr.mxu0 0.0
          %2592 = vmatpush1.msra.mxu0 0.0
          %2593 = vmatprep.subr.mxu0 0.0
          %2594 = vmatpush1.msra.mxu0 0.0
          %2595 = vmatprep.subr.mxu0 0.0
          %2596 = vmatpush1.msra.mxu0 0.0
          %2597 = vmatprep.subr.mxu0 0.0
          %2598 = vmatpush1.msra.mxu0 0.0
          %2599 = vmatprep.subr.mxu0 0.0
          %2600 = vmatpush1.msra.mxu0 0.0
          %2601 = vmatprep.subr.mxu0 0.0
          %2602 = vmatpush1.msra.mxu0 0.0
          %2603 = vmatprep.subr.mxu0 0.0
          %2604 = vmatpush1.msra.mxu0 0.0
          %2605 = vmatprep.subr.mxu0 0.0
          %2606 = vmatpush1.msra.mxu0 0.0
          %2607 = vmatprep.subr.mxu0 0.0
          %2608 = vmatpush1.msra.mxu0 0.0
          %2609 = vmatprep.mubr.f32.mxu0 0.0
          %2610 = vmatmul.mubr.f32.gmra.mrb[0].mxu0 %v2543
          %v2611 = vpop.f32.mrb[0].mxu0
          %v2612 = vadd.f32 %v2536, %v2611
          %v2613 = vpop.f32.mrb[0].mxu0
          %2614 = vdwg.mxu0
          %2615 = vst [vmem:[#allocation3] sm:$0x3] %v2612
        $region92: #{tpu_custom_call.1} parent=83 // pred_fallthru
          _
        // Predicated region
        $region93: #{tpu_custom_call.1} parent=83 // pred_check
          %p2616 = pneg %p437
        $region94: #{tpu_custom_call.1} parent=83 // pred_check_branch
          %2618 = sbr.rel (%p2616) target = $region96
        $region95: #{tpu_custom_call.1} parent=83 // pred_region
          %s2620 = ssub.s32 32, 32
          %2621 = vsyncadd [#allocation4], %s2620
          %s2623 = sshll.u32 [#allocation3], 4
          %s2624 = int_to_ptr.vmem [resolvable:$true] %s2623
          %2626 = dma.vmem_to_hbm [thread:$0]  %s2624, 32, %s16, [#allocation4]
        $region96: #{tpu_custom_call.1} parent=83 // pred_fallthru
          _
        // Predicated region
        $region97: #{tpu_custom_call.1} parent=83 // pred_check
          %p2627 = pneg %p437
        $region98: #{tpu_custom_call.1} parent=83 // pred_check_branch
          %2629 = sbr.rel (%p2627) target = $region100
        $region99: #{tpu_custom_call.1} parent=83 // pred_region
          %2630 = dma.done [#allocation4], 32
        $region100: #{tpu_custom_call.1} parent=83 // pred_fallthru
          _
      $region84: #{tpu_custom_call.1} parent=5 // pred_fallthru
        _
      %p2631 = scmp.le.s32.totalorder 2, %s23
      // Predicated region
      $region101: #{tpu_custom_call.1} parent=5 // pred_check
        %p2632 = pneg %p2631
      $region102: #{tpu_custom_call.1} parent=5 // pred_check_branch
        %2634 = sbr.rel (%p2632) target = $region104
      $region103: #{tpu_custom_call.1} parent=5 // pred_region
        %s2635 = ssub.s32 %s23, 2
      $region104: #{tpu_custom_call.1} parent=5 // pred_fallthru
        _
    $region6: #{tpu_custom_call.1} parent=1 // loop_footer
      %s27 = sadd.s32 1, %s23
    $region7: #{tpu_custom_call.1} parent=1 // loop_footer_branch
      %22 = sbr.rel target = $region3
    $region8: #{tpu_custom_call.1} parent=1 // loop_exit
      _
    %2636 = vsyncpa [#allocation4], 1
    %s2637 = scalar_lea.sflag [#allocation4], 1
    %2638 = vsyncpa %s2637, 1

</llo_original>
